<compile_context>
chip_gen: v7x
topology: tpu7x:2x2x1
jax: 0.10.0
libtpu: 0.0.40
codegen_flags: <defaults>
</compile_context>

<pallas_src>
import jax
import jax.numpy as jnp
from jax.experimental import pallas as pl
from jax.experimental.pallas import tpu as pltpu

LATENT_DIM = 100
NUM_CLASSES = 10
EMBED_DIM = 10
IN_DIM = LATENT_DIM + EMBED_DIM          # 110
K1_PAD = 128                             # layer-1 K padded to one lane tile
NCLS_PAD = 16                            # one-hot / t_embed row padding
H1, H2, H3 = 256, 512, 1024
OUT_DIM = 784
BN_EPS = 1e-5
LEAKY_SLOPE = 0.2


def _bn_leaky(h, gamma, beta):
    """Training-mode BatchNorm1d folded into scale/shift (single pass over h),
    followed by LeakyReLU(0.2).  Invariant to a positive per-channel scale of h
    (up to a negligible eps/k^2 term), which absorbs the int8 dequant scales of
    the preceding Linear and lets its bias be dropped."""
    inv_n = 1.0 / h.shape[0]
    mean = jnp.sum(h, axis=0, keepdims=True) * inv_n
    mean_sq = jnp.sum(h * h, axis=0, keepdims=True) * inv_n
    var = jnp.maximum(mean_sq - mean * mean, 0.0)       # clamp: cancellation guard
    scale = gamma * jax.lax.rsqrt(var + BN_EPS)         # rsqrt -> EUP slot
    shift = beta - mean * scale
    y = h * scale + shift
    return jnp.where(y > 0, y, LEAKY_SLOPE * y)


def generator_kernel(labels_ref, z_ref, temb_ref,
                     w1_ref, g1_ref, be1_ref,
                     w2_ref, g2_ref, be2_ref,
                     w3_ref, g3_ref, be3_ref,
                     w4_ref, w4s_ref, b4_ref,
                     out_ref, x_scr):
    B = z_ref.shape[0]

    # ---- zero-pad z 100 -> 128 lanes inside the kernel (masked lane store) ----
    x_scr[...] = jnp.zeros_like(x_scr)
    x_scr[:, :LATENT_DIM] = z_ref[...]
    x = x_scr[...].astype(jnp.bfloat16)                                  # (B, 128)

    # ---- label embedding folded through layer 1 (no gather, no concat) ----
    onehot = (labels_ref[...] ==
              jax.lax.broadcasted_iota(jnp.int32, (B, NCLS_PAD), 1)
              ).astype(jnp.float32)                                      # (B, 16)
    t = jnp.dot(onehot, temb_ref[...],
                preferred_element_type=jnp.float32)                      # (B, 256)

    # ---- layer 1: Linear(128->256) + BN + LeakyReLU ----
    h = jnp.dot(x, w1_ref[...], preferred_element_type=jnp.float32) + t
    h = _bn_leaky(h, g1_ref[...], be1_ref[...])                          # (B, 256)

    # ---- layer 2: int8 weights (scale absorbed by BN) ----
    h = jnp.dot(h.astype(jnp.bfloat16), w2_ref[...].astype(jnp.bfloat16),
                preferred_element_type=jnp.float32)
    h = _bn_leaky(h, g2_ref[...], be2_ref[...])                          # (B, 512)

    # ---- layer 3: int8 weights (scale absorbed by BN) ----
    h = jnp.dot(h.astype(jnp.bfloat16), w3_ref[...].astype(jnp.bfloat16),
                preferred_element_type=jnp.float32)
    h = _bn_leaky(h, g3_ref[...], be3_ref[...])                          # (B, 1024)

    # ---- layer 4: int8 weights, per-channel dequant on the f32 accumulator ----
    h = jnp.dot(h.astype(jnp.bfloat16), w4_ref[...].astype(jnp.bfloat16),
                preferred_element_type=jnp.float32)
    out_ref[...] = jnp.tanh(h * w4s_ref[...] + b4_ref[...])              # (B, 784)
    # TODO(synk): on v7x, w3/w4 could use native fp8 MXU feeds instead of the
    # int8->bf16 cast path; kept portable (v5e/v6e/v7x) here.


def init_params(key):
    """Torch-like f32 parameters.  Linear: U(+-1/sqrt(fan_in)); Embedding: N(0,1);
    BatchNorm: gamma=1, beta=0.  Linear weights stored transposed (in, out)."""
    ks = jax.random.split(key, 9)

    def linear(kw, kb, fan_in, fan_out):
        bound = 1.0 / jnp.sqrt(fan_in)
        w = jax.random.uniform(kw, (fan_in, fan_out), jnp.float32, -bound, bound)
        b = jax.random.uniform(kb, (1, fan_out), jnp.float32, -bound, bound)
        return w, b

    embed = jax.random.normal(ks[0], (NUM_CLASSES, EMBED_DIM), jnp.float32)
    w1, b1 = linear(ks[1], ks[2], IN_DIM, H1)
    w2, b2 = linear(ks[3], ks[4], H1, H2)
    w3, b3 = linear(ks[5], ks[6], H2, H3)
    w4, b4 = linear(ks[7], ks[8], H3, OUT_DIM)

    ones = lambda n: jnp.ones((1, n), jnp.float32)
    zeros = lambda n: jnp.zeros((1, n), jnp.float32)
    return dict(embed=embed,
                w1=w1, b1=b1, g1=ones(H1), be1=zeros(H1),
                w2=w2, b2=b2, g2=ones(H2), be2=zeros(H2),
                w3=w3, b3=b3, g3=ones(H3), be3=zeros(H3),
                w4=w4, b4=b4)


def _quant_int8(w):
    """Symmetric per-output-channel int8 quantization.  Returns (q, scale(1,N))."""
    amax = jnp.max(jnp.abs(w), axis=0, keepdims=True)
    scale = jnp.maximum(amax, 1e-12) / 127.0
    q = jnp.clip(jnp.round(w / scale), -127, 127).astype(jnp.int8)
    return q, scale


def prepare_params(p):
    """Kernel-ready parameters:
      * t_embed = embed @ w1[100:, :]  (label embedding folded through layer 1),
        rows padded 10 -> 16 for the in-kernel one-hot matmul
      * b1/b2/b3 dropped (exactly cancelled by training-mode BatchNorm)
      * layer-1 z-weights zero-padded K 100 -> 128, stored bf16
      * w2/w3/w4 quantized to per-channel int8 (w2/w3 scales absorbed by BN;
        w4 scale applied in-kernel on the f32 accumulator)
    """
    w1z = jnp.pad(p["w1"][:LATENT_DIM, :], ((0, K1_PAD - LATENT_DIM), (0, 0)))
    t_embed = p["embed"] @ p["w1"][LATENT_DIM:, :]                 # (10, 256) f32
    t_embed = jnp.pad(t_embed, ((0, NCLS_PAD - NUM_CLASSES), (0, 0)))
    w2_q, w2_s = _quant_int8(p["w2"])
    w3_q, w3_s = _quant_int8(p["w3"])
    w4_q, w4_s = _quant_int8(p["w4"])
    return dict(
        t_embed=t_embed,
        w1=w1z.astype(jnp.bfloat16),
        w2_q=w2_q, w2_s=w2_s,
        w3_q=w3_q, w3_s=w3_s,
        w4_q=w4_q, w4_s=w4_s,
        b4=p["b4"],
        g1=p["g1"], be1=p["be1"],
        g2=p["g2"], be2=p["be2"],
        g3=p["g3"], be3=p["be3"],
    )


def generator_forward(z, labels, kp):
    B = z.shape[0]
    labels2d = labels.reshape(B, 1).astype(jnp.int32)

    args = (labels2d, z, kp["t_embed"],
            kp["w1"], kp["g1"], kp["be1"],
            kp["w2_q"], kp["g2"], kp["be2"],
            kp["w3_q"], kp["g3"], kp["be3"],
            kp["w4_q"], kp["w4_s"], kp["b4"])

    vspec = pl.BlockSpec(memory_space=pltpu.MemorySpace.VMEM)
    flops = 2 * B * (K1_PAD * H1 + NCLS_PAD * H1 + H1 * H2 + H2 * H3 + H3 * OUT_DIM)
    bytes_accessed = int(sum(int(a.size) * a.dtype.itemsize for a in args)
                         + B * OUT_DIM * 4)
    transcendentals = B * OUT_DIM + (H1 + H2 + H3)

    out = pl.pallas_call(
        generator_kernel,
        out_shape=jax.ShapeDtypeStruct((B, OUT_DIM), jnp.float32),
        in_specs=[vspec] * len(args),
        out_specs=vspec,
        scratch_shapes=[pltpu.VMEM((B, K1_PAD), jnp.float32)],
        compiler_params=pltpu.CompilerParams(vmem_limit_bytes=12 << 20),
        cost_estimate=pl.CostEstimate(flops=flops,
                                      transcendentals=transcendentals,
                                      bytes_accessed=bytes_accessed),
    )(*args)

    # TODO(synk): for large B, add a batch grid with resident weights and
    # dimension_semantics=("parallel",) (2 TCs on v7x) plus full-batch BN stats;
    # for repeated small-B calls, prefetch the ~1.5 MiB weight stream via a
    # cross-call DMA future (semaphore+VMEM outputs) to hide the weight reload.
    return out.reshape(B, 1, 28, 28)   # free row-major reshape, no data movement


def generator_reference(z, labels, p, kp):
    """Pure-JAX reference with the original PyTorch formulation (concat via split,
    biases, two-pass BN), mirroring the kernel's bf16 activation casts and the
    dequantized int8 weights for layers 2-4."""
    bf = lambda a: a.astype(jnp.bfloat16).astype(jnp.float32)
    deq = lambda q, s: q.astype(jnp.float32) * s

    def bn(h, g, b):
        mean = jnp.mean(h, axis=0, keepdims=True)
        var = jnp.mean((h - mean) ** 2, axis=0, keepdims=True)
        return (h - mean) * jax.lax.rsqrt(var + BN_EPS) * g + b

    lrelu = lambda h: jnp.where(h > 0, h, LEAKY_SLOPE * h)

    emb = p["embed"][labels]                                       # (B, 10)
    h = bf(z) @ bf(p["w1"][:LATENT_DIM]) + emb @ p["w1"][LATENT_DIM:] + p["b1"]
    h = lrelu(bn(h, p["g1"], p["be1"]))
    h = bf(h) @ deq(kp["w2_q"], kp["w2_s"]) + p["b2"]
    h = lrelu(bn(h, p["g2"], p["be2"]))
    h = bf(h) @ deq(kp["w3_q"], kp["w3_s"]) + p["b3"]
    h = lrelu(bn(h, p["g3"], p["be3"]))
    h = bf(h) @ deq(kp["w4_q"], kp["w4_s"]) + p["b4"]
    return jnp.tanh(h).reshape(-1, 1, 28, 28)


if __name__ == "__main__":
    key = jax.random.PRNGKey(0)
    k_params, k_z, k_lbl = jax.random.split(key, 3)

    B = 8
    params = init_params(k_params)
    kparams = prepare_params(params)
    z = jax.random.normal(k_z, (B, LATENT_DIM), jnp.float32)
    labels = jax.random.randint(k_lbl, (B,), 0, NUM_CLASSES, jnp.int32)

    out = jax.block_until_ready(generator_forward(z, labels, kparams))
    ref = jax.block_until_ready(generator_reference(z, labels, params, kparams))

    assert out.shape == (B, 1, 28, 28), out.shape
    # bf16 activations + int8 weights are mirrored in the reference; residual
    # differences are one-pass vs two-pass BN and the BN-absorbed dequant scale.
    assert jnp.allclose(out, ref, rtol=2e-2, atol=2e-2), (
        "Pallas kernel mismatch vs reference: max abs diff = "
        f"{float(jnp.max(jnp.abs(out - ref)))}")

    print("KERNEL_OK")
</pallas_src>

<mosaic_0001>
module attributes {stable_mosaic.version = 11 : i64} {
  func.func @generator_kernel(%arg0: memref<8x1xi32, #tpu.memory_space<vmem>>, %arg1: memref<8x100xf32, #tpu.memory_space<vmem>>, %arg2: memref<16x256xf32, #tpu.memory_space<vmem>>, %arg3: memref<128x256xbf16, #tpu.memory_space<vmem>>, %arg4: memref<1x256xf32, #tpu.memory_space<vmem>>, %arg5: memref<1x256xf32, #tpu.memory_space<vmem>>, %arg6: memref<256x512xi8, #tpu.memory_space<vmem>>, %arg7: memref<1x512xf32, #tpu.memory_space<vmem>>, %arg8: memref<1x512xf32, #tpu.memory_space<vmem>>, %arg9: memref<512x1024xi8, #tpu.memory_space<vmem>>, %arg10: memref<1x1024xf32, #tpu.memory_space<vmem>>, %arg11: memref<1x1024xf32, #tpu.memory_space<vmem>>, %arg12: memref<1024x784xi8, #tpu.memory_space<vmem>>, %arg13: memref<1x784xf32, #tpu.memory_space<vmem>>, %arg14: memref<1x784xf32, #tpu.memory_space<vmem>>, %arg15: memref<8x784xf32, #tpu.memory_space<vmem>>, %arg16: memref<8x128xf32, #tpu.memory_space<vmem>>) attributes {dimension_semantics = [], scalar_prefetch = 0 : i64, scratch_operands = 1 : i64, tpu.core_type = #tpu.core_type<tc>} {
    %cst = arith.constant 0.000000e+00 : f32
    %0 = vector.broadcast %cst : f32 to vector<8x128xf32>
    %c0 = arith.constant 0 : index
    %c0_0 = arith.constant 0 : index
    %1 = vector.load %arg16[%c0, %c0_0] : memref<8x128xf32, #tpu.memory_space<vmem>>, vector<8x128xf32>
    tpu.vector_store %arg16[%c0, %c0_0], %0 {strides = array<i32>} : memref<8x128xf32, #tpu.memory_space<vmem>>, vector<8x128xf32>,
    %c0_1 = arith.constant 0 : index
    %c0_2 = arith.constant 0 : index
    %2 = vector.load %arg1[%c0_1, %c0_2] : memref<8x100xf32, #tpu.memory_space<vmem>>, vector<8x100xf32>
    %c0_3 = arith.constant 0 : index
    %c0_4 = arith.constant 0 : index
    %3 = vector.load %arg16[%c0_3, %c0_4] : memref<8x128xf32, #tpu.memory_space<vmem>>, vector<8x100xf32>
    tpu.vector_store %arg16[%c0_3, %c0_4], %2 {strides = array<i32>} : memref<8x128xf32, #tpu.memory_space<vmem>>, vector<8x100xf32>,
    %c0_5 = arith.constant 0 : index
    %c0_6 = arith.constant 0 : index
    %4 = vector.load %arg16[%c0_5, %c0_6] : memref<8x128xf32, #tpu.memory_space<vmem>>, vector<8x128xf32>
    %5 = arith.truncf %4 : vector<8x128xf32> to vector<8x128xbf16>
    %c0_7 = arith.constant 0 : index
    %c0_8 = arith.constant 0 : index
    %6 = vector.load %arg0[%c0_7, %c0_8] : memref<8x1xi32, #tpu.memory_space<vmem>>, vector<8x1xi32>
    %7 = tpu.iota {dimensions = array<i32: 1>} : vector<8x16xi32>
    %8 = vector.broadcast %6 : vector<8x1xi32> to vector<8x16xi32>
    %9 = arith.cmpi eq, %8, %7 : vector<8x16xi32>
    %10 = arith.extui %9 : vector<8x16xi1> to vector<8x16xi32>
    %11 = arith.sitofp %10 : vector<8x16xi32> to vector<8x16xf32>
    %c0_9 = arith.constant 0 : index
    %c0_10 = arith.constant 0 : index
    %12 = vector.load %arg2[%c0_9, %c0_10] : memref<16x256xf32, #tpu.memory_space<vmem>>, vector<16x256xf32>
    %cst_11 = arith.constant dense<0.000000e+00> : vector<8x256xf32>
    %13 = tpu.matmul %11, %12, %cst_11 {dimension_numbers = #tpu.dot_dimension_numbers<[1], [0], [0], [1], [0, 0, 1, 1], [], []>} : vector<8x16xf32>, vector<16x256xf32>, vector<8x256xf32> -> vector<8x256xf32>
    %c0_12 = arith.constant 0 : index
    %c0_13 = arith.constant 0 : index
    %14 = vector.load %arg3[%c0_12, %c0_13] : memref<128x256xbf16, #tpu.memory_space<vmem>>, vector<128x256xbf16>
    %cst_14 = arith.constant dense<0.000000e+00> : vector<8x256xf32>
    %15 = tpu.matmul %5, %14, %cst_14 {dimension_numbers = #tpu.dot_dimension_numbers<[1], [0], [0], [1], [0, 0, 1, 1], [], []>} : vector<8x128xbf16>, vector<128x256xbf16>, vector<8x256xf32> -> vector<8x256xf32>
    %16 = arith.addf %15, %13 : vector<8x256xf32>
    %c0_15 = arith.constant 0 : index
    %c0_16 = arith.constant 0 : index
    %17 = vector.load %arg4[%c0_15, %c0_16] : memref<1x256xf32, #tpu.memory_space<vmem>>, vector<1x256xf32>
    %c0_17 = arith.constant 0 : index
    %c0_18 = arith.constant 0 : index
    %18 = vector.load %arg5[%c0_17, %c0_18] : memref<1x256xf32, #tpu.memory_space<vmem>>, vector<1x256xf32>
    %cst_19 = arith.constant dense<0.000000e+00> : vector<256xf32>
    %19 = vector.multi_reduction <add>, %16, %cst_19 [0] : vector<8x256xf32> to vector<256xf32>
    %20 = vector.shape_cast %19 : vector<256xf32> to vector<1x256xf32>
    %cst_20 = arith.constant 1.250000e-01 : f32
    %21 = vector.broadcast %cst_20 : f32 to vector<1x256xf32>
    %22 = arith.mulf %20, %21 : vector<1x256xf32>
    %23 = arith.mulf %16, %16 : vector<8x256xf32>
    %cst_21 = arith.constant dense<0.000000e+00> : vector<256xf32>
    %24 = vector.multi_reduction <add>, %23, %cst_21 [0] : vector<8x256xf32> to vector<256xf32>
    %25 = vector.shape_cast %24 : vector<256xf32> to vector<1x256xf32>
    %cst_22 = arith.constant 1.250000e-01 : f32
    %26 = vector.broadcast %cst_22 : f32 to vector<1x256xf32>
    %27 = arith.mulf %25, %26 : vector<1x256xf32>
    %28 = arith.mulf %22, %22 : vector<1x256xf32>
    %29 = arith.subf %27, %28 : vector<1x256xf32>
    %cst_23 = arith.constant 0.000000e+00 : f32
    %30 = vector.broadcast %cst_23 : f32 to vector<1x256xf32>
    %31 = arith.maximumf %29, %30 : vector<1x256xf32>
    %cst_24 = arith.constant 9.99999974E-6 : f32
    %32 = vector.broadcast %cst_24 : f32 to vector<1x256xf32>
    %33 = arith.addf %31, %32 : vector<1x256xf32>
    %34 = math.rsqrt %33 : vector<1x256xf32>
    %35 = arith.mulf %17, %34 : vector<1x256xf32>
    %36 = arith.mulf %22, %35 : vector<1x256xf32>
    %37 = arith.subf %18, %36 : vector<1x256xf32>
    %38 = vector.broadcast %35 : vector<1x256xf32> to vector<8x256xf32>
    %39 = arith.mulf %16, %38 : vector<8x256xf32>
    %40 = vector.broadcast %37 : vector<1x256xf32> to vector<8x256xf32>
    %41 = arith.addf %39, %40 : vector<8x256xf32>
    %cst_25 = arith.constant 0.000000e+00 : f32
    %42 = vector.broadcast %cst_25 : f32 to vector<8x256xf32>
    %43 = arith.cmpf ogt, %41, %42 : vector<8x256xf32>
    %cst_26 = arith.constant 2.000000e-01 : f32
    %44 = vector.broadcast %cst_26 : f32 to vector<8x256xf32>
    %45 = arith.mulf %44, %41 : vector<8x256xf32>
    %46 = arith.select %43, %41, %45 : vector<8x256xi1>, vector<8x256xf32>
    %47 = arith.truncf %46 : vector<8x256xf32> to vector<8x256xbf16>
    %c0_27 = arith.constant 0 : index
    %c0_28 = arith.constant 0 : index
    %48 = vector.load %arg6[%c0_27, %c0_28] : memref<256x512xi8, #tpu.memory_space<vmem>>, vector<256x512xi8>
    %49 = arith.sitofp %48 : vector<256x512xi8> to vector<256x512xbf16>
    %cst_29 = arith.constant dense<0.000000e+00> : vector<8x512xf32>
    %50 = tpu.matmul %47, %49, %cst_29 {dimension_numbers = #tpu.dot_dimension_numbers<[1], [0], [0], [1], [0, 0, 1, 1], [], []>} : vector<8x256xbf16>, vector<256x512xbf16>, vector<8x512xf32> -> vector<8x512xf32>
    %c0_30 = arith.constant 0 : index
    %c0_31 = arith.constant 0 : index
    %51 = vector.load %arg7[%c0_30, %c0_31] : memref<1x512xf32, #tpu.memory_space<vmem>>, vector<1x512xf32>
    %c0_32 = arith.constant 0 : index
    %c0_33 = arith.constant 0 : index
    %52 = vector.load %arg8[%c0_32, %c0_33] : memref<1x512xf32, #tpu.memory_space<vmem>>, vector<1x512xf32>
    %cst_34 = arith.constant dense<0.000000e+00> : vector<512xf32>
    %53 = vector.multi_reduction <add>, %50, %cst_34 [0] : vector<8x512xf32> to vector<512xf32>
    %54 = vector.shape_cast %53 : vector<512xf32> to vector<1x512xf32>
    %cst_35 = arith.constant 1.250000e-01 : f32
    %55 = vector.broadcast %cst_35 : f32 to vector<1x512xf32>
    %56 = arith.mulf %54, %55 : vector<1x512xf32>
    %57 = arith.mulf %50, %50 : vector<8x512xf32>
    %cst_36 = arith.constant dense<0.000000e+00> : vector<512xf32>
    %58 = vector.multi_reduction <add>, %57, %cst_36 [0] : vector<8x512xf32> to vector<512xf32>
    %59 = vector.shape_cast %58 : vector<512xf32> to vector<1x512xf32>
    %cst_37 = arith.constant 1.250000e-01 : f32
    %60 = vector.broadcast %cst_37 : f32 to vector<1x512xf32>
    %61 = arith.mulf %59, %60 : vector<1x512xf32>
    %62 = arith.mulf %56, %56 : vector<1x512xf32>
    %63 = arith.subf %61, %62 : vector<1x512xf32>
    %cst_38 = arith.constant 0.000000e+00 : f32
    %64 = vector.broadcast %cst_38 : f32 to vector<1x512xf32>
    %65 = arith.maximumf %63, %64 : vector<1x512xf32>
    %cst_39 = arith.constant 9.99999974E-6 : f32
    %66 = vector.broadcast %cst_39 : f32 to vector<1x512xf32>
    %67 = arith.addf %65, %66 : vector<1x512xf32>
    %68 = math.rsqrt %67 : vector<1x512xf32>
    %69 = arith.mulf %51, %68 : vector<1x512xf32>
    %70 = arith.mulf %56, %69 : vector<1x512xf32>
    %71 = arith.subf %52, %70 : vector<1x512xf32>
    %72 = vector.broadcast %69 : vector<1x512xf32> to vector<8x512xf32>
    %73 = arith.mulf %50, %72 : vector<8x512xf32>
    %74 = vector.broadcast %71 : vector<1x512xf32> to vector<8x512xf32>
    %75 = arith.addf %73, %74 : vector<8x512xf32>
    %cst_40 = arith.constant 0.000000e+00 : f32
    %76 = vector.broadcast %cst_40 : f32 to vector<8x512xf32>
    %77 = arith.cmpf ogt, %75, %76 : vector<8x512xf32>
    %cst_41 = arith.constant 2.000000e-01 : f32
    %78 = vector.broadcast %cst_41 : f32 to vector<8x512xf32>
    %79 = arith.mulf %78, %75 : vector<8x512xf32>
    %80 = arith.select %77, %75, %79 : vector<8x512xi1>, vector<8x512xf32>
    %81 = arith.truncf %80 : vector<8x512xf32> to vector<8x512xbf16>
    %c0_42 = arith.constant 0 : index
    %c0_43 = arith.constant 0 : index
    %82 = vector.load %arg9[%c0_42, %c0_43] : memref<512x1024xi8, #tpu.memory_space<vmem>>, vector<512x1024xi8>
    %83 = arith.sitofp %82 : vector<512x1024xi8> to vector<512x1024xbf16>
    %cst_44 = arith.constant dense<0.000000e+00> : vector<8x1024xf32>
    %84 = tpu.matmul %81, %83, %cst_44 {dimension_numbers = #tpu.dot_dimension_numbers<[1], [0], [0], [1], [0, 0, 1, 1], [], []>} : vector<8x512xbf16>, vector<512x1024xbf16>, vector<8x1024xf32> -> vector<8x1024xf32>
    %c0_45 = arith.constant 0 : index
    %c0_46 = arith.constant 0 : index
    %85 = vector.load %arg10[%c0_45, %c0_46] : memref<1x1024xf32, #tpu.memory_space<vmem>>, vector<1x1024xf32>
    %c0_47 = arith.constant 0 : index
    %c0_48 = arith.constant 0 : index
    %86 = vector.load %arg11[%c0_47, %c0_48] : memref<1x1024xf32, #tpu.memory_space<vmem>>, vector<1x1024xf32>
    %cst_49 = arith.constant dense<0.000000e+00> : vector<1024xf32>
    %87 = vector.multi_reduction <add>, %84, %cst_49 [0] : vector<8x1024xf32> to vector<1024xf32>
    %88 = vector.shape_cast %87 : vector<1024xf32> to vector<1x1024xf32>
    %cst_50 = arith.constant 1.250000e-01 : f32
    %89 = vector.broadcast %cst_50 : f32 to vector<1x1024xf32>
    %90 = arith.mulf %88, %89 : vector<1x1024xf32>
    %91 = arith.mulf %84, %84 : vector<8x1024xf32>
    %cst_51 = arith.constant dense<0.000000e+00> : vector<1024xf32>
    %92 = vector.multi_reduction <add>, %91, %cst_51 [0] : vector<8x1024xf32> to vector<1024xf32>
    %93 = vector.shape_cast %92 : vector<1024xf32> to vector<1x1024xf32>
    %cst_52 = arith.constant 1.250000e-01 : f32
    %94 = vector.broadcast %cst_52 : f32 to vector<1x1024xf32>
    %95 = arith.mulf %93, %94 : vector<1x1024xf32>
    %96 = arith.mulf %90, %90 : vector<1x1024xf32>
    %97 = arith.subf %95, %96 : vector<1x1024xf32>
    %cst_53 = arith.constant 0.000000e+00 : f32
    %98 = vector.broadcast %cst_53 : f32 to vector<1x1024xf32>
    %99 = arith.maximumf %97, %98 : vector<1x1024xf32>
    %cst_54 = arith.constant 9.99999974E-6 : f32
    %100 = vector.broadcast %cst_54 : f32 to vector<1x1024xf32>
    %101 = arith.addf %99, %100 : vector<1x1024xf32>
    %102 = math.rsqrt %101 : vector<1x1024xf32>
    %103 = arith.mulf %85, %102 : vector<1x1024xf32>
    %104 = arith.mulf %90, %103 : vector<1x1024xf32>
    %105 = arith.subf %86, %104 : vector<1x1024xf32>
    %106 = vector.broadcast %103 : vector<1x1024xf32> to vector<8x1024xf32>
    %107 = arith.mulf %84, %106 : vector<8x1024xf32>
    %108 = vector.broadcast %105 : vector<1x1024xf32> to vector<8x1024xf32>
    %109 = arith.addf %107, %108 : vector<8x1024xf32>
    %cst_55 = arith.constant 0.000000e+00 : f32
    %110 = vector.broadcast %cst_55 : f32 to vector<8x1024xf32>
    %111 = arith.cmpf ogt, %109, %110 : vector<8x1024xf32>
    %cst_56 = arith.constant 2.000000e-01 : f32
    %112 = vector.broadcast %cst_56 : f32 to vector<8x1024xf32>
    %113 = arith.mulf %112, %109 : vector<8x1024xf32>
    %114 = arith.select %111, %109, %113 : vector<8x1024xi1>, vector<8x1024xf32>
    %115 = arith.truncf %114 : vector<8x1024xf32> to vector<8x1024xbf16>
    %c0_57 = arith.constant 0 : index
    %c0_58 = arith.constant 0 : index
    %116 = vector.load %arg12[%c0_57, %c0_58] : memref<1024x784xi8, #tpu.memory_space<vmem>>, vector<1024x784xi8>
    %117 = arith.sitofp %116 : vector<1024x784xi8> to vector<1024x784xbf16>
    %cst_59 = arith.constant dense<0.000000e+00> : vector<8x784xf32>
    %118 = tpu.matmul %115, %117, %cst_59 {dimension_numbers = #tpu.dot_dimension_numbers<[1], [0], [0], [1], [0, 0, 1, 1], [], []>} : vector<8x1024xbf16>, vector<1024x784xbf16>, vector<8x784xf32> -> vector<8x784xf32>
    %c0_60 = arith.constant 0 : index
    %c0_61 = arith.constant 0 : index
    %119 = vector.load %arg13[%c0_60, %c0_61] : memref<1x784xf32, #tpu.memory_space<vmem>>, vector<1x784xf32>
    %120 = vector.broadcast %119 : vector<1x784xf32> to vector<8x784xf32>
    %121 = arith.mulf %118, %120 : vector<8x784xf32>
    %c0_62 = arith.constant 0 : index
    %c0_63 = arith.constant 0 : index
    %122 = vector.load %arg14[%c0_62, %c0_63] : memref<1x784xf32, #tpu.memory_space<vmem>>, vector<1x784xf32>
    %123 = vector.broadcast %122 : vector<1x784xf32> to vector<8x784xf32>
    %124 = arith.addf %121, %123 : vector<8x784xf32>
    %125 = math.tanh %124 : vector<8x784xf32>
    %c0_64 = arith.constant 0 : index
    %c0_65 = arith.constant 0 : index
    %126 = vector.load %arg15[%c0_64, %c0_65] : memref<8x784xf32, #tpu.memory_space<vmem>>, vector<8x784xf32>
    tpu.vector_store %arg15[%c0_64, %c0_65], %125 {strides = array<i32>} : memref<8x784xf32, #tpu.memory_space<vmem>>, vector<8x784xf32>,
    return
  }
}

</mosaic_0001>

<llo_original>
// kernel: tpu_custom_call.1
$region0: #{tpu_custom_call.1}
  #allocation0 [shape = 'u32[]', space=smem, size = 0x4, offset = 0x4, fixed_abs, tag = 'smem constant byte address 0x4 - core index']
  #allocation1 [shape = 'u32[144,128]{1,0:T(1,128)}', space=vmem, size = 0x12000, scoped, tag = 'internal scratch']
  #allocation2 [shape = 'f32[8,128]{1,0:T(8,128)}', space=vmem, size = 0x1000, scoped, tag = 'scratch operand']
  %s0 = inlined_call_operand.vmem [shape: s32[8,1], index: 0, kind: input, shape index: {}]
  %s1 = inlined_call_operand.vmem [shape: f32[8,100], index: 1, kind: input, shape index: {}]
  %s2 = inlined_call_operand.vmem [shape: f32[16,256], index: 2, kind: input, shape index: {}]
  %s3 = inlined_call_operand.vmem [shape: bf16[128,256], index: 3, kind: input, shape index: {}]
  %s4 = inlined_call_operand.vmem [shape: f32[1,256], index: 4, kind: input, shape index: {}]
  %s5 = inlined_call_operand.vmem [shape: f32[1,256], index: 5, kind: input, shape index: {}]
  %s6 = inlined_call_operand.vmem [shape: s8[256,512], index: 6, kind: input, shape index: {}]
  %s7 = inlined_call_operand.vmem [shape: f32[1,512], index: 7, kind: input, shape index: {}]
  %s8 = inlined_call_operand.vmem [shape: f32[1,512], index: 8, kind: input, shape index: {}]
  %s9 = inlined_call_operand.vmem [shape: s8[512,1024], index: 9, kind: input, shape index: {}]
  %s10 = inlined_call_operand.vmem [shape: f32[1,1024], index: 10, kind: input, shape index: {}]
  %s11 = inlined_call_operand.vmem [shape: f32[1,1024], index: 11, kind: input, shape index: {}]
  %s12 = inlined_call_operand.vmem [shape: s8[1024,784], index: 12, kind: input, shape index: {}]
  %s13 = inlined_call_operand.vmem [shape: f32[1,784], index: 13, kind: input, shape index: {}]
  %s14 = inlined_call_operand.vmem [shape: f32[1,784], index: 14, kind: input, shape index: {}]
  %s15 = inlined_call_operand.hbm [shape: f32[8,784], index: 15, kind: output, shape index: {}]
  %s16 = sld [smem:[#allocation0]]
  $region70: #{tpu_custom_call.1} parent=0
    _
  %s18 = ssub.s32 1, %s16
  %s19 = scalar_select 0, %s18, %s16
  $region1: #{tpu_custom_call.1} parent=0
    #allocation3 [shape = 'u8[28672]{0}', space=vmem, size = 0x7000, scoped, tag = 'output window, operand 0, single buffered']
    #allocation4 [shape = 's32[1]{0}', space=sflag, size = 0x4, scoped, tag = 'scoped memory for tpu_custom_call.1']
    %20 = vsyncpa [#allocation4], 0
    // Predicated region
    $region2: #{tpu_custom_call.1} parent=1 // pred_check
      _
    $region3: #{tpu_custom_call.1} parent=1 // pred_check_branch
      %22 = sbr.rel (0) target = $region5
    $region4: #{tpu_custom_call.1} parent=1 // pred_region
      _
    $region5: #{tpu_custom_call.1} parent=1 // pred_fallthru
      _
    // Predicated region
    $region6: #{tpu_custom_call.1} parent=1 // pred_check
      _
    $region7: #{tpu_custom_call.1} parent=1 // pred_check_branch
      %24 = sbr.rel (0) target = $region9
    $region8: #{tpu_custom_call.1} parent=1 // pred_region
      _
    $region9: #{tpu_custom_call.1} parent=1 // pred_fallthru
      _
    // Predicated region
    $region10: #{tpu_custom_call.1} parent=1 // pred_check
      _
    $region11: #{tpu_custom_call.1} parent=1 // pred_check_branch
      %26 = sbr.rel (0) target = $region13
    $region12: #{tpu_custom_call.1} parent=1 // pred_region
      _
    $region13: #{tpu_custom_call.1} parent=1 // pred_fallthru
      _
    // Predicated region
    $region14: #{tpu_custom_call.1} parent=1 // pred_check
      _
    $region15: #{tpu_custom_call.1} parent=1 // pred_check_branch
      %28 = sbr.rel (0) target = $region17
    $region16: #{tpu_custom_call.1} parent=1 // pred_region
      _
    $region17: #{tpu_custom_call.1} parent=1 // pred_fallthru
      _
    // Predicated region
    $region18: #{tpu_custom_call.1} parent=1 // pred_check
      _
    $region19: #{tpu_custom_call.1} parent=1 // pred_check_branch
      %30 = sbr.rel (0) target = $region21
    $region20: #{tpu_custom_call.1} parent=1 // pred_region
      _
    $region21: #{tpu_custom_call.1} parent=1 // pred_fallthru
      _
    // Predicated region
    $region22: #{tpu_custom_call.1} parent=1 // pred_check
      _
    $region23: #{tpu_custom_call.1} parent=1 // pred_check_branch
      %32 = sbr.rel (0) target = $region25
    $region24: #{tpu_custom_call.1} parent=1 // pred_region
      _
    $region25: #{tpu_custom_call.1} parent=1 // pred_fallthru
      _
    // Predicated region
    $region26: #{tpu_custom_call.1} parent=1 // pred_check
      _
    $region27: #{tpu_custom_call.1} parent=1 // pred_check_branch
      %34 = sbr.rel (0) target = $region29
    $region28: #{tpu_custom_call.1} parent=1 // pred_region
      _
    $region29: #{tpu_custom_call.1} parent=1 // pred_fallthru
      _
    // Predicated region
    $region30: #{tpu_custom_call.1} parent=1 // pred_check
      _
    $region31: #{tpu_custom_call.1} parent=1 // pred_check_branch
      %36 = sbr.rel (0) target = $region33
    $region32: #{tpu_custom_call.1} parent=1 // pred_region
      _
    $region33: #{tpu_custom_call.1} parent=1 // pred_fallthru
      _
    // Predicated region
    $region34: #{tpu_custom_call.1} parent=1 // pred_check
      _
    $region35: #{tpu_custom_call.1} parent=1 // pred_check_branch
      %38 = sbr.rel (0) target = $region37
    $region36: #{tpu_custom_call.1} parent=1 // pred_region
      _
    $region37: #{tpu_custom_call.1} parent=1 // pred_fallthru
      _
    // Predicated region
    $region38: #{tpu_custom_call.1} parent=1 // pred_check
      _
    $region39: #{tpu_custom_call.1} parent=1 // pred_check_branch
      %40 = sbr.rel (0) target = $region41
    $region40: #{tpu_custom_call.1} parent=1 // pred_region
      _
    $region41: #{tpu_custom_call.1} parent=1 // pred_fallthru
      _
    // Predicated region
    $region42: #{tpu_custom_call.1} parent=1 // pred_check
      _
    $region43: #{tpu_custom_call.1} parent=1 // pred_check_branch
      %42 = sbr.rel (0) target = $region45
    $region44: #{tpu_custom_call.1} parent=1 // pred_region
      _
    $region45: #{tpu_custom_call.1} parent=1 // pred_fallthru
      _
    // Predicated region
    $region46: #{tpu_custom_call.1} parent=1 // pred_check
      _
    $region47: #{tpu_custom_call.1} parent=1 // pred_check_branch
      %44 = sbr.rel (0) target = $region49
    $region48: #{tpu_custom_call.1} parent=1 // pred_region
      _
    $region49: #{tpu_custom_call.1} parent=1 // pred_fallthru
      _
    // Predicated region
    $region50: #{tpu_custom_call.1} parent=1 // pred_check
      _
    $region51: #{tpu_custom_call.1} parent=1 // pred_check_branch
      %46 = sbr.rel (0) target = $region53
    $region52: #{tpu_custom_call.1} parent=1 // pred_region
      _
    $region53: #{tpu_custom_call.1} parent=1 // pred_fallthru
      _
    // Predicated region
    $region54: #{tpu_custom_call.1} parent=1 // pred_check
      _
    $region55: #{tpu_custom_call.1} parent=1 // pred_check_branch
      %48 = sbr.rel (0) target = $region57
    $region56: #{tpu_custom_call.1} parent=1 // pred_region
      _
    $region57: #{tpu_custom_call.1} parent=1 // pred_fallthru
      _
    // Predicated region
    $region58: #{tpu_custom_call.1} parent=1 // pred_check
      _
    $region59: #{tpu_custom_call.1} parent=1 // pred_check_branch
      %50 = sbr.rel (0) target = $region61
    $region60: #{tpu_custom_call.1} parent=1 // pred_region
      _
    $region61: #{tpu_custom_call.1} parent=1 // pred_fallthru
      _
    %52 = vst [vmem:[#allocation2] sm:$0xff] 0.0
    %v53 = vld [vmem:[%s1] sm:$0xff]
    %vm54 = vcmask 818176
    %55 = vst.msk [vmem:[#allocation2] sm:$0xff] %vm54, %v53
    %v56 = vld [vmem:[#allocation2] sm:$0xff]
    %v57 = vpack.c.bf16 %v56, %v56
    %v58 = vld [vmem:[%s0] sm:$0xff]
    %v59 = vlaneseq
    %v60 = vand.u32 %v59, 127
    %61 = vset.pattern.permute.xlu0 0
    %62 = vperm.xlu0 %61, %v58
    %v63 = vpop.permute.xlu0 %62
    %vm64 = vcmp.eq.s32.totalorder %v63, %v60
    %v65 = vsel %vm64, 1, 0
    %v66 = vcvt.s32.f32 %v65
    %v67 = vld [vmem:[%s2] sm:$0xff]
    %v68 = vld [vmem:[%s2 + $0x8] sm:$0xff]
    %v69 = vld [vmem:[%s2 + $0x10] sm:$0xff]
    %v70 = vld [vmem:[%s2 + $0x18] sm:$0xff]
    %vm71 = vcmask 130048
    %v73 = vsel %vm71, %v66, 0
    %75 = vmatprep.subr.mxu0 %v68
    %76 = vmatpush1.msra.mxu0 %v67
    %77 = vmatprep.subr.mxu0 %v70
    %78 = vmatpush1.msra.mxu0 %v69
    %79 = vmatprep.subr.mxu0 0.0
    %80 = vmatpush1.msra.mxu0 0.0
    %81 = vmatprep.subr.mxu0 0.0
    %82 = vmatpush1.msra.mxu0 0.0
    %83 = vmatprep.subr.mxu0 0.0
    %84 = vmatpush1.msra.mxu0 0.0
    %85 = vmatprep.subr.mxu0 0.0
    %86 = vmatpush1.msra.mxu0 0.0
    %87 = vmatprep.subr.mxu0 0.0
    %88 = vmatpush1.msra.mxu0 0.0
    %89 = vmatprep.subr.mxu0 0.0
    %90 = vmatpush1.msra.mxu0 0.0
    %91 = vmatprep.subr.mxu0 0.0
    %92 = vmatpush1.msra.mxu0 0.0
    %93 = vmatprep.subr.mxu0 0.0
    %94 = vmatpush1.msra.mxu0 0.0
    %95 = vmatprep.subr.mxu0 0.0
    %96 = vmatpush1.msra.mxu0 0.0
    %97 = vmatprep.subr.mxu0 0.0
    %98 = vmatpush1.msra.mxu0 0.0
    %99 = vmatprep.subr.mxu0 0.0
    %100 = vmatpush1.msra.mxu0 0.0
    %101 = vmatprep.subr.mxu0 0.0
    %102 = vmatpush1.msra.mxu0 0.0
    %103 = vmatprep.subr.mxu0 0.0
    %104 = vmatpush1.msra.mxu0 0.0
    %105 = vmatprep.subr.mxu0 0.0
    %106 = vmatpush1.msra.mxu0 0.0
    %107 = vmatprep.subr.mxu0 0.0
    %108 = vmatpush1.msra.mxu0 0.0
    %109 = vmatprep.subr.mxu0 0.0
    %110 = vmatpush1.msra.mxu0 0.0
    %111 = vmatprep.subr.mxu0 0.0
    %112 = vmatpush1.msra.mxu0 0.0
    %113 = vmatprep.subr.mxu0 0.0
    %114 = vmatpush1.msra.mxu0 0.0
    %115 = vmatprep.subr.mxu0 0.0
    %116 = vmatpush1.msra.mxu0 0.0
    %117 = vmatprep.subr.mxu0 0.0
    %118 = vmatpush1.msra.mxu0 0.0
    %119 = vmatprep.subr.mxu0 0.0
    %120 = vmatpush1.msra.mxu0 0.0
    %121 = vmatprep.subr.mxu0 0.0
    %122 = vmatpush1.msra.mxu0 0.0
    %123 = vmatprep.subr.mxu0 0.0
    %124 = vmatpush1.msra.mxu0 0.0
    %125 = vmatprep.subr.mxu0 0.0
    %126 = vmatpush1.msra.mxu0 0.0
    %127 = vmatprep.subr.mxu0 0.0
    %128 = vmatpush1.msra.mxu0 0.0
    %129 = vmatprep.subr.mxu0 0.0
    %130 = vmatpush1.msra.mxu0 0.0
    %131 = vmatprep.subr.mxu0 0.0
    %132 = vmatpush1.msra.mxu0 0.0
    %133 = vmatprep.subr.mxu0 0.0
    %134 = vmatpush1.msra.mxu0 0.0
    %135 = vmatprep.subr.mxu0 0.0
    %136 = vmatpush1.msra.mxu0 0.0
    %137 = vmatprep.subr.mxu0 0.0
    %138 = vmatpush1.msra.mxu0 0.0
    %139 = vmatprep.mubr.f32.mxu0 0.0
    %140 = vmatmul.mubr.f32.gmra.mrb[0].mxu0 %v73
    %v141 = vpop.f32.mrb[0].mxu0
    %v142 = vadd.f32 0.0, %v141
    %v143 = vpop.f32.mrb[0].mxu0
    %v144 = vadd.f32 0.0, %v143
    %145 = vdwg.mxu0
    %v146 = vld [vmem:[%s3] sm:$0xff]
    %v147 = vld [vmem:[%s3 + $0x8] sm:$0xff]
    %v148 = vld [vmem:[%s3 + $0x10] sm:$0xff]
    %v149 = vld [vmem:[%s3 + $0x18] sm:$0xff]
    %v150 = vld [vmem:[%s3 + $0x20] sm:$0xff]
    %v151 = vld [vmem:[%s3 + $0x28] sm:$0xff]
    %v152 = vld [vmem:[%s3 + $0x30] sm:$0xff]
    %v153 = vld [vmem:[%s3 + $0x38] sm:$0xff]
    %v154 = vld [vmem:[%s3 + $0x40] sm:$0xff]
    %v155 = vld [vmem:[%s3 + $0x48] sm:$0xff]
    %v156 = vld [vmem:[%s3 + $0x50] sm:$0xff]
    %v157 = vld [vmem:[%s3 + $0x58] sm:$0xff]
    %v158 = vld [vmem:[%s3 + $0x60] sm:$0xff]
    %v159 = vld [vmem:[%s3 + $0x68] sm:$0xff]
    %v160 = vld [vmem:[%s3 + $0x70] sm:$0xff]
    %v161 = vld [vmem:[%s3 + $0x78] sm:$0xff]
    %v178 = vunpack.c.l.b16 %v146
    %v179 = vunpack.c.h.b16 %v146
    %v180 = vunpack.c.l.b16 %v147
    %v181 = vunpack.c.h.b16 %v147
    %v182 = vunpack.c.l.b16 %v148
    %v183 = vunpack.c.h.b16 %v148
    %v184 = vunpack.c.l.b16 %v149
    %v185 = vunpack.c.h.b16 %v149
    %v186 = vunpack.c.l.b16 %v150
    %v187 = vunpack.c.h.b16 %v150
    %v188 = vunpack.c.l.b16 %v151
    %v189 = vunpack.c.h.b16 %v151
    %v190 = vunpack.c.l.b16 %v152
    %v191 = vunpack.c.h.b16 %v152
    %v192 = vunpack.c.l.b16 %v153
    %v193 = vunpack.c.h.b16 %v153
    %v194 = vunpack.c.l.b16 %v154
    %v195 = vunpack.c.h.b16 %v154
    %v196 = vunpack.c.l.b16 %v155
    %v197 = vunpack.c.h.b16 %v155
    %v198 = vunpack.c.l.b16 %v156
    %v199 = vunpack.c.h.b16 %v156
    %v200 = vunpack.c.l.b16 %v157
    %v201 = vunpack.c.h.b16 %v157
    %v202 = vunpack.c.l.b16 %v158
    %v203 = vunpack.c.h.b16 %v158
    %v204 = vunpack.c.l.b16 %v159
    %v205 = vunpack.c.h.b16 %v159
    %v206 = vunpack.c.l.b16 %v160
    %v207 = vunpack.c.h.b16 %v160
    %v208 = vunpack.c.l.b16 %v161
    %v209 = vunpack.c.h.b16 %v161
    %v210 = vpack.c.b16 %v180, %v178
    %v211 = vpack.c.b16 %v181, %v179
    %v212 = vpack.c.b16 %v184, %v182
    %v213 = vpack.c.b16 %v185, %v183
    %v214 = vpack.c.b16 %v188, %v186
    %v215 = vpack.c.b16 %v189, %v187
    %v216 = vpack.c.b16 %v192, %v190
    %v217 = vpack.c.b16 %v193, %v191
    %v218 = vpack.c.b16 %v196, %v194
    %v219 = vpack.c.b16 %v197, %v195
    %v220 = vpack.c.b16 %v200, %v198
    %v221 = vpack.c.b16 %v201, %v199
    %v222 = vpack.c.b16 %v204, %v202
    %v223 = vpack.c.b16 %v205, %v203
    %v224 = vpack.c.b16 %v208, %v206
    %v225 = vpack.c.b16 %v209, %v207
    %242 = vmatprep.subr.bf16.mxu0 %v211
    %243 = vmatpush1.bf16.msra.mxu0 %v210
    %244 = vmatprep.subr.bf16.mxu0 %v213
    %245 = vmatpush1.bf16.msra.mxu0 %v212
    %246 = vmatprep.subr.bf16.mxu0 %v215
    %247 = vmatpush1.bf16.msra.mxu0 %v214
    %248 = vmatprep.subr.bf16.mxu0 %v217
    %249 = vmatpush1.bf16.msra.mxu0 %v216
    %250 = vmatprep.subr.bf16.mxu0 %v219
    %251 = vmatpush1.bf16.msra.mxu0 %v218
    %252 = vmatprep.subr.bf16.mxu0 %v221
    %253 = vmatpush1.bf16.msra.mxu0 %v220
    %254 = vmatprep.subr.bf16.mxu0 %v223
    %255 = vmatpush1.bf16.msra.mxu0 %v222
    %256 = vmatprep.subr.bf16.mxu0 %v225
    %257 = vmatpush1.bf16.msra.mxu0 %v224
    %258 = vmatprep.subr.bf16.mxu0 0
    %259 = vmatpush1.bf16.msra.mxu0 0
    %260 = vmatprep.subr.bf16.mxu0 0
    %261 = vmatpush1.bf16.msra.mxu0 0
    %262 = vmatprep.subr.bf16.mxu0 0
    %263 = vmatpush1.bf16.msra.mxu0 0
    %264 = vmatprep.subr.bf16.mxu0 0
    %265 = vmatpush1.bf16.msra.mxu0 0
    %266 = vmatprep.subr.bf16.mxu0 0
    %267 = vmatpush1.bf16.msra.mxu0 0
    %268 = vmatprep.subr.bf16.mxu0 0
    %269 = vmatpush1.bf16.msra.mxu0 0
    %270 = vmatprep.subr.bf16.mxu0 0
    %271 = vmatpush1.bf16.msra.mxu0 0
    %272 = vmatprep.subr.bf16.mxu0 0
    %273 = vmatpush1.bf16.msra.mxu0 0
    %274 = vmatprep.mubr.bf16.mxu0 0
    %275 = vmatmul.mubr.bf16.gmra.mrb[0].mxu0 %v57
    %v276 = vpop.f32.mrb[0].mxu0
    %v277 = vadd.f32 %v142, %v276
    %v278 = vpop.f32.mrb[0].mxu0
    %v279 = vadd.f32 %v144, %v278
    %v280 = vpop.f32.mrb[0].mxu0
    %v281 = vpop.f32.mrb[0].mxu0
    %282 = vdwg.mxu0
    %v283 = vld [vmem:[%s4] sm:$0x3]
    %v284 = vld [vmem:[%s5] sm:$0x3]
    %v285 = vrot.slane %v277, 4
    %v286 = vadd.f32 %v277, %v285
    %v287 = vrot.slane %v286, 2
    %v288 = vadd.f32 %v286, %v287
    %v289 = vrot.slane %v288, 1
    %v290 = vadd.f32 %v288, %v289
    %v291 = vrot.slane %v279, 4
    %v292 = vadd.f32 %v279, %v291
    %v293 = vrot.slane %v292, 2
    %v294 = vadd.f32 %v292, %v293
    %v295 = vrot.slane %v294, 1
    %v296 = vadd.f32 %v294, %v295
    %v297 = vmul.f32 %v290, 0.125
    %v298 = vmul.f32 %v296, 0.125
    %v299 = vmul.f32 %v277, %v277
    %v300 = vmul.f32 %v279, %v279
    %v301 = vrot.slane %v299, 4
    %v302 = vadd.f32 %v299, %v301
    %v303 = vrot.slane %v302, 2
    %v304 = vadd.f32 %v302, %v303
    %v305 = vrot.slane %v304, 1
    %v306 = vadd.f32 %v304, %v305
    %v307 = vrot.slane %v300, 4
    %v308 = vadd.f32 %v300, %v307
    %v309 = vrot.slane %v308, 2
    %v310 = vadd.f32 %v308, %v309
    %v311 = vrot.slane %v310, 1
    %v312 = vadd.f32 %v310, %v311
    %v313 = vmul.f32 %v306, 0.125
    %v314 = vmul.f32 %v312, 0.125
    %v315 = vmul.f32 %v297, %v297
    %v316 = vmul.f32 %v298, %v298
    %v317 = vsub.f32 %v313, %v315
    %v318 = vsub.f32 %v314, %v316
    %v319 = vmax.f32 %v317, 0.0
    %v320 = vmax.f32 %v318, 0.0
    %v321 = vadd.f32 %v319, 1e-05
    %v322 = vadd.f32 %v320, 1e-05
    %v323 = vrsqrt.pop %v321
    %v324 = vrsqrt.pop %v322
    %v327 = vcombine.low %v323, %v324
    %v329 = vunpack.c.l.s4 1966171168
    %v330 = vunpack.c.0.s8 %v329
    %v331 = vlaneseq
    %v332 = vshrl.u32 %v331, 7
    %v333 = vsub.s32 %v330, %v332
    %v334 = vrot.slane %v327, %v333
    %v336 = vunpack.c.l.s4 1966171168
    %v337 = vunpack.c.0.s8 %v336
    %v338 = vlaneseq
    %v339 = vshrl.u32 %v338, 7
    %v340 = vsub.s32 %v337, %v339
    %v341 = vrot.slane %v334, %v340
    %v343 = vmul.f32 %v283, %v341
    %v345 = vlaneseq
    %v346 = vshrl.u32 %v345, 7
    %v347 = vsub.s32 0, %v346
    %v348 = vrot.slane %v343, %v347
    %v349 = vlaneseq
    %v350 = vshrl.u32 %v349, 7
    %v351 = vsub.s32 1, %v350
    %v352 = vrot.slane %v343, %v351
    %v355 = vmul.f32 %v297, %v348
    %v356 = vmul.f32 %v298, %v352
    %v359 = vcombine.low %v355, %v356
    %v361 = vunpack.c.l.s4 1966171168
    %v362 = vunpack.c.0.s8 %v361
    %v363 = vlaneseq
    %v364 = vshrl.u32 %v363, 7
    %v365 = vsub.s32 %v362, %v364
    %v366 = vrot.slane %v359, %v365
    %v368 = vunpack.c.l.s4 1966171168
    %v369 = vunpack.c.0.s8 %v368
    %v370 = vlaneseq
    %v371 = vshrl.u32 %v370, 7
    %v372 = vsub.s32 %v369, %v371
    %v373 = vrot.slane %v366, %v372
    %v375 = vsub.f32 %v284, %v373
    %v376 = vmul.f32 %v277, %v348
    %v377 = vmul.f32 %v279, %v352
    %v379 = vlaneseq
    %v380 = vshrl.u32 %v379, 7
    %v381 = vsub.s32 0, %v380
    %v382 = vrot.slane %v375, %v381
    %v383 = vlaneseq
    %v384 = vshrl.u32 %v383, 7
    %v385 = vsub.s32 1, %v384
    %v386 = vrot.slane %v375, %v385
    %v389 = vadd.f32 %v376, %v382
    %v390 = vadd.f32 %v377, %v386
    %vm391 = vcmp.gt.f32.partialorder %v389, 0.0
    %vm392 = vcmp.gt.f32.partialorder %v390, 0.0
    %v393 = vmul.f32 %v389, 0.2
    %v394 = vmul.f32 %v390, 0.2
    %v395 = vsel %vm391, %v389, %v393
    %v396 = vsel %vm392, %v390, %v394
    %v397 = vpack.c.bf16 %v395, %v395
    %v398 = vpack.c.bf16 %v396, %v396
    %v399 = vld [vmem:[%s6] sm:$0xff]
    %v400 = vld [vmem:[%s6 + $0x8] sm:$0xff]
    %v401 = vld [vmem:[%s6 + $0x10] sm:$0xff]
    %v402 = vld [vmem:[%s6 + $0x18] sm:$0xff]
    %v403 = vld [vmem:[%s6 + $0x20] sm:$0xff]
    %v404 = vld [vmem:[%s6 + $0x28] sm:$0xff]
    %v405 = vld [vmem:[%s6 + $0x30] sm:$0xff]
    %v406 = vld [vmem:[%s6 + $0x38] sm:$0xff]
    %v407 = vld [vmem:[%s6 + $0x40] sm:$0xff]
    %v408 = vld [vmem:[%s6 + $0x48] sm:$0xff]
    %v409 = vld [vmem:[%s6 + $0x50] sm:$0xff]
    %v410 = vld [vmem:[%s6 + $0x58] sm:$0xff]
    %v411 = vld [vmem:[%s6 + $0x60] sm:$0xff]
    %v412 = vld [vmem:[%s6 + $0x68] sm:$0xff]
    %v413 = vld [vmem:[%s6 + $0x70] sm:$0xff]
    %v414 = vld [vmem:[%s6 + $0x78] sm:$0xff]
    %v415 = vld [vmem:[%s6 + $0x80] sm:$0xff]
    %v416 = vld [vmem:[%s6 + $0x88] sm:$0xff]
    %v417 = vld [vmem:[%s6 + $0x90] sm:$0xff]
    %v418 = vld [vmem:[%s6 + $0x98] sm:$0xff]
    %v419 = vld [vmem:[%s6 + $0xa0] sm:$0xff]
    %v420 = vld [vmem:[%s6 + $0xa8] sm:$0xff]
    %v421 = vld [vmem:[%s6 + $0xb0] sm:$0xff]
    %v422 = vld [vmem:[%s6 + $0xb8] sm:$0xff]
    %v423 = vld [vmem:[%s6 + $0xc0] sm:$0xff]
    %v424 = vld [vmem:[%s6 + $0xc8] sm:$0xff]
    %v425 = vld [vmem:[%s6 + $0xd0] sm:$0xff]
    %v426 = vld [vmem:[%s6 + $0xd8] sm:$0xff]
    %v427 = vld [vmem:[%s6 + $0xe0] sm:$0xff]
    %v428 = vld [vmem:[%s6 + $0xe8] sm:$0xff]
    %v429 = vld [vmem:[%s6 + $0xf0] sm:$0xff]
    %v430 = vld [vmem:[%s6 + $0xf8] sm:$0xff]
    %v431 = vunpack.c.l.s8.bf16 %v399
    %v432 = vunpack.c.l.s8.bf16 %v400
    %v433 = vunpack.c.l.s8.bf16 %v401
    %v434 = vunpack.c.l.s8.bf16 %v402
    %v435 = vunpack.c.h.s8.bf16 %v399
    %v436 = vunpack.c.h.s8.bf16 %v400
    %v437 = vunpack.c.h.s8.bf16 %v401
    %v438 = vunpack.c.h.s8.bf16 %v402
    %v439 = vunpack.c.l.s8.bf16 %v403
    %v440 = vunpack.c.l.s8.bf16 %v404
    %v441 = vunpack.c.l.s8.bf16 %v405
    %v442 = vunpack.c.l.s8.bf16 %v406
    %v443 = vunpack.c.h.s8.bf16 %v403
    %v444 = vunpack.c.h.s8.bf16 %v404
    %v445 = vunpack.c.h.s8.bf16 %v405
    %v446 = vunpack.c.h.s8.bf16 %v406
    %v447 = vunpack.c.l.s8.bf16 %v407
    %v448 = vunpack.c.l.s8.bf16 %v408
    %v449 = vunpack.c.l.s8.bf16 %v409
    %v450 = vunpack.c.l.s8.bf16 %v410
    %v451 = vunpack.c.h.s8.bf16 %v407
    %v452 = vunpack.c.h.s8.bf16 %v408
    %v453 = vunpack.c.h.s8.bf16 %v409
    %v454 = vunpack.c.h.s8.bf16 %v410
    %v455 = vunpack.c.l.s8.bf16 %v411
    %v456 = vunpack.c.l.s8.bf16 %v412
    %v457 = vunpack.c.l.s8.bf16 %v413
    %v458 = vunpack.c.l.s8.bf16 %v414
    %v459 = vunpack.c.h.s8.bf16 %v411
    %v460 = vunpack.c.h.s8.bf16 %v412
    %v461 = vunpack.c.h.s8.bf16 %v413
    %v462 = vunpack.c.h.s8.bf16 %v414
    %v463 = vunpack.c.l.s8.bf16 %v415
    %v464 = vunpack.c.l.s8.bf16 %v416
    %v465 = vunpack.c.l.s8.bf16 %v417
    %v466 = vunpack.c.l.s8.bf16 %v418
    %v467 = vunpack.c.h.s8.bf16 %v415
    %v468 = vunpack.c.h.s8.bf16 %v416
    %v469 = vunpack.c.h.s8.bf16 %v417
    %v470 = vunpack.c.h.s8.bf16 %v418
    %v471 = vunpack.c.l.s8.bf16 %v419
    %v472 = vunpack.c.l.s8.bf16 %v420
    %v473 = vunpack.c.l.s8.bf16 %v421
    %v474 = vunpack.c.l.s8.bf16 %v422
    %v475 = vunpack.c.h.s8.bf16 %v419
    %v476 = vunpack.c.h.s8.bf16 %v420
    %v477 = vunpack.c.h.s8.bf16 %v421
    %v478 = vunpack.c.h.s8.bf16 %v422
    %v479 = vunpack.c.l.s8.bf16 %v423
    %v480 = vunpack.c.l.s8.bf16 %v424
    %v481 = vunpack.c.l.s8.bf16 %v425
    %v482 = vunpack.c.l.s8.bf16 %v426
    %v483 = vunpack.c.h.s8.bf16 %v423
    %v484 = vunpack.c.h.s8.bf16 %v424
    %v485 = vunpack.c.h.s8.bf16 %v425
    %v486 = vunpack.c.h.s8.bf16 %v426
    %v487 = vunpack.c.l.s8.bf16 %v427
    %v488 = vunpack.c.l.s8.bf16 %v428
    %v489 = vunpack.c.l.s8.bf16 %v429
    %v490 = vunpack.c.l.s8.bf16 %v430
    %v491 = vunpack.c.h.s8.bf16 %v427
    %v492 = vunpack.c.h.s8.bf16 %v428
    %v493 = vunpack.c.h.s8.bf16 %v429
    %v494 = vunpack.c.h.s8.bf16 %v430
    %495 = vmatprep.subr.bf16.mxu0 %v432
    %496 = vmatpush1.bf16.msra.mxu0 %v431
    %497 = vmatprep.subr.bf16.mxu0 %v436
    %498 = vmatpush1.bf16.msra.mxu0 %v435
    %499 = vmatprep.subr.bf16.mxu0 %v440
    %500 = vmatpush1.bf16.msra.mxu0 %v439
    %501 = vmatprep.subr.bf16.mxu0 %v444
    %502 = vmatpush1.bf16.msra.mxu0 %v443
    %503 = vmatprep.subr.bf16.mxu0 %v448
    %504 = vmatpush1.bf16.msra.mxu0 %v447
    %505 = vmatprep.subr.bf16.mxu0 %v452
    %506 = vmatpush1.bf16.msra.mxu0 %v451
    %507 = vmatprep.subr.bf16.mxu0 %v456
    %508 = vmatpush1.bf16.msra.mxu0 %v455
    %509 = vmatprep.subr.bf16.mxu0 %v460
    %510 = vmatpush1.bf16.msra.mxu0 %v459
    %511 = vmatprep.subr.bf16.mxu0 %v464
    %512 = vmatpush1.bf16.msra.mxu0 %v463
    %513 = vmatprep.subr.bf16.mxu0 %v468
    %514 = vmatpush1.bf16.msra.mxu0 %v467
    %515 = vmatprep.subr.bf16.mxu0 %v472
    %516 = vmatpush1.bf16.msra.mxu0 %v471
    %517 = vmatprep.subr.bf16.mxu0 %v476
    %518 = vmatpush1.bf16.msra.mxu0 %v475
    %519 = vmatprep.subr.bf16.mxu0 %v480
    %520 = vmatpush1.bf16.msra.mxu0 %v479
    %521 = vmatprep.subr.bf16.mxu0 %v484
    %522 = vmatpush1.bf16.msra.mxu0 %v483
    %523 = vmatprep.subr.bf16.mxu0 %v488
    %524 = vmatpush1.bf16.msra.mxu0 %v487
    %525 = vmatprep.subr.bf16.mxu0 %v492
    %526 = vmatpush1.bf16.msra.mxu0 %v491
    %527 = vmatprep.mubr.bf16.mxu0 %v398
    %528 = vmatmul.mubr.bf16.gmra.mrb[0].mxu0 %v397
    %v529 = vpop.f32.mrb[0].mxu0
    %v530 = vadd.f32 0.0, %v529
    %v531 = vpop.f32.mrb[0].mxu0
    %v532 = vadd.f32 0.0, %v531
    %v533 = vpop.f32.mrb[0].mxu0
    %v534 = vpop.f32.mrb[0].mxu0
    %535 = vdwg.mxu0
    %536 = vmatprep.subr.bf16.mxu0 %v434
    %537 = vmatpush1.bf16.msra.mxu0 %v433
    %538 = vmatprep.subr.bf16.mxu0 %v438
    %539 = vmatpush1.bf16.msra.mxu0 %v437
    %540 = vmatprep.subr.bf16.mxu0 %v442
    %541 = vmatpush1.bf16.msra.mxu0 %v441
    %542 = vmatprep.subr.bf16.mxu0 %v446
    %543 = vmatpush1.bf16.msra.mxu0 %v445
    %544 = vmatprep.subr.bf16.mxu0 %v450
    %545 = vmatpush1.bf16.msra.mxu0 %v449
    %546 = vmatprep.subr.bf16.mxu0 %v454
    %547 = vmatpush1.bf16.msra.mxu0 %v453
    %548 = vmatprep.subr.bf16.mxu0 %v458
    %549 = vmatpush1.bf16.msra.mxu0 %v457
    %550 = vmatprep.subr.bf16.mxu0 %v462
    %551 = vmatpush1.bf16.msra.mxu0 %v461
    %552 = vmatprep.subr.bf16.mxu0 %v466
    %553 = vmatpush1.bf16.msra.mxu0 %v465
    %554 = vmatprep.subr.bf16.mxu0 %v470
    %555 = vmatpush1.bf16.msra.mxu0 %v469
    %556 = vmatprep.subr.bf16.mxu0 %v474
    %557 = vmatpush1.bf16.msra.mxu0 %v473
    %558 = vmatprep.subr.bf16.mxu0 %v478
    %559 = vmatpush1.bf16.msra.mxu0 %v477
    %560 = vmatprep.subr.bf16.mxu0 %v482
    %561 = vmatpush1.bf16.msra.mxu0 %v481
    %562 = vmatprep.subr.bf16.mxu0 %v486
    %563 = vmatpush1.bf16.msra.mxu0 %v485
    %564 = vmatprep.subr.bf16.mxu0 %v490
    %565 = vmatpush1.bf16.msra.mxu0 %v489
    %566 = vmatprep.subr.bf16.mxu0 %v494
    %567 = vmatpush1.bf16.msra.mxu0 %v493
    %568 = vmatprep.mubr.bf16.mxu0 %v398
    %569 = vmatmul.mubr.bf16.gmra.mrb[0].mxu0 %v397
    %v570 = vpop.f32.mrb[0].mxu0
    %v571 = vadd.f32 0.0, %v570
    %v572 = vpop.f32.mrb[0].mxu0
    %v573 = vadd.f32 0.0, %v572
    %v574 = vpop.f32.mrb[0].mxu0
    %v575 = vpop.f32.mrb[0].mxu0
    %576 = vdwg.mxu0
    %v577 = vld [vmem:[%s7] sm:$0xf]
    %v578 = vld [vmem:[%s8] sm:$0xf]
    %v579 = vrot.slane %v530, 4
    %v580 = vadd.f32 %v530, %v579
    %v581 = vrot.slane %v580, 2
    %v582 = vadd.f32 %v580, %v581
    %v583 = vrot.slane %v582, 1
    %v584 = vadd.f32 %v582, %v583
    %v585 = vrot.slane %v532, 4
    %v586 = vadd.f32 %v532, %v585
    %v587 = vrot.slane %v586, 2
    %v588 = vadd.f32 %v586, %v587
    %v589 = vrot.slane %v588, 1
    %v590 = vadd.f32 %v588, %v589
    %v591 = vrot.slane %v571, 4
    %v592 = vadd.f32 %v571, %v591
    %v593 = vrot.slane %v592, 2
    %v594 = vadd.f32 %v592, %v593
    %v595 = vrot.slane %v594, 1
    %v596 = vadd.f32 %v594, %v595
    %v597 = vrot.slane %v573, 4
    %v598 = vadd.f32 %v573, %v597
    %v599 = vrot.slane %v598, 2
    %v600 = vadd.f32 %v598, %v599
    %v601 = vrot.slane %v600, 1
    %v602 = vadd.f32 %v600, %v601
    %v603 = vmul.f32 %v584, 0.125
    %v604 = vmul.f32 %v590, 0.125
    %v605 = vmul.f32 %v596, 0.125
    %v606 = vmul.f32 %v602, 0.125
    %v607 = vmul.f32 %v530, %v530
    %v608 = vmul.f32 %v532, %v532
    %v609 = vmul.f32 %v571, %v571
    %v610 = vmul.f32 %v573, %v573
    %v611 = vrot.slane %v607, 4
    %v612 = vadd.f32 %v607, %v611
    %v613 = vrot.slane %v612, 2
    %v614 = vadd.f32 %v612, %v613
    %v615 = vrot.slane %v614, 1
    %v616 = vadd.f32 %v614, %v615
    %v617 = vrot.slane %v608, 4
    %v618 = vadd.f32 %v608, %v617
    %v619 = vrot.slane %v618, 2
    %v620 = vadd.f32 %v618, %v619
    %v621 = vrot.slane %v620, 1
    %v622 = vadd.f32 %v620, %v621
    %v623 = vrot.slane %v609, 4
    %v624 = vadd.f32 %v609, %v623
    %v625 = vrot.slane %v624, 2
    %v626 = vadd.f32 %v624, %v625
    %v627 = vrot.slane %v626, 1
    %v628 = vadd.f32 %v626, %v627
    %v629 = vrot.slane %v610, 4
    %v630 = vadd.f32 %v610, %v629
    %v631 = vrot.slane %v630, 2
    %v632 = vadd.f32 %v630, %v631
    %v633 = vrot.slane %v632, 1
    %v634 = vadd.f32 %v632, %v633
    %v635 = vmul.f32 %v616, 0.125
    %v636 = vmul.f32 %v622, 0.125
    %v637 = vmul.f32 %v628, 0.125
    %v638 = vmul.f32 %v634, 0.125
    %v639 = vmul.f32 %v603, %v603
    %v640 = vmul.f32 %v604, %v604
    %v641 = vmul.f32 %v605, %v605
    %v642 = vmul.f32 %v606, %v606
    %v643 = vsub.f32 %v635, %v639
    %v644 = vsub.f32 %v636, %v640
    %v645 = vsub.f32 %v637, %v641
    %v646 = vsub.f32 %v638, %v642
    %v647 = vmax.f32 %v643, 0.0
    %v648 = vmax.f32 %v644, 0.0
    %v649 = vmax.f32 %v645, 0.0
    %v650 = vmax.f32 %v646, 0.0
    %v651 = vadd.f32 %v647, 1e-05
    %v652 = vadd.f32 %v648, 1e-05
    %v653 = vadd.f32 %v649, 1e-05
    %v654 = vadd.f32 %v650, 1e-05
    %v655 = vrsqrt.pop %v651
    %v656 = vrsqrt.pop %v652
    %v657 = vrsqrt.pop %v653
    %v658 = vrsqrt.pop %v654
    %v663 = vcombine.low %v655, %v656
    %v664 = vcombine.low %v657, %v658
    %v666 = vunpack.c.l.s4 1966171168
    %v667 = vunpack.c.0.s8 %v666
    %v668 = vlaneseq
    %v669 = vshrl.u32 %v668, 7
    %v670 = vsub.s32 %v667, %v669
    %v671 = vrot.slane %v663, %v670
    %v673 = vunpack.c.l.s4 1966171168
    %v674 = vunpack.c.0.s8 %v673
    %v675 = vlaneseq
    %v676 = vshrl.u32 %v675, 7
    %v677 = vsub.s32 %v674, %v676
    %v678 = vrot.slane %v664, %v677
    %v679 = vcombine.low %v671, %v678
    %v681 = vunpack.c.l.s4 1966171168
    %v682 = vunpack.c.0.s8 %v681
    %v683 = vlaneseq
    %v684 = vshrl.u32 %v683, 7
    %v685 = vsub.s32 %v682, %v684
    %v686 = vrot.slane %v679, %v685
    %v688 = vmul.f32 %v577, %v686
    %v690 = vlaneseq
    %v691 = vshrl.u32 %v690, 7
    %v692 = vsub.s32 0, %v691
    %v693 = vrot.slane %v688, %v692
    %v694 = vlaneseq
    %v695 = vshrl.u32 %v694, 7
    %v696 = vsub.s32 1, %v695
    %v697 = vrot.slane %v688, %v696
    %v698 = vlaneseq
    %v699 = vshrl.u32 %v698, 7
    %v700 = vsub.s32 2, %v699
    %v701 = vrot.slane %v688, %v700
    %v702 = vlaneseq
    %v703 = vshrl.u32 %v702, 7
    %v704 = vsub.s32 3, %v703
    %v705 = vrot.slane %v688, %v704
    %v710 = vmul.f32 %v603, %v693
    %v711 = vmul.f32 %v604, %v697
    %v712 = vmul.f32 %v605, %v701
    %v713 = vmul.f32 %v606, %v705
    %v718 = vcombine.low %v710, %v711
    %v719 = vcombine.low %v712, %v713
    %v721 = vunpack.c.l.s4 1966171168
    %v722 = vunpack.c.0.s8 %v721
    %v723 = vlaneseq
    %v724 = vshrl.u32 %v723, 7
    %v725 = vsub.s32 %v722, %v724
    %v726 = vrot.slane %v718, %v725
    %v728 = vunpack.c.l.s4 1966171168
    %v729 = vunpack.c.0.s8 %v728
    %v730 = vlaneseq
    %v731 = vshrl.u32 %v730, 7
    %v732 = vsub.s32 %v729, %v731
    %v733 = vrot.slane %v719, %v732
    %v734 = vcombine.low %v726, %v733
    %v736 = vunpack.c.l.s4 1966171168
    %v737 = vunpack.c.0.s8 %v736
    %v738 = vlaneseq
    %v739 = vshrl.u32 %v738, 7
    %v740 = vsub.s32 %v737, %v739
    %v741 = vrot.slane %v734, %v740
    %v743 = vsub.f32 %v578, %v741
    %v744 = vmul.f32 %v530, %v693
    %v745 = vmul.f32 %v532, %v697
    %v746 = vmul.f32 %v571, %v701
    %v747 = vmul.f32 %v573, %v705
    %v749 = vlaneseq
    %v750 = vshrl.u32 %v749, 7
    %v751 = vsub.s32 0, %v750
    %v752 = vrot.slane %v743, %v751
    %v753 = vlaneseq
    %v754 = vshrl.u32 %v753, 7
    %v755 = vsub.s32 1, %v754
    %v756 = vrot.slane %v743, %v755
    %v757 = vlaneseq
    %v758 = vshrl.u32 %v757, 7
    %v759 = vsub.s32 2, %v758
    %v760 = vrot.slane %v743, %v759
    %v761 = vlaneseq
    %v762 = vshrl.u32 %v761, 7
    %v763 = vsub.s32 3, %v762
    %v764 = vrot.slane %v743, %v763
    %v769 = vadd.f32 %v744, %v752
    %v770 = vadd.f32 %v745, %v756
    %v771 = vadd.f32 %v746, %v760
    %v772 = vadd.f32 %v747, %v764
    %vm773 = vcmp.gt.f32.partialorder %v769, 0.0
    %vm774 = vcmp.gt.f32.partialorder %v770, 0.0
    %vm775 = vcmp.gt.f32.partialorder %v771, 0.0
    %vm776 = vcmp.gt.f32.partialorder %v772, 0.0
    %v777 = vmul.f32 %v769, 0.2
    %v778 = vmul.f32 %v770, 0.2
    %v779 = vmul.f32 %v771, 0.2
    %v780 = vmul.f32 %v772, 0.2
    %v781 = vsel %vm773, %v769, %v777
    %v782 = vsel %vm774, %v770, %v778
    %v783 = vsel %vm775, %v771, %v779
    %v784 = vsel %vm776, %v772, %v780
    %v785 = vpack.c.bf16 %v781, %v781
    %v786 = vpack.c.bf16 %v782, %v782
    %v787 = vpack.c.bf16 %v783, %v783
    %v788 = vpack.c.bf16 %v784, %v784
    %v789 = vld [vmem:[%s9] sm:$0xff]
    %v790 = vld [vmem:[%s9 + $0x8] sm:$0xff]
    %v791 = vld [vmem:[%s9 + $0x10] sm:$0xff]
    %v792 = vld [vmem:[%s9 + $0x18] sm:$0xff]
    %v793 = vld [vmem:[%s9 + $0x20] sm:$0xff]
    %v794 = vld [vmem:[%s9 + $0x28] sm:$0xff]
    %v795 = vld [vmem:[%s9 + $0x30] sm:$0xff]
    %v796 = vld [vmem:[%s9 + $0x38] sm:$0xff]
    %v797 = vld [vmem:[%s9 + $0x40] sm:$0xff]
    %v798 = vld [vmem:[%s9 + $0x48] sm:$0xff]
    %v799 = vld [vmem:[%s9 + $0x50] sm:$0xff]
    %v800 = vld [vmem:[%s9 + $0x58] sm:$0xff]
    %v801 = vld [vmem:[%s9 + $0x60] sm:$0xff]
    %v802 = vld [vmem:[%s9 + $0x68] sm:$0xff]
    %v803 = vld [vmem:[%s9 + $0x70] sm:$0xff]
    %v804 = vld [vmem:[%s9 + $0x78] sm:$0xff]
    %v805 = vld [vmem:[%s9 + $0x80] sm:$0xff]
    %v806 = vld [vmem:[%s9 + $0x88] sm:$0xff]
    %v807 = vld [vmem:[%s9 + $0x90] sm:$0xff]
    %v808 = vld [vmem:[%s9 + $0x98] sm:$0xff]
    %v809 = vld [vmem:[%s9 + $0xa0] sm:$0xff]
    %v810 = vld [vmem:[%s9 + $0xa8] sm:$0xff]
    %v811 = vld [vmem:[%s9 + $0xb0] sm:$0xff]
    %v812 = vld [vmem:[%s9 + $0xb8] sm:$0xff]
    %v813 = vld [vmem:[%s9 + $0xc0] sm:$0xff]
    %v814 = vld [vmem:[%s9 + $0xc8] sm:$0xff]
    %v815 = vld [vmem:[%s9 + $0xd0] sm:$0xff]
    %v816 = vld [vmem:[%s9 + $0xd8] sm:$0xff]
    %v817 = vld [vmem:[%s9 + $0xe0] sm:$0xff]
    %v818 = vld [vmem:[%s9 + $0xe8] sm:$0xff]
    %v819 = vld [vmem:[%s9 + $0xf0] sm:$0xff]
    %v820 = vld [vmem:[%s9 + $0xf8] sm:$0xff]
    %v821 = vld [vmem:[%s9 + $0x100] sm:$0xff]
    %v822 = vld [vmem:[%s9 + $0x108] sm:$0xff]
    %v823 = vld [vmem:[%s9 + $0x110] sm:$0xff]
    %v824 = vld [vmem:[%s9 + $0x118] sm:$0xff]
    %v825 = vld [vmem:[%s9 + $0x120] sm:$0xff]
    %v826 = vld [vmem:[%s9 + $0x128] sm:$0xff]
    %v827 = vld [vmem:[%s9 + $0x130] sm:$0xff]
    %v828 = vld [vmem:[%s9 + $0x138] sm:$0xff]
    %v829 = vld [vmem:[%s9 + $0x140] sm:$0xff]
    %v830 = vld [vmem:[%s9 + $0x148] sm:$0xff]
    %v831 = vld [vmem:[%s9 + $0x150] sm:$0xff]
    %v832 = vld [vmem:[%s9 + $0x158] sm:$0xff]
    %v833 = vld [vmem:[%s9 + $0x160] sm:$0xff]
    %v834 = vld [vmem:[%s9 + $0x168] sm:$0xff]
    %v835 = vld [vmem:[%s9 + $0x170] sm:$0xff]
    %v836 = vld [vmem:[%s9 + $0x178] sm:$0xff]
    %v837 = vld [vmem:[%s9 + $0x180] sm:$0xff]
    %v838 = vld [vmem:[%s9 + $0x188] sm:$0xff]
    %v839 = vld [vmem:[%s9 + $0x190] sm:$0xff]
    %v840 = vld [vmem:[%s9 + $0x198] sm:$0xff]
    %v841 = vld [vmem:[%s9 + $0x1a0] sm:$0xff]
    %v842 = vld [vmem:[%s9 + $0x1a8] sm:$0xff]
    %v843 = vld [vmem:[%s9 + $0x1b0] sm:$0xff]
    %v844 = vld [vmem:[%s9 + $0x1b8] sm:$0xff]
    %v845 = vld [vmem:[%s9 + $0x1c0] sm:$0xff]
    %v846 = vld [vmem:[%s9 + $0x1c8] sm:$0xff]
    %v847 = vld [vmem:[%s9 + $0x1d0] sm:$0xff]
    %v848 = vld [vmem:[%s9 + $0x1d8] sm:$0xff]
    %v849 = vld [vmem:[%s9 + $0x1e0] sm:$0xff]
    %v850 = vld [vmem:[%s9 + $0x1e8] sm:$0xff]
    %v851 = vld [vmem:[%s9 + $0x1f0] sm:$0xff]
    %v852 = vld [vmem:[%s9 + $0x1f8] sm:$0xff]
    %v853 = vld [vmem:[%s9 + $0x200] sm:$0xff]
    %v854 = vld [vmem:[%s9 + $0x208] sm:$0xff]
    %v855 = vld [vmem:[%s9 + $0x210] sm:$0xff]
    %v856 = vld [vmem:[%s9 + $0x218] sm:$0xff]
    %v857 = vld [vmem:[%s9 + $0x220] sm:$0xff]
    %v858 = vld [vmem:[%s9 + $0x228] sm:$0xff]
    %v859 = vld [vmem:[%s9 + $0x230] sm:$0xff]
    %v860 = vld [vmem:[%s9 + $0x238] sm:$0xff]
    %v861 = vld [vmem:[%s9 + $0x240] sm:$0xff]
    %v862 = vld [vmem:[%s9 + $0x248] sm:$0xff]
    %v863 = vld [vmem:[%s9 + $0x250] sm:$0xff]
    %v864 = vld [vmem:[%s9 + $0x258] sm:$0xff]
    %v865 = vld [vmem:[%s9 + $0x260] sm:$0xff]
    %v866 = vld [vmem:[%s9 + $0x268] sm:$0xff]
    %v867 = vld [vmem:[%s9 + $0x270] sm:$0xff]
    %v868 = vld [vmem:[%s9 + $0x278] sm:$0xff]
    %v869 = vld [vmem:[%s9 + $0x280] sm:$0xff]
    %v870 = vld [vmem:[%s9 + $0x288] sm:$0xff]
    %v871 = vld [vmem:[%s9 + $0x290] sm:$0xff]
    %v872 = vld [vmem:[%s9 + $0x298] sm:$0xff]
    %v873 = vld [vmem:[%s9 + $0x2a0] sm:$0xff]
    %v874 = vld [vmem:[%s9 + $0x2a8] sm:$0xff]
    %v875 = vld [vmem:[%s9 + $0x2b0] sm:$0xff]
    %v876 = vld [vmem:[%s9 + $0x2b8] sm:$0xff]
    %v877 = vld [vmem:[%s9 + $0x2c0] sm:$0xff]
    %v878 = vld [vmem:[%s9 + $0x2c8] sm:$0xff]
    %v879 = vld [vmem:[%s9 + $0x2d0] sm:$0xff]
    %v880 = vld [vmem:[%s9 + $0x2d8] sm:$0xff]
    %v881 = vld [vmem:[%s9 + $0x2e0] sm:$0xff]
    %v882 = vld [vmem:[%s9 + $0x2e8] sm:$0xff]
    %v883 = vld [vmem:[%s9 + $0x2f0] sm:$0xff]
    %v884 = vld [vmem:[%s9 + $0x2f8] sm:$0xff]
    %v885 = vld [vmem:[%s9 + $0x300] sm:$0xff]
    %v886 = vld [vmem:[%s9 + $0x308] sm:$0xff]
    %v887 = vld [vmem:[%s9 + $0x310] sm:$0xff]
    %v888 = vld [vmem:[%s9 + $0x318] sm:$0xff]
    %v889 = vld [vmem:[%s9 + $0x320] sm:$0xff]
    %v890 = vld [vmem:[%s9 + $0x328] sm:$0xff]
    %v891 = vld [vmem:[%s9 + $0x330] sm:$0xff]
    %v892 = vld [vmem:[%s9 + $0x338] sm:$0xff]
    %v893 = vld [vmem:[%s9 + $0x340] sm:$0xff]
    %v894 = vld [vmem:[%s9 + $0x348] sm:$0xff]
    %v895 = vld [vmem:[%s9 + $0x350] sm:$0xff]
    %v896 = vld [vmem:[%s9 + $0x358] sm:$0xff]
    %v897 = vld [vmem:[%s9 + $0x360] sm:$0xff]
    %v898 = vld [vmem:[%s9 + $0x368] sm:$0xff]
    %v899 = vld [vmem:[%s9 + $0x370] sm:$0xff]
    %v900 = vld [vmem:[%s9 + $0x378] sm:$0xff]
    %v901 = vld [vmem:[%s9 + $0x380] sm:$0xff]
    %v902 = vld [vmem:[%s9 + $0x388] sm:$0xff]
    %v903 = vld [vmem:[%s9 + $0x390] sm:$0xff]
    %v904 = vld [vmem:[%s9 + $0x398] sm:$0xff]
    %v905 = vld [vmem:[%s9 + $0x3a0] sm:$0xff]
    %v906 = vld [vmem:[%s9 + $0x3a8] sm:$0xff]
    %v907 = vld [vmem:[%s9 + $0x3b0] sm:$0xff]
    %v908 = vld [vmem:[%s9 + $0x3b8] sm:$0xff]
    %v909 = vld [vmem:[%s9 + $0x3c0] sm:$0xff]
    %v910 = vld [vmem:[%s9 + $0x3c8] sm:$0xff]
    %v911 = vld [vmem:[%s9 + $0x3d0] sm:$0xff]
    %v912 = vld [vmem:[%s9 + $0x3d8] sm:$0xff]
    %v913 = vld [vmem:[%s9 + $0x3e0] sm:$0xff]
    %v914 = vld [vmem:[%s9 + $0x3e8] sm:$0xff]
    %v915 = vld [vmem:[%s9 + $0x3f0] sm:$0xff]
    %v916 = vld [vmem:[%s9 + $0x3f8] sm:$0xff]
    %v917 = vunpack.c.l.s8.bf16 %v789
    %v918 = vunpack.c.l.s8.bf16 %v790
    %v919 = vunpack.c.l.s8.bf16 %v791
    %v920 = vunpack.c.l.s8.bf16 %v792
    %v921 = vunpack.c.l.s8.bf16 %v793
    %v922 = vunpack.c.l.s8.bf16 %v794
    %v923 = vunpack.c.l.s8.bf16 %v795
    %v924 = vunpack.c.l.s8.bf16 %v796
    %v925 = vunpack.c.h.s8.bf16 %v789
    %v926 = vunpack.c.h.s8.bf16 %v790
    %v927 = vunpack.c.h.s8.bf16 %v791
    %v928 = vunpack.c.h.s8.bf16 %v792
    %v929 = vunpack.c.h.s8.bf16 %v793
    %v930 = vunpack.c.h.s8.bf16 %v794
    %v931 = vunpack.c.h.s8.bf16 %v795
    %v932 = vunpack.c.h.s8.bf16 %v796
    %v933 = vunpack.c.l.s8.bf16 %v797
    %v934 = vunpack.c.l.s8.bf16 %v798
    %v935 = vunpack.c.l.s8.bf16 %v799
    %v936 = vunpack.c.l.s8.bf16 %v800
    %v937 = vunpack.c.l.s8.bf16 %v801
    %v938 = vunpack.c.l.s8.bf16 %v802
    %v939 = vunpack.c.l.s8.bf16 %v803
    %v940 = vunpack.c.l.s8.bf16 %v804
    %v941 = vunpack.c.h.s8.bf16 %v797
    %v942 = vunpack.c.h.s8.bf16 %v798
    %v943 = vunpack.c.h.s8.bf16 %v799
    %v944 = vunpack.c.h.s8.bf16 %v800
    %v945 = vunpack.c.h.s8.bf16 %v801
    %v946 = vunpack.c.h.s8.bf16 %v802
    %v947 = vunpack.c.h.s8.bf16 %v803
    %v948 = vunpack.c.h.s8.bf16 %v804
    %v949 = vunpack.c.l.s8.bf16 %v805
    %v950 = vunpack.c.l.s8.bf16 %v806
    %v951 = vunpack.c.l.s8.bf16 %v807
    %v952 = vunpack.c.l.s8.bf16 %v808
    %v953 = vunpack.c.l.s8.bf16 %v809
    %v954 = vunpack.c.l.s8.bf16 %v810
    %v955 = vunpack.c.l.s8.bf16 %v811
    %v956 = vunpack.c.l.s8.bf16 %v812
    %v957 = vunpack.c.h.s8.bf16 %v805
    %v958 = vunpack.c.h.s8.bf16 %v806
    %v959 = vunpack.c.h.s8.bf16 %v807
    %v960 = vunpack.c.h.s8.bf16 %v808
    %v961 = vunpack.c.h.s8.bf16 %v809
    %v962 = vunpack.c.h.s8.bf16 %v810
    %v963 = vunpack.c.h.s8.bf16 %v811
    %v964 = vunpack.c.h.s8.bf16 %v812
    %v965 = vunpack.c.l.s8.bf16 %v813
    %v966 = vunpack.c.l.s8.bf16 %v814
    %v967 = vunpack.c.l.s8.bf16 %v815
    %v968 = vunpack.c.l.s8.bf16 %v816
    %v969 = vunpack.c.l.s8.bf16 %v817
    %v970 = vunpack.c.l.s8.bf16 %v818
    %v971 = vunpack.c.l.s8.bf16 %v819
    %v972 = vunpack.c.l.s8.bf16 %v820
    %v973 = vunpack.c.h.s8.bf16 %v813
    %v974 = vunpack.c.h.s8.bf16 %v814
    %v975 = vunpack.c.h.s8.bf16 %v815
    %v976 = vunpack.c.h.s8.bf16 %v816
    %v977 = vunpack.c.h.s8.bf16 %v817
    %v978 = vunpack.c.h.s8.bf16 %v818
    %v979 = vunpack.c.h.s8.bf16 %v819
    %v980 = vunpack.c.h.s8.bf16 %v820
    %v981 = vunpack.c.l.s8.bf16 %v821
    %v982 = vunpack.c.l.s8.bf16 %v822
    %v983 = vunpack.c.l.s8.bf16 %v823
    %v984 = vunpack.c.l.s8.bf16 %v824
    %v985 = vunpack.c.l.s8.bf16 %v825
    %v986 = vunpack.c.l.s8.bf16 %v826
    %v987 = vunpack.c.l.s8.bf16 %v827
    %v988 = vunpack.c.l.s8.bf16 %v828
    %v989 = vunpack.c.h.s8.bf16 %v821
    %v990 = vunpack.c.h.s8.bf16 %v822
    %v991 = vunpack.c.h.s8.bf16 %v823
    %v992 = vunpack.c.h.s8.bf16 %v824
    %v993 = vunpack.c.h.s8.bf16 %v825
    %v994 = vunpack.c.h.s8.bf16 %v826
    %v995 = vunpack.c.h.s8.bf16 %v827
    %v996 = vunpack.c.h.s8.bf16 %v828
    %v997 = vunpack.c.l.s8.bf16 %v829
    %v998 = vunpack.c.l.s8.bf16 %v830
    %v999 = vunpack.c.l.s8.bf16 %v831
    %v1000 = vunpack.c.l.s8.bf16 %v832
    %v1001 = vunpack.c.l.s8.bf16 %v833
    %v1002 = vunpack.c.l.s8.bf16 %v834
    %v1003 = vunpack.c.l.s8.bf16 %v835
    %v1004 = vunpack.c.l.s8.bf16 %v836
    %v1005 = vunpack.c.h.s8.bf16 %v829
    %v1006 = vunpack.c.h.s8.bf16 %v830
    %v1007 = vunpack.c.h.s8.bf16 %v831
    %v1008 = vunpack.c.h.s8.bf16 %v832
    %v1009 = vunpack.c.h.s8.bf16 %v833
    %v1010 = vunpack.c.h.s8.bf16 %v834
    %v1011 = vunpack.c.h.s8.bf16 %v835
    %v1012 = vunpack.c.h.s8.bf16 %v836
    %v1013 = vunpack.c.l.s8.bf16 %v837
    %v1014 = vunpack.c.l.s8.bf16 %v838
    %v1015 = vunpack.c.l.s8.bf16 %v839
    %v1016 = vunpack.c.l.s8.bf16 %v840
    %v1017 = vunpack.c.l.s8.bf16 %v841
    %v1018 = vunpack.c.l.s8.bf16 %v842
    %v1019 = vunpack.c.l.s8.bf16 %v843
    %v1020 = vunpack.c.l.s8.bf16 %v844
    %v1021 = vunpack.c.h.s8.bf16 %v837
    %v1022 = vunpack.c.h.s8.bf16 %v838
    %v1023 = vunpack.c.h.s8.bf16 %v839
    %v1024 = vunpack.c.h.s8.bf16 %v840
    %v1025 = vunpack.c.h.s8.bf16 %v841
    %v1026 = vunpack.c.h.s8.bf16 %v842
    %v1027 = vunpack.c.h.s8.bf16 %v843
    %v1028 = vunpack.c.h.s8.bf16 %v844
    %v1029 = vunpack.c.l.s8.bf16 %v845
    %v1030 = vunpack.c.l.s8.bf16 %v846
    %v1031 = vunpack.c.l.s8.bf16 %v847
    %v1032 = vunpack.c.l.s8.bf16 %v848
    %v1033 = vunpack.c.l.s8.bf16 %v849
    %v1034 = vunpack.c.l.s8.bf16 %v850
    %v1035 = vunpack.c.l.s8.bf16 %v851
    %v1036 = vunpack.c.l.s8.bf16 %v852
    %v1037 = vunpack.c.h.s8.bf16 %v845
    %v1038 = vunpack.c.h.s8.bf16 %v846
    %v1039 = vunpack.c.h.s8.bf16 %v847
    %v1040 = vunpack.c.h.s8.bf16 %v848
    %v1041 = vunpack.c.h.s8.bf16 %v849
    %v1042 = vunpack.c.h.s8.bf16 %v850
    %v1043 = vunpack.c.h.s8.bf16 %v851
    %v1044 = vunpack.c.h.s8.bf16 %v852
    %v1045 = vunpack.c.l.s8.bf16 %v853
    %v1046 = vunpack.c.l.s8.bf16 %v854
    %v1047 = vunpack.c.l.s8.bf16 %v855
    %v1048 = vunpack.c.l.s8.bf16 %v856
    %v1049 = vunpack.c.l.s8.bf16 %v857
    %v1050 = vunpack.c.l.s8.bf16 %v858
    %v1051 = vunpack.c.l.s8.bf16 %v859
    %v1052 = vunpack.c.l.s8.bf16 %v860
    %v1053 = vunpack.c.h.s8.bf16 %v853
    %v1054 = vunpack.c.h.s8.bf16 %v854
    %v1055 = vunpack.c.h.s8.bf16 %v855
    %v1056 = vunpack.c.h.s8.bf16 %v856
    %v1057 = vunpack.c.h.s8.bf16 %v857
    %v1058 = vunpack.c.h.s8.bf16 %v858
    %v1059 = vunpack.c.h.s8.bf16 %v859
    %v1060 = vunpack.c.h.s8.bf16 %v860
    %v1061 = vunpack.c.l.s8.bf16 %v861
    %v1062 = vunpack.c.l.s8.bf16 %v862
    %v1063 = vunpack.c.l.s8.bf16 %v863
    %v1064 = vunpack.c.l.s8.bf16 %v864
    %v1065 = vunpack.c.l.s8.bf16 %v865
    %v1066 = vunpack.c.l.s8.bf16 %v866
    %v1067 = vunpack.c.l.s8.bf16 %v867
    %v1068 = vunpack.c.l.s8.bf16 %v868
    %v1069 = vunpack.c.h.s8.bf16 %v861
    %v1070 = vunpack.c.h.s8.bf16 %v862
    %v1071 = vunpack.c.h.s8.bf16 %v863
    %v1072 = vunpack.c.h.s8.bf16 %v864
    %v1073 = vunpack.c.h.s8.bf16 %v865
    %v1074 = vunpack.c.h.s8.bf16 %v866
    %v1075 = vunpack.c.h.s8.bf16 %v867
    %v1076 = vunpack.c.h.s8.bf16 %v868
    %v1077 = vunpack.c.l.s8.bf16 %v869
    %v1078 = vunpack.c.l.s8.bf16 %v870
    %v1079 = vunpack.c.l.s8.bf16 %v871
    %v1080 = vunpack.c.l.s8.bf16 %v872
    %v1081 = vunpack.c.l.s8.bf16 %v873
    %v1082 = vunpack.c.l.s8.bf16 %v874
    %v1083 = vunpack.c.l.s8.bf16 %v875
    %v1084 = vunpack.c.l.s8.bf16 %v876
    %v1085 = vunpack.c.h.s8.bf16 %v869
    %v1086 = vunpack.c.h.s8.bf16 %v870
    %v1087 = vunpack.c.h.s8.bf16 %v871
    %v1088 = vunpack.c.h.s8.bf16 %v872
    %v1089 = vunpack.c.h.s8.bf16 %v873
    %v1090 = vunpack.c.h.s8.bf16 %v874
    %v1091 = vunpack.c.h.s8.bf16 %v875
    %v1092 = vunpack.c.h.s8.bf16 %v876
    %v1093 = vunpack.c.l.s8.bf16 %v877
    %v1094 = vunpack.c.l.s8.bf16 %v878
    %v1095 = vunpack.c.l.s8.bf16 %v879
    %v1096 = vunpack.c.l.s8.bf16 %v880
    %v1097 = vunpack.c.l.s8.bf16 %v881
    %v1098 = vunpack.c.l.s8.bf16 %v882
    %v1099 = vunpack.c.l.s8.bf16 %v883
    %v1100 = vunpack.c.l.s8.bf16 %v884
    %v1101 = vunpack.c.h.s8.bf16 %v877
    %v1102 = vunpack.c.h.s8.bf16 %v878
    %v1103 = vunpack.c.h.s8.bf16 %v879
    %v1104 = vunpack.c.h.s8.bf16 %v880
    %v1105 = vunpack.c.h.s8.bf16 %v881
    %v1106 = vunpack.c.h.s8.bf16 %v882
    %v1107 = vunpack.c.h.s8.bf16 %v883
    %v1108 = vunpack.c.h.s8.bf16 %v884
    %v1109 = vunpack.c.l.s8.bf16 %v885
    %v1110 = vunpack.c.l.s8.bf16 %v886
    %v1111 = vunpack.c.l.s8.bf16 %v887
    %v1112 = vunpack.c.l.s8.bf16 %v888
    %v1113 = vunpack.c.l.s8.bf16 %v889
    %v1114 = vunpack.c.l.s8.bf16 %v890
    %v1115 = vunpack.c.l.s8.bf16 %v891
    %v1116 = vunpack.c.l.s8.bf16 %v892
    %v1117 = vunpack.c.h.s8.bf16 %v885
    %v1118 = vunpack.c.h.s8.bf16 %v886
    %v1119 = vunpack.c.h.s8.bf16 %v887
    %v1120 = vunpack.c.h.s8.bf16 %v888
    %v1121 = vunpack.c.h.s8.bf16 %v889
    %v1122 = vunpack.c.h.s8.bf16 %v890
    %v1123 = vunpack.c.h.s8.bf16 %v891
    %v1124 = vunpack.c.h.s8.bf16 %v892
    %v1125 = vunpack.c.l.s8.bf16 %v893
    %v1126 = vunpack.c.l.s8.bf16 %v894
    %v1127 = vunpack.c.l.s8.bf16 %v895
    %v1128 = vunpack.c.l.s8.bf16 %v896
    %v1129 = vunpack.c.l.s8.bf16 %v897
    %v1130 = vunpack.c.l.s8.bf16 %v898
    %v1131 = vunpack.c.l.s8.bf16 %v899
    %v1132 = vunpack.c.l.s8.bf16 %v900
    %v1133 = vunpack.c.h.s8.bf16 %v893
    %v1134 = vunpack.c.h.s8.bf16 %v894
    %v1135 = vunpack.c.h.s8.bf16 %v895
    %v1136 = vunpack.c.h.s8.bf16 %v896
    %v1137 = vunpack.c.h.s8.bf16 %v897
    %v1138 = vunpack.c.h.s8.bf16 %v898
    %v1139 = vunpack.c.h.s8.bf16 %v899
    %v1140 = vunpack.c.h.s8.bf16 %v900
    %v1141 = vunpack.c.l.s8.bf16 %v901
    %v1142 = vunpack.c.l.s8.bf16 %v902
    %v1143 = vunpack.c.l.s8.bf16 %v903
    %v1144 = vunpack.c.l.s8.bf16 %v904
    %v1145 = vunpack.c.l.s8.bf16 %v905
    %v1146 = vunpack.c.l.s8.bf16 %v906
    %v1147 = vunpack.c.l.s8.bf16 %v907
    %v1148 = vunpack.c.l.s8.bf16 %v908
    %v1149 = vunpack.c.h.s8.bf16 %v901
    %v1150 = vunpack.c.h.s8.bf16 %v902
    %v1151 = vunpack.c.h.s8.bf16 %v903
    %v1152 = vunpack.c.h.s8.bf16 %v904
    %v1153 = vunpack.c.h.s8.bf16 %v905
    %v1154 = vunpack.c.h.s8.bf16 %v906
    %v1155 = vunpack.c.h.s8.bf16 %v907
    %v1156 = vunpack.c.h.s8.bf16 %v908
    %v1157 = vunpack.c.l.s8.bf16 %v909
    %v1158 = vunpack.c.l.s8.bf16 %v910
    %v1159 = vunpack.c.l.s8.bf16 %v911
    %v1160 = vunpack.c.l.s8.bf16 %v912
    %v1161 = vunpack.c.l.s8.bf16 %v913
    %v1162 = vunpack.c.l.s8.bf16 %v914
    %v1163 = vunpack.c.l.s8.bf16 %v915
    %v1164 = vunpack.c.l.s8.bf16 %v916
    %v1165 = vunpack.c.h.s8.bf16 %v909
    %v1166 = vunpack.c.h.s8.bf16 %v910
    %v1167 = vunpack.c.h.s8.bf16 %v911
    %v1168 = vunpack.c.h.s8.bf16 %v912
    %v1169 = vunpack.c.h.s8.bf16 %v913
    %v1170 = vunpack.c.h.s8.bf16 %v914
    %v1171 = vunpack.c.h.s8.bf16 %v915
    %v1172 = vunpack.c.h.s8.bf16 %v916
    %1173 = vmatprep.subr.bf16.mxu0 %v918
    %1174 = vmatpush1.bf16.msra.mxu0 %v917
    %1175 = vmatprep.subr.bf16.mxu0 %v926
    %1176 = vmatpush1.bf16.msra.mxu0 %v925
    %1177 = vmatprep.subr.bf16.mxu0 %v934
    %1178 = vmatpush1.bf16.msra.mxu0 %v933
    %1179 = vmatprep.subr.bf16.mxu0 %v942
    %1180 = vmatpush1.bf16.msra.mxu0 %v941
    %1181 = vmatprep.subr.bf16.mxu0 %v950
    %1182 = vmatpush1.bf16.msra.mxu0 %v949
    %1183 = vmatprep.subr.bf16.mxu0 %v958
    %1184 = vmatpush1.bf16.msra.mxu0 %v957
    %1185 = vmatprep.subr.bf16.mxu0 %v966
    %1186 = vmatpush1.bf16.msra.mxu0 %v965
    %1187 = vmatprep.subr.bf16.mxu0 %v974
    %1188 = vmatpush1.bf16.msra.mxu0 %v973
    %1189 = vmatprep.subr.bf16.mxu0 %v982
    %1190 = vmatpush1.bf16.msra.mxu0 %v981
    %1191 = vmatprep.subr.bf16.mxu0 %v990
    %1192 = vmatpush1.bf16.msra.mxu0 %v989
    %1193 = vmatprep.subr.bf16.mxu0 %v998
    %1194 = vmatpush1.bf16.msra.mxu0 %v997
    %1195 = vmatprep.subr.bf16.mxu0 %v1006
    %1196 = vmatpush1.bf16.msra.mxu0 %v1005
    %1197 = vmatprep.subr.bf16.mxu0 %v1014
    %1198 = vmatpush1.bf16.msra.mxu0 %v1013
    %1199 = vmatprep.subr.bf16.mxu0 %v1022
    %1200 = vmatpush1.bf16.msra.mxu0 %v1021
    %1201 = vmatprep.subr.bf16.mxu0 %v1030
    %1202 = vmatpush1.bf16.msra.mxu0 %v1029
    %1203 = vmatprep.subr.bf16.mxu0 %v1038
    %1204 = vmatpush1.bf16.msra.mxu0 %v1037
    %1205 = vmatprep.mubr.bf16.mxu0 %v786
    %1206 = vmatmul.mubr.bf16.gmra.mrb[0].mxu0 %v785
    %v1207 = vpop.f32.mrb[0].mxu0
    %v1208 = vadd.f32 0.0, %v1207
    %v1209 = vpop.f32.mrb[0].mxu0
    %v1210 = vadd.f32 0.0, %v1209
    %v1211 = vpop.f32.mrb[0].mxu0
    %v1212 = vpop.f32.mrb[0].mxu0
    %1213 = vdwg.mxu0
    %1214 = vmatprep.subr.bf16.mxu0 %v1046
    %1215 = vmatpush1.bf16.msra.mxu0 %v1045
    %1216 = vmatprep.subr.bf16.mxu0 %v1054
    %1217 = vmatpush1.bf16.msra.mxu0 %v1053
    %1218 = vmatprep.subr.bf16.mxu0 %v1062
    %1219 = vmatpush1.bf16.msra.mxu0 %v1061
    %1220 = vmatprep.subr.bf16.mxu0 %v1070
    %1221 = vmatpush1.bf16.msra.mxu0 %v1069
    %1222 = vmatprep.subr.bf16.mxu0 %v1078
    %1223 = vmatpush1.bf16.msra.mxu0 %v1077
    %1224 = vmatprep.subr.bf16.mxu0 %v1086
    %1225 = vmatpush1.bf16.msra.mxu0 %v1085
    %1226 = vmatprep.subr.bf16.mxu0 %v1094
    %1227 = vmatpush1.bf16.msra.mxu0 %v1093
    %1228 = vmatprep.subr.bf16.mxu0 %v1102
    %1229 = vmatpush1.bf16.msra.mxu0 %v1101
    %1230 = vmatprep.subr.bf16.mxu0 %v1110
    %1231 = vmatpush1.bf16.msra.mxu0 %v1109
    %1232 = vmatprep.subr.bf16.mxu0 %v1118
    %1233 = vmatpush1.bf16.msra.mxu0 %v1117
    %1234 = vmatprep.subr.bf16.mxu0 %v1126
    %1235 = vmatpush1.bf16.msra.mxu0 %v1125
    %1236 = vmatprep.subr.bf16.mxu0 %v1134
    %1237 = vmatpush1.bf16.msra.mxu0 %v1133
    %1238 = vmatprep.subr.bf16.mxu0 %v1142
    %1239 = vmatpush1.bf16.msra.mxu0 %v1141
    %1240 = vmatprep.subr.bf16.mxu0 %v1150
    %1241 = vmatpush1.bf16.msra.mxu0 %v1149
    %1242 = vmatprep.subr.bf16.mxu0 %v1158
    %1243 = vmatpush1.bf16.msra.mxu0 %v1157
    %1244 = vmatprep.subr.bf16.mxu0 %v1166
    %1245 = vmatpush1.bf16.msra.mxu0 %v1165
    %1246 = vmatprep.mubr.bf16.mxu0 %v788
    %1247 = vmatmul.mubr.bf16.gmra.mrb[0].mxu0 %v787
    %v1248 = vpop.f32.mrb[0].mxu0
    %v1249 = vadd.f32 %v1208, %v1248
    %v1250 = vpop.f32.mrb[0].mxu0
    %v1251 = vadd.f32 %v1210, %v1250
    %v1252 = vpop.f32.mrb[0].mxu0
    %v1253 = vpop.f32.mrb[0].mxu0
    %1254 = vdwg.mxu0
    %1255 = vmatprep.subr.bf16.mxu0 %v920
    %1256 = vmatpush1.bf16.msra.mxu0 %v919
    %1257 = vmatprep.subr.bf16.mxu0 %v928
    %1258 = vmatpush1.bf16.msra.mxu0 %v927
    %1259 = vmatprep.subr.bf16.mxu0 %v936
    %1260 = vmatpush1.bf16.msra.mxu0 %v935
    %1261 = vmatprep.subr.bf16.mxu0 %v944
    %1262 = vmatpush1.bf16.msra.mxu0 %v943
    %1263 = vmatprep.subr.bf16.mxu0 %v952
    %1264 = vmatpush1.bf16.msra.mxu0 %v951
    %1265 = vmatprep.subr.bf16.mxu0 %v960
    %1266 = vmatpush1.bf16.msra.mxu0 %v959
    %1267 = vmatprep.subr.bf16.mxu0 %v968
    %1268 = vmatpush1.bf16.msra.mxu0 %v967
    %1269 = vmatprep.subr.bf16.mxu0 %v976
    %1270 = vmatpush1.bf16.msra.mxu0 %v975
    %1271 = vmatprep.subr.bf16.mxu0 %v984
    %1272 = vmatpush1.bf16.msra.mxu0 %v983
    %1273 = vmatprep.subr.bf16.mxu0 %v992
    %1274 = vmatpush1.bf16.msra.mxu0 %v991
    %1275 = vmatprep.subr.bf16.mxu0 %v1000
    %1276 = vmatpush1.bf16.msra.mxu0 %v999
    %1277 = vmatprep.subr.bf16.mxu0 %v1008
    %1278 = vmatpush1.bf16.msra.mxu0 %v1007
    %1279 = vmatprep.subr.bf16.mxu0 %v1016
    %1280 = vmatpush1.bf16.msra.mxu0 %v1015
    %1281 = vmatprep.subr.bf16.mxu0 %v1024
    %1282 = vmatpush1.bf16.msra.mxu0 %v1023
    %1283 = vmatprep.subr.bf16.mxu0 %v1032
    %1284 = vmatpush1.bf16.msra.mxu0 %v1031
    %1285 = vmatprep.subr.bf16.mxu0 %v1040
    %1286 = vmatpush1.bf16.msra.mxu0 %v1039
    %1287 = vmatprep.mubr.bf16.mxu0 %v786
    %1288 = vmatmul.mubr.bf16.gmra.mrb[0].mxu0 %v785
    %v1289 = vpop.f32.mrb[0].mxu0
    %v1290 = vadd.f32 0.0, %v1289
    %v1291 = vpop.f32.mrb[0].mxu0
    %v1292 = vadd.f32 0.0, %v1291
    %v1293 = vpop.f32.mrb[0].mxu0
    %v1294 = vpop.f32.mrb[0].mxu0
    %1295 = vdwg.mxu0
    %1296 = vmatprep.subr.bf16.mxu0 %v1048
    %1297 = vmatpush1.bf16.msra.mxu0 %v1047
    %1298 = vmatprep.subr.bf16.mxu0 %v1056
    %1299 = vmatpush1.bf16.msra.mxu0 %v1055
    %1300 = vmatprep.subr.bf16.mxu0 %v1064
    %1301 = vmatpush1.bf16.msra.mxu0 %v1063
    %1302 = vmatprep.subr.bf16.mxu0 %v1072
    %1303 = vmatpush1.bf16.msra.mxu0 %v1071
    %1304 = vmatprep.subr.bf16.mxu0 %v1080
    %1305 = vmatpush1.bf16.msra.mxu0 %v1079
    %1306 = vmatprep.subr.bf16.mxu0 %v1088
    %1307 = vmatpush1.bf16.msra.mxu0 %v1087
    %1308 = vmatprep.subr.bf16.mxu0 %v1096
    %1309 = vmatpush1.bf16.msra.mxu0 %v1095
    %1310 = vmatprep.subr.bf16.mxu0 %v1104
    %1311 = vmatpush1.bf16.msra.mxu0 %v1103
    %1312 = vmatprep.subr.bf16.mxu0 %v1112
    %1313 = vmatpush1.bf16.msra.mxu0 %v1111
    %1314 = vmatprep.subr.bf16.mxu0 %v1120
    %1315 = vmatpush1.bf16.msra.mxu0 %v1119
    %1316 = vmatprep.subr.bf16.mxu0 %v1128
    %1317 = vmatpush1.bf16.msra.mxu0 %v1127
    %1318 = vmatprep.subr.bf16.mxu0 %v1136
    %1319 = vmatpush1.bf16.msra.mxu0 %v1135
    %1320 = vmatprep.subr.bf16.mxu0 %v1144
    %1321 = vmatpush1.bf16.msra.mxu0 %v1143
    %1322 = vmatprep.subr.bf16.mxu0 %v1152
    %1323 = vmatpush1.bf16.msra.mxu0 %v1151
    %1324 = vmatprep.subr.bf16.mxu0 %v1160
    %1325 = vmatpush1.bf16.msra.mxu0 %v1159
    %1326 = vmatprep.subr.bf16.mxu0 %v1168
    %1327 = vmatpush1.bf16.msra.mxu0 %v1167
    %1328 = vmatprep.mubr.bf16.mxu0 %v788
    %1329 = vmatmul.mubr.bf16.gmra.mrb[0].mxu0 %v787
    %v1330 = vpop.f32.mrb[0].mxu0
    %v1331 = vadd.f32 %v1290, %v1330
    %v1332 = vpop.f32.mrb[0].mxu0
    %v1333 = vadd.f32 %v1292, %v1332
    %v1334 = vpop.f32.mrb[0].mxu0
    %v1335 = vpop.f32.mrb[0].mxu0
    %1336 = vdwg.mxu0
    %1337 = vmatprep.subr.bf16.mxu0 %v922
    %1338 = vmatpush1.bf16.msra.mxu0 %v921
    %1339 = vmatprep.subr.bf16.mxu0 %v930
    %1340 = vmatpush1.bf16.msra.mxu0 %v929
    %1341 = vmatprep.subr.bf16.mxu0 %v938
    %1342 = vmatpush1.bf16.msra.mxu0 %v937
    %1343 = vmatprep.subr.bf16.mxu0 %v946
    %1344 = vmatpush1.bf16.msra.mxu0 %v945
    %1345 = vmatprep.subr.bf16.mxu0 %v954
    %1346 = vmatpush1.bf16.msra.mxu0 %v953
    %1347 = vmatprep.subr.bf16.mxu0 %v962
    %1348 = vmatpush1.bf16.msra.mxu0 %v961
    %1349 = vmatprep.subr.bf16.mxu0 %v970
    %1350 = vmatpush1.bf16.msra.mxu0 %v969
    %1351 = vmatprep.subr.bf16.mxu0 %v978
    %1352 = vmatpush1.bf16.msra.mxu0 %v977
    %1353 = vmatprep.subr.bf16.mxu0 %v986
    %1354 = vmatpush1.bf16.msra.mxu0 %v985
    %1355 = vmatprep.subr.bf16.mxu0 %v994
    %1356 = vmatpush1.bf16.msra.mxu0 %v993
    %1357 = vmatprep.subr.bf16.mxu0 %v1002
    %1358 = vmatpush1.bf16.msra.mxu0 %v1001
    %1359 = vmatprep.subr.bf16.mxu0 %v1010
    %1360 = vmatpush1.bf16.msra.mxu0 %v1009
    %1361 = vmatprep.subr.bf16.mxu0 %v1018
    %1362 = vmatpush1.bf16.msra.mxu0 %v1017
    %1363 = vmatprep.subr.bf16.mxu0 %v1026
    %1364 = vmatpush1.bf16.msra.mxu0 %v1025
    %1365 = vmatprep.subr.bf16.mxu0 %v1034
    %1366 = vmatpush1.bf16.msra.mxu0 %v1033
    %1367 = vmatprep.subr.bf16.mxu0 %v1042
    %1368 = vmatpush1.bf16.msra.mxu0 %v1041
    %1369 = vmatprep.mubr.bf16.mxu0 %v786
    %1370 = vmatmul.mubr.bf16.gmra.mrb[0].mxu0 %v785
    %v1371 = vpop.f32.mrb[0].mxu0
    %v1372 = vadd.f32 0.0, %v1371
    %v1373 = vpop.f32.mrb[0].mxu0
    %v1374 = vadd.f32 0.0, %v1373
    %v1375 = vpop.f32.mrb[0].mxu0
    %v1376 = vpop.f32.mrb[0].mxu0
    %1377 = vdwg.mxu0
    %1378 = vmatprep.subr.bf16.mxu0 %v1050
    %1379 = vmatpush1.bf16.msra.mxu0 %v1049
    %1380 = vmatprep.subr.bf16.mxu0 %v1058
    %1381 = vmatpush1.bf16.msra.mxu0 %v1057
    %1382 = vmatprep.subr.bf16.mxu0 %v1066
    %1383 = vmatpush1.bf16.msra.mxu0 %v1065
    %1384 = vmatprep.subr.bf16.mxu0 %v1074
    %1385 = vmatpush1.bf16.msra.mxu0 %v1073
    %1386 = vmatprep.subr.bf16.mxu0 %v1082
    %1387 = vmatpush1.bf16.msra.mxu0 %v1081
    %1388 = vmatprep.subr.bf16.mxu0 %v1090
    %1389 = vmatpush1.bf16.msra.mxu0 %v1089
    %1390 = vmatprep.subr.bf16.mxu0 %v1098
    %1391 = vmatpush1.bf16.msra.mxu0 %v1097
    %1392 = vmatprep.subr.bf16.mxu0 %v1106
    %1393 = vmatpush1.bf16.msra.mxu0 %v1105
    %1394 = vmatprep.subr.bf16.mxu0 %v1114
    %1395 = vmatpush1.bf16.msra.mxu0 %v1113
    %1396 = vmatprep.subr.bf16.mxu0 %v1122
    %1397 = vmatpush1.bf16.msra.mxu0 %v1121
    %1398 = vmatprep.subr.bf16.mxu0 %v1130
    %1399 = vmatpush1.bf16.msra.mxu0 %v1129
    %1400 = vmatprep.subr.bf16.mxu0 %v1138
    %1401 = vmatpush1.bf16.msra.mxu0 %v1137
    %1402 = vmatprep.subr.bf16.mxu0 %v1146
    %1403 = vmatpush1.bf16.msra.mxu0 %v1145
    %1404 = vmatprep.subr.bf16.mxu0 %v1154
    %1405 = vmatpush1.bf16.msra.mxu0 %v1153
    %1406 = vmatprep.subr.bf16.mxu0 %v1162
    %1407 = vmatpush1.bf16.msra.mxu0 %v1161
    %1408 = vmatprep.subr.bf16.mxu0 %v1170
    %1409 = vmatpush1.bf16.msra.mxu0 %v1169
    %1410 = vmatprep.mubr.bf16.mxu0 %v788
    %1411 = vmatmul.mubr.bf16.gmra.mrb[0].mxu0 %v787
    %v1412 = vpop.f32.mrb[0].mxu0
    %v1413 = vadd.f32 %v1372, %v1412
    %v1414 = vpop.f32.mrb[0].mxu0
    %v1415 = vadd.f32 %v1374, %v1414
    %v1416 = vpop.f32.mrb[0].mxu0
    %v1417 = vpop.f32.mrb[0].mxu0
    %1418 = vdwg.mxu0
    %1419 = vmatprep.subr.bf16.mxu0 %v924
    %1420 = vmatpush1.bf16.msra.mxu0 %v923
    %1421 = vmatprep.subr.bf16.mxu0 %v932
    %1422 = vmatpush1.bf16.msra.mxu0 %v931
    %1423 = vmatprep.subr.bf16.mxu0 %v940
    %1424 = vmatpush1.bf16.msra.mxu0 %v939
    %1425 = vmatprep.subr.bf16.mxu0 %v948
    %1426 = vmatpush1.bf16.msra.mxu0 %v947
    %1427 = vmatprep.subr.bf16.mxu0 %v956
    %1428 = vmatpush1.bf16.msra.mxu0 %v955
    %1429 = vmatprep.subr.bf16.mxu0 %v964
    %1430 = vmatpush1.bf16.msra.mxu0 %v963
    %1431 = vmatprep.subr.bf16.mxu0 %v972
    %1432 = vmatpush1.bf16.msra.mxu0 %v971
    %1433 = vmatprep.subr.bf16.mxu0 %v980
    %1434 = vmatpush1.bf16.msra.mxu0 %v979
    %1435 = vmatprep.subr.bf16.mxu0 %v988
    %1436 = vmatpush1.bf16.msra.mxu0 %v987
    %1437 = vmatprep.subr.bf16.mxu0 %v996
    %1438 = vmatpush1.bf16.msra.mxu0 %v995
    %1439 = vmatprep.subr.bf16.mxu0 %v1004
    %1440 = vmatpush1.bf16.msra.mxu0 %v1003
    %1441 = vmatprep.subr.bf16.mxu0 %v1012
    %1442 = vmatpush1.bf16.msra.mxu0 %v1011
    %1443 = vmatprep.subr.bf16.mxu0 %v1020
    %1444 = vmatpush1.bf16.msra.mxu0 %v1019
    %1445 = vmatprep.subr.bf16.mxu0 %v1028
    %1446 = vmatpush1.bf16.msra.mxu0 %v1027
    %1447 = vmatprep.subr.bf16.mxu0 %v1036
    %1448 = vmatpush1.bf16.msra.mxu0 %v1035
    %1449 = vmatprep.subr.bf16.mxu0 %v1044
    %1450 = vmatpush1.bf16.msra.mxu0 %v1043
    %1451 = vmatprep.mubr.bf16.mxu0 %v786
    %1452 = vmatmul.mubr.bf16.gmra.mrb[0].mxu0 %v785
    %v1453 = vpop.f32.mrb[0].mxu0
    %v1454 = vadd.f32 0.0, %v1453
    %v1455 = vpop.f32.mrb[0].mxu0
    %v1456 = vadd.f32 0.0, %v1455
    %v1457 = vpop.f32.mrb[0].mxu0
    %v1458 = vpop.f32.mrb[0].mxu0
    %1459 = vdwg.mxu0
    %1460 = vmatprep.subr.bf16.mxu0 %v1052
    %1461 = vmatpush1.bf16.msra.mxu0 %v1051
    %1462 = vmatprep.subr.bf16.mxu0 %v1060
    %1463 = vmatpush1.bf16.msra.mxu0 %v1059
    %1464 = vmatprep.subr.bf16.mxu0 %v1068
    %1465 = vmatpush1.bf16.msra.mxu0 %v1067
    %1466 = vmatprep.subr.bf16.mxu0 %v1076
    %1467 = vmatpush1.bf16.msra.mxu0 %v1075
    %1468 = vmatprep.subr.bf16.mxu0 %v1084
    %1469 = vmatpush1.bf16.msra.mxu0 %v1083
    %1470 = vmatprep.subr.bf16.mxu0 %v1092
    %1471 = vmatpush1.bf16.msra.mxu0 %v1091
    %1472 = vmatprep.subr.bf16.mxu0 %v1100
    %1473 = vmatpush1.bf16.msra.mxu0 %v1099
    %1474 = vmatprep.subr.bf16.mxu0 %v1108
    %1475 = vmatpush1.bf16.msra.mxu0 %v1107
    %1476 = vmatprep.subr.bf16.mxu0 %v1116
    %1477 = vmatpush1.bf16.msra.mxu0 %v1115
    %1478 = vmatprep.subr.bf16.mxu0 %v1124
    %1479 = vmatpush1.bf16.msra.mxu0 %v1123
    %1480 = vmatprep.subr.bf16.mxu0 %v1132
    %1481 = vmatpush1.bf16.msra.mxu0 %v1131
    %1482 = vmatprep.subr.bf16.mxu0 %v1140
    %1483 = vmatpush1.bf16.msra.mxu0 %v1139
    %1484 = vmatprep.subr.bf16.mxu0 %v1148
    %1485 = vmatpush1.bf16.msra.mxu0 %v1147
    %1486 = vmatprep.subr.bf16.mxu0 %v1156
    %1487 = vmatpush1.bf16.msra.mxu0 %v1155
    %1488 = vmatprep.subr.bf16.mxu0 %v1164
    %1489 = vmatpush1.bf16.msra.mxu0 %v1163
    %1490 = vmatprep.subr.bf16.mxu0 %v1172
    %1491 = vmatpush1.bf16.msra.mxu0 %v1171
    %1492 = vmatprep.mubr.bf16.mxu0 %v788
    %1493 = vmatmul.mubr.bf16.gmra.mrb[0].mxu0 %v787
    %v1494 = vpop.f32.mrb[0].mxu0
    %v1495 = vadd.f32 %v1454, %v1494
    %v1496 = vpop.f32.mrb[0].mxu0
    %v1497 = vadd.f32 %v1456, %v1496
    %v1498 = vpop.f32.mrb[0].mxu0
    %v1499 = vpop.f32.mrb[0].mxu0
    %1500 = vdwg.mxu0
    %v1501 = vld [vmem:[%s10] sm:$0xff]
    %v1502 = vld [vmem:[%s11] sm:$0xff]
    %v1503 = vrot.slane %v1249, 4
    %v1504 = vadd.f32 %v1249, %v1503
    %v1505 = vrot.slane %v1504, 2
    %v1506 = vadd.f32 %v1504, %v1505
    %v1507 = vrot.slane %v1506, 1
    %v1508 = vadd.f32 %v1506, %v1507
    %v1509 = vrot.slane %v1251, 4
    %v1510 = vadd.f32 %v1251, %v1509
    %v1511 = vrot.slane %v1510, 2
    %v1512 = vadd.f32 %v1510, %v1511
    %v1513 = vrot.slane %v1512, 1
    %v1514 = vadd.f32 %v1512, %v1513
    %v1515 = vrot.slane %v1331, 4
    %v1516 = vadd.f32 %v1331, %v1515
    %v1517 = vrot.slane %v1516, 2
    %v1518 = vadd.f32 %v1516, %v1517
    %v1519 = vrot.slane %v1518, 1
    %v1520 = vadd.f32 %v1518, %v1519
    %v1521 = vrot.slane %v1333, 4
    %v1522 = vadd.f32 %v1333, %v1521
    %v1523 = vrot.slane %v1522, 2
    %v1524 = vadd.f32 %v1522, %v1523
    %v1525 = vrot.slane %v1524, 1
    %v1526 = vadd.f32 %v1524, %v1525
    %v1527 = vrot.slane %v1413, 4
    %v1528 = vadd.f32 %v1413, %v1527
    %v1529 = vrot.slane %v1528, 2
    %v1530 = vadd.f32 %v1528, %v1529
    %v1531 = vrot.slane %v1530, 1
    %v1532 = vadd.f32 %v1530, %v1531
    %v1533 = vrot.slane %v1415, 4
    %v1534 = vadd.f32 %v1415, %v1533
    %v1535 = vrot.slane %v1534, 2
    %v1536 = vadd.f32 %v1534, %v1535
    %v1537 = vrot.slane %v1536, 1
    %v1538 = vadd.f32 %v1536, %v1537
    %v1539 = vrot.slane %v1495, 4
    %v1540 = vadd.f32 %v1495, %v1539
    %v1541 = vrot.slane %v1540, 2
    %v1542 = vadd.f32 %v1540, %v1541
    %v1543 = vrot.slane %v1542, 1
    %v1544 = vadd.f32 %v1542, %v1543
    %v1545 = vrot.slane %v1497, 4
    %v1546 = vadd.f32 %v1497, %v1545
    %v1547 = vrot.slane %v1546, 2
    %v1548 = vadd.f32 %v1546, %v1547
    %v1549 = vrot.slane %v1548, 1
    %v1550 = vadd.f32 %v1548, %v1549
    %v1551 = vmul.f32 %v1508, 0.125
    %v1552 = vmul.f32 %v1514, 0.125
    %v1553 = vmul.f32 %v1520, 0.125
    %v1554 = vmul.f32 %v1526, 0.125
    %v1555 = vmul.f32 %v1532, 0.125
    %v1556 = vmul.f32 %v1538, 0.125
    %v1557 = vmul.f32 %v1544, 0.125
    %v1558 = vmul.f32 %v1550, 0.125
    %v1559 = vmul.f32 %v1249, %v1249
    %v1560 = vmul.f32 %v1251, %v1251
    %v1561 = vmul.f32 %v1331, %v1331
    %v1562 = vmul.f32 %v1333, %v1333
    %v1563 = vmul.f32 %v1413, %v1413
    %v1564 = vmul.f32 %v1415, %v1415
    %v1565 = vmul.f32 %v1495, %v1495
    %v1566 = vmul.f32 %v1497, %v1497
    %v1567 = vrot.slane %v1559, 4
    %v1568 = vadd.f32 %v1559, %v1567
    %v1569 = vrot.slane %v1568, 2
    %v1570 = vadd.f32 %v1568, %v1569
    %v1571 = vrot.slane %v1570, 1
    %v1572 = vadd.f32 %v1570, %v1571
    %v1573 = vrot.slane %v1560, 4
    %v1574 = vadd.f32 %v1560, %v1573
    %v1575 = vrot.slane %v1574, 2
    %v1576 = vadd.f32 %v1574, %v1575
    %v1577 = vrot.slane %v1576, 1
    %v1578 = vadd.f32 %v1576, %v1577
    %v1579 = vrot.slane %v1561, 4
    %v1580 = vadd.f32 %v1561, %v1579
    %v1581 = vrot.slane %v1580, 2
    %v1582 = vadd.f32 %v1580, %v1581
    %v1583 = vrot.slane %v1582, 1
    %v1584 = vadd.f32 %v1582, %v1583
    %v1585 = vrot.slane %v1562, 4
    %v1586 = vadd.f32 %v1562, %v1585
    %v1587 = vrot.slane %v1586, 2
    %v1588 = vadd.f32 %v1586, %v1587
    %v1589 = vrot.slane %v1588, 1
    %v1590 = vadd.f32 %v1588, %v1589
    %v1591 = vrot.slane %v1563, 4
    %v1592 = vadd.f32 %v1563, %v1591
    %v1593 = vrot.slane %v1592, 2
    %v1594 = vadd.f32 %v1592, %v1593
    %v1595 = vrot.slane %v1594, 1
    %v1596 = vadd.f32 %v1594, %v1595
    %v1597 = vrot.slane %v1564, 4
    %v1598 = vadd.f32 %v1564, %v1597
    %v1599 = vrot.slane %v1598, 2
    %v1600 = vadd.f32 %v1598, %v1599
    %v1601 = vrot.slane %v1600, 1
    %v1602 = vadd.f32 %v1600, %v1601
    %v1603 = vrot.slane %v1565, 4
    %v1604 = vadd.f32 %v1565, %v1603
    %v1605 = vrot.slane %v1604, 2
    %v1606 = vadd.f32 %v1604, %v1605
    %v1607 = vrot.slane %v1606, 1
    %v1608 = vadd.f32 %v1606, %v1607
    %v1609 = vrot.slane %v1566, 4
    %v1610 = vadd.f32 %v1566, %v1609
    %v1611 = vrot.slane %v1610, 2
    %v1612 = vadd.f32 %v1610, %v1611
    %v1613 = vrot.slane %v1612, 1
    %v1614 = vadd.f32 %v1612, %v1613
    %v1615 = vmul.f32 %v1572, 0.125
    %v1616 = vmul.f32 %v1578, 0.125
    %v1617 = vmul.f32 %v1584, 0.125
    %v1618 = vmul.f32 %v1590, 0.125
    %v1619 = vmul.f32 %v1596, 0.125
    %v1620 = vmul.f32 %v1602, 0.125
    %v1621 = vmul.f32 %v1608, 0.125
    %v1622 = vmul.f32 %v1614, 0.125
    %v1623 = vmul.f32 %v1551, %v1551
    %v1624 = vmul.f32 %v1552, %v1552
    %v1625 = vmul.f32 %v1553, %v1553
    %v1626 = vmul.f32 %v1554, %v1554
    %v1627 = vmul.f32 %v1555, %v1555
    %v1628 = vmul.f32 %v1556, %v1556
    %v1629 = vmul.f32 %v1557, %v1557
    %v1630 = vmul.f32 %v1558, %v1558
    %v1631 = vsub.f32 %v1615, %v1623
    %v1632 = vsub.f32 %v1616, %v1624
    %v1633 = vsub.f32 %v1617, %v1625
    %v1634 = vsub.f32 %v1618, %v1626
    %v1635 = vsub.f32 %v1619, %v1627
    %v1636 = vsub.f32 %v1620, %v1628
    %v1637 = vsub.f32 %v1621, %v1629
    %v1638 = vsub.f32 %v1622, %v1630
    %v1639 = vmax.f32 %v1631, 0.0
    %v1640 = vmax.f32 %v1632, 0.0
    %v1641 = vmax.f32 %v1633, 0.0
    %v1642 = vmax.f32 %v1634, 0.0
    %v1643 = vmax.f32 %v1635, 0.0
    %v1644 = vmax.f32 %v1636, 0.0
    %v1645 = vmax.f32 %v1637, 0.0
    %v1646 = vmax.f32 %v1638, 0.0
    %v1647 = vadd.f32 %v1639, 1e-05
    %v1648 = vadd.f32 %v1640, 1e-05
    %v1649 = vadd.f32 %v1641, 1e-05
    %v1650 = vadd.f32 %v1642, 1e-05
    %v1651 = vadd.f32 %v1643, 1e-05
    %v1652 = vadd.f32 %v1644, 1e-05
    %v1653 = vadd.f32 %v1645, 1e-05
    %v1654 = vadd.f32 %v1646, 1e-05
    %v1655 = vrsqrt.pop %v1647
    %v1656 = vrsqrt.pop %v1648
    %v1657 = vrsqrt.pop %v1649
    %v1658 = vrsqrt.pop %v1650
    %v1659 = vrsqrt.pop %v1651
    %v1660 = vrsqrt.pop %v1652
    %v1661 = vrsqrt.pop %v1653
    %v1662 = vrsqrt.pop %v1654
    %v1671 = vcombine.low %v1655, %v1656
    %v1672 = vcombine.low %v1657, %v1658
    %v1673 = vcombine.low %v1659, %v1660
    %v1674 = vcombine.low %v1661, %v1662
    %v1676 = vunpack.c.l.s4 1966171168
    %v1677 = vunpack.c.0.s8 %v1676
    %v1678 = vlaneseq
    %v1679 = vshrl.u32 %v1678, 7
    %v1680 = vsub.s32 %v1677, %v1679
    %v1681 = vrot.slane %v1671, %v1680
    %v1683 = vunpack.c.l.s4 1966171168
    %v1684 = vunpack.c.0.s8 %v1683
    %v1685 = vlaneseq
    %v1686 = vshrl.u32 %v1685, 7
    %v1687 = vsub.s32 %v1684, %v1686
    %v1688 = vrot.slane %v1672, %v1687
    %v1690 = vunpack.c.l.s4 1966171168
    %v1691 = vunpack.c.0.s8 %v1690
    %v1692 = vlaneseq
    %v1693 = vshrl.u32 %v1692, 7
    %v1694 = vsub.s32 %v1691, %v1693
    %v1695 = vrot.slane %v1673, %v1694
    %v1697 = vunpack.c.l.s4 1966171168
    %v1698 = vunpack.c.0.s8 %v1697
    %v1699 = vlaneseq
    %v1700 = vshrl.u32 %v1699, 7
    %v1701 = vsub.s32 %v1698, %v1700
    %v1702 = vrot.slane %v1674, %v1701
    %v1703 = vcombine.low %v1681, %v1688
    %v1704 = vcombine.low %v1695, %v1702
    %v1706 = vunpack.c.l.s4 1966171168
    %v1707 = vunpack.c.0.s8 %v1706
    %v1708 = vlaneseq
    %v1709 = vshrl.u32 %v1708, 7
    %v1710 = vsub.s32 %v1707, %v1709
    %v1711 = vrot.slane %v1703, %v1710
    %v1713 = vunpack.c.l.s4 1966171168
    %v1714 = vunpack.c.0.s8 %v1713
    %v1715 = vlaneseq
    %v1716 = vshrl.u32 %v1715, 7
    %v1717 = vsub.s32 %v1714, %v1716
    %v1718 = vrot.slane %v1704, %v1717
    %v1719 = vcombine.low %v1711, %v1718
    %v1721 = vmul.f32 %v1501, %v1719
    %v1723 = vlaneseq
    %v1724 = vshrl.u32 %v1723, 7
    %v1725 = vsub.s32 0, %v1724
    %v1726 = vrot.slane %v1721, %v1725
    %v1727 = vlaneseq
    %v1728 = vshrl.u32 %v1727, 7
    %v1729 = vsub.s32 1, %v1728
    %v1730 = vrot.slane %v1721, %v1729
    %v1731 = vlaneseq
    %v1732 = vshrl.u32 %v1731, 7
    %v1733 = vsub.s32 2, %v1732
    %v1734 = vrot.slane %v1721, %v1733
    %v1735 = vlaneseq
    %v1736 = vshrl.u32 %v1735, 7
    %v1737 = vsub.s32 3, %v1736
    %v1738 = vrot.slane %v1721, %v1737
    %v1739 = vlaneseq
    %v1740 = vshrl.u32 %v1739, 7
    %v1741 = vsub.s32 4, %v1740
    %v1742 = vrot.slane %v1721, %v1741
    %v1743 = vlaneseq
    %v1744 = vshrl.u32 %v1743, 7
    %v1745 = vsub.s32 5, %v1744
    %v1746 = vrot.slane %v1721, %v1745
    %v1747 = vlaneseq
    %v1748 = vshrl.u32 %v1747, 7
    %v1749 = vsub.s32 6, %v1748
    %v1750 = vrot.slane %v1721, %v1749
    %v1751 = vlaneseq
    %v1752 = vshrl.u32 %v1751, 7
    %v1753 = vsub.s32 7, %v1752
    %v1754 = vrot.slane %v1721, %v1753
    %v1763 = vmul.f32 %v1551, %v1726
    %v1764 = vmul.f32 %v1552, %v1730
    %v1765 = vmul.f32 %v1553, %v1734
    %v1766 = vmul.f32 %v1554, %v1738
    %v1767 = vmul.f32 %v1555, %v1742
    %v1768 = vmul.f32 %v1556, %v1746
    %v1769 = vmul.f32 %v1557, %v1750
    %v1770 = vmul.f32 %v1558, %v1754
    %v1779 = vcombine.low %v1763, %v1764
    %v1780 = vcombine.low %v1765, %v1766
    %v1781 = vcombine.low %v1767, %v1768
    %v1782 = vcombine.low %v1769, %v1770
    %v1784 = vunpack.c.l.s4 1966171168
    %v1785 = vunpack.c.0.s8 %v1784
    %v1786 = vlaneseq
    %v1787 = vshrl.u32 %v1786, 7
    %v1788 = vsub.s32 %v1785, %v1787
    %v1789 = vrot.slane %v1779, %v1788
    %v1791 = vunpack.c.l.s4 1966171168
    %v1792 = vunpack.c.0.s8 %v1791
    %v1793 = vlaneseq
    %v1794 = vshrl.u32 %v1793, 7
    %v1795 = vsub.s32 %v1792, %v1794
    %v1796 = vrot.slane %v1780, %v1795
    %v1798 = vunpack.c.l.s4 1966171168
    %v1799 = vunpack.c.0.s8 %v1798
    %v1800 = vlaneseq
    %v1801 = vshrl.u32 %v1800, 7
    %v1802 = vsub.s32 %v1799, %v1801
    %v1803 = vrot.slane %v1781, %v1802
    %v1805 = vunpack.c.l.s4 1966171168
    %v1806 = vunpack.c.0.s8 %v1805
    %v1807 = vlaneseq
    %v1808 = vshrl.u32 %v1807, 7
    %v1809 = vsub.s32 %v1806, %v1808
    %v1810 = vrot.slane %v1782, %v1809
    %v1811 = vcombine.low %v1789, %v1796
    %v1812 = vcombine.low %v1803, %v1810
    %v1814 = vunpack.c.l.s4 1966171168
    %v1815 = vunpack.c.0.s8 %v1814
    %v1816 = vlaneseq
    %v1817 = vshrl.u32 %v1816, 7
    %v1818 = vsub.s32 %v1815, %v1817
    %v1819 = vrot.slane %v1811, %v1818
    %v1821 = vunpack.c.l.s4 1966171168
    %v1822 = vunpack.c.0.s8 %v1821
    %v1823 = vlaneseq
    %v1824 = vshrl.u32 %v1823, 7
    %v1825 = vsub.s32 %v1822, %v1824
    %v1826 = vrot.slane %v1812, %v1825
    %v1827 = vcombine.low %v1819, %v1826
    %v1829 = vsub.f32 %v1502, %v1827
    %v1830 = vmul.f32 %v1249, %v1726
    %v1831 = vmul.f32 %v1251, %v1730
    %v1832 = vmul.f32 %v1331, %v1734
    %v1833 = vmul.f32 %v1333, %v1738
    %v1834 = vmul.f32 %v1413, %v1742
    %v1835 = vmul.f32 %v1415, %v1746
    %v1836 = vmul.f32 %v1495, %v1750
    %v1837 = vmul.f32 %v1497, %v1754
    %v1839 = vlaneseq
    %v1840 = vshrl.u32 %v1839, 7
    %v1841 = vsub.s32 0, %v1840
    %v1842 = vrot.slane %v1829, %v1841
    %v1843 = vlaneseq
    %v1844 = vshrl.u32 %v1843, 7
    %v1845 = vsub.s32 1, %v1844
    %v1846 = vrot.slane %v1829, %v1845
    %v1847 = vlaneseq
    %v1848 = vshrl.u32 %v1847, 7
    %v1849 = vsub.s32 2, %v1848
    %v1850 = vrot.slane %v1829, %v1849
    %v1851 = vlaneseq
    %v1852 = vshrl.u32 %v1851, 7
    %v1853 = vsub.s32 3, %v1852
    %v1854 = vrot.slane %v1829, %v1853
    %v1855 = vlaneseq
    %v1856 = vshrl.u32 %v1855, 7
    %v1857 = vsub.s32 4, %v1856
    %v1858 = vrot.slane %v1829, %v1857
    %v1859 = vlaneseq
    %v1860 = vshrl.u32 %v1859, 7
    %v1861 = vsub.s32 5, %v1860
    %v1862 = vrot.slane %v1829, %v1861
    %v1863 = vlaneseq
    %v1864 = vshrl.u32 %v1863, 7
    %v1865 = vsub.s32 6, %v1864
    %v1866 = vrot.slane %v1829, %v1865
    %v1867 = vlaneseq
    %v1868 = vshrl.u32 %v1867, 7
    %v1869 = vsub.s32 7, %v1868
    %v1870 = vrot.slane %v1829, %v1869
    %v1879 = vadd.f32 %v1830, %v1842
    %v1880 = vadd.f32 %v1831, %v1846
    %v1881 = vadd.f32 %v1832, %v1850
    %v1882 = vadd.f32 %v1833, %v1854
    %v1883 = vadd.f32 %v1834, %v1858
    %v1884 = vadd.f32 %v1835, %v1862
    %v1885 = vadd.f32 %v1836, %v1866
    %v1886 = vadd.f32 %v1837, %v1870
    %vm1887 = vcmp.gt.f32.partialorder %v1879, 0.0
    %vm1888 = vcmp.gt.f32.partialorder %v1880, 0.0
    %vm1889 = vcmp.gt.f32.partialorder %v1881, 0.0
    %vm1890 = vcmp.gt.f32.partialorder %v1882, 0.0
    %vm1891 = vcmp.gt.f32.partialorder %v1883, 0.0
    %vm1892 = vcmp.gt.f32.partialorder %v1884, 0.0
    %vm1893 = vcmp.gt.f32.partialorder %v1885, 0.0
    %vm1894 = vcmp.gt.f32.partialorder %v1886, 0.0
    %v1895 = vmul.f32 %v1879, 0.2
    %v1896 = vmul.f32 %v1880, 0.2
    %v1897 = vmul.f32 %v1881, 0.2
    %v1898 = vmul.f32 %v1882, 0.2
    %v1899 = vmul.f32 %v1883, 0.2
    %v1900 = vmul.f32 %v1884, 0.2
    %v1901 = vmul.f32 %v1885, 0.2
    %v1902 = vmul.f32 %v1886, 0.2
    %v1903 = vsel %vm1887, %v1879, %v1895
    %v1904 = vsel %vm1888, %v1880, %v1896
    %v1905 = vsel %vm1889, %v1881, %v1897
    %v1906 = vsel %vm1890, %v1882, %v1898
    %v1907 = vsel %vm1891, %v1883, %v1899
    %v1908 = vsel %vm1892, %v1884, %v1900
    %v1909 = vsel %vm1893, %v1885, %v1901
    %v1910 = vsel %vm1894, %v1886, %v1902
    %v1911 = vpack.c.bf16 %v1903, %v1903
    %v1912 = vpack.c.bf16 %v1904, %v1904
    %v1913 = vpack.c.bf16 %v1905, %v1905
    %v1914 = vpack.c.bf16 %v1906, %v1906
    %v1915 = vpack.c.bf16 %v1907, %v1907
    %v1916 = vpack.c.bf16 %v1908, %v1908
    %v1917 = vpack.c.bf16 %v1909, %v1909
    %v1918 = vpack.c.bf16 %v1910, %v1910
    %v1919 = vld [vmem:[%s12] sm:$0xff]
    %v1920 = vld [vmem:[%s12 + $0x8] sm:$0xff]
    %v1921 = vld [vmem:[%s12 + $0x10] sm:$0xff]
    %v1922 = vld [vmem:[%s12 + $0x18] sm:$0xff]
    %v1923 = vld [vmem:[%s12 + $0x20] sm:$0xff]
    %v1924 = vld [vmem:[%s12 + $0x28] sm:$0xff]
    %v1925 = vld [vmem:[%s12 + $0x30] sm:$0xff]
    %v1926 = vld [vmem:[%s12 + $0x38] sm:$0xff]
    %v1927 = vld [vmem:[%s12 + $0x40] sm:$0xff]
    %v1928 = vld [vmem:[%s12 + $0x48] sm:$0xff]
    %v1929 = vld [vmem:[%s12 + $0x50] sm:$0xff]
    %v1930 = vld [vmem:[%s12 + $0x58] sm:$0xff]
    %v1931 = vld [vmem:[%s12 + $0x60] sm:$0xff]
    %v1932 = vld [vmem:[%s12 + $0x68] sm:$0xff]
    %v1933 = vld [vmem:[%s12 + $0x70] sm:$0xff]
    %v1934 = vld [vmem:[%s12 + $0x78] sm:$0xff]
    %v1935 = vld [vmem:[%s12 + $0x80] sm:$0xff]
    %v1936 = vld [vmem:[%s12 + $0x88] sm:$0xff]
    %v1937 = vld [vmem:[%s12 + $0x90] sm:$0xff]
    %v1938 = vld [vmem:[%s12 + $0x98] sm:$0xff]
    %v1939 = vld [vmem:[%s12 + $0xa0] sm:$0xff]
    %v1940 = vld [vmem:[%s12 + $0xa8] sm:$0xff]
    %v1941 = vld [vmem:[%s12 + $0xb0] sm:$0xff]
    %v1942 = vld [vmem:[%s12 + $0xb8] sm:$0xff]
    %v1943 = vld [vmem:[%s12 + $0xc0] sm:$0xff]
    %v1944 = vld [vmem:[%s12 + $0xc8] sm:$0xff]
    %v1945 = vld [vmem:[%s12 + $0xd0] sm:$0xff]
    %v1946 = vld [vmem:[%s12 + $0xd8] sm:$0xff]
    %v1947 = vld [vmem:[%s12 + $0xe0] sm:$0xff]
    %v1948 = vld [vmem:[%s12 + $0xe8] sm:$0xff]
    %v1949 = vld [vmem:[%s12 + $0xf0] sm:$0xff]
    %v1950 = vld [vmem:[%s12 + $0xf8] sm:$0xff]
    %v1951 = vld [vmem:[%s12 + $0x100] sm:$0xff]
    %v1952 = vld [vmem:[%s12 + $0x108] sm:$0xff]
    %v1953 = vld [vmem:[%s12 + $0x110] sm:$0xff]
    %v1954 = vld [vmem:[%s12 + $0x118] sm:$0xff]
    %v1955 = vld [vmem:[%s12 + $0x120] sm:$0xff]
    %v1956 = vld [vmem:[%s12 + $0x128] sm:$0xff]
    %v1957 = vld [vmem:[%s12 + $0x130] sm:$0xff]
    %v1958 = vld [vmem:[%s12 + $0x138] sm:$0xff]
    %v1959 = vld [vmem:[%s12 + $0x140] sm:$0xff]
    %v1960 = vld [vmem:[%s12 + $0x148] sm:$0xff]
    %v1961 = vld [vmem:[%s12 + $0x150] sm:$0xff]
    %v1962 = vld [vmem:[%s12 + $0x158] sm:$0xff]
    %v1963 = vld [vmem:[%s12 + $0x160] sm:$0xff]
    %v1964 = vld [vmem:[%s12 + $0x168] sm:$0xff]
    %v1965 = vld [vmem:[%s12 + $0x170] sm:$0xff]
    %v1966 = vld [vmem:[%s12 + $0x178] sm:$0xff]
    %v1967 = vld [vmem:[%s12 + $0x180] sm:$0xff]
    %v1968 = vld [vmem:[%s12 + $0x188] sm:$0xff]
    %v1969 = vld [vmem:[%s12 + $0x190] sm:$0xff]
    %v1970 = vld [vmem:[%s12 + $0x198] sm:$0xff]
    %v1971 = vld [vmem:[%s12 + $0x1a0] sm:$0xff]
    %v1972 = vld [vmem:[%s12 + $0x1a8] sm:$0xff]
    %v1973 = vld [vmem:[%s12 + $0x1b0] sm:$0xff]
    %v1974 = vld [vmem:[%s12 + $0x1b8] sm:$0xff]
    %v1975 = vld [vmem:[%s12 + $0x1c0] sm:$0xff]
    %v1976 = vld [vmem:[%s12 + $0x1c8] sm:$0xff]
    %v1977 = vld [vmem:[%s12 + $0x1d0] sm:$0xff]
    %v1978 = vld [vmem:[%s12 + $0x1d8] sm:$0xff]
    %v1979 = vld [vmem:[%s12 + $0x1e0] sm:$0xff]
    %v1980 = vld [vmem:[%s12 + $0x1e8] sm:$0xff]
    %v1981 = vld [vmem:[%s12 + $0x1f0] sm:$0xff]
    %v1982 = vld [vmem:[%s12 + $0x1f8] sm:$0xff]
    %v1983 = vld [vmem:[%s12 + $0x200] sm:$0xff]
    %v1984 = vld [vmem:[%s12 + $0x208] sm:$0xff]
    %v1985 = vld [vmem:[%s12 + $0x210] sm:$0xff]
    %v1986 = vld [vmem:[%s12 + $0x218] sm:$0xff]
    %v1987 = vld [vmem:[%s12 + $0x220] sm:$0xff]
    %v1988 = vld [vmem:[%s12 + $0x228] sm:$0xff]
    %v1989 = vld [vmem:[%s12 + $0x230] sm:$0xff]
    %v1990 = vld [vmem:[%s12 + $0x238] sm:$0xff]
    %v1991 = vld [vmem:[%s12 + $0x240] sm:$0xff]
    %v1992 = vld [vmem:[%s12 + $0x248] sm:$0xff]
    %v1993 = vld [vmem:[%s12 + $0x250] sm:$0xff]
    %v1994 = vld [vmem:[%s12 + $0x258] sm:$0xff]
    %v1995 = vld [vmem:[%s12 + $0x260] sm:$0xff]
    %v1996 = vld [vmem:[%s12 + $0x268] sm:$0xff]
    %v1997 = vld [vmem:[%s12 + $0x270] sm:$0xff]
    %v1998 = vld [vmem:[%s12 + $0x278] sm:$0xff]
    %v1999 = vld [vmem:[%s12 + $0x280] sm:$0xff]
    %v2000 = vld [vmem:[%s12 + $0x288] sm:$0xff]
    %v2001 = vld [vmem:[%s12 + $0x290] sm:$0xff]
    %v2002 = vld [vmem:[%s12 + $0x298] sm:$0xff]
    %v2003 = vld [vmem:[%s12 + $0x2a0] sm:$0xff]
    %v2004 = vld [vmem:[%s12 + $0x2a8] sm:$0xff]
    %v2005 = vld [vmem:[%s12 + $0x2b0] sm:$0xff]
    %v2006 = vld [vmem:[%s12 + $0x2b8] sm:$0xff]
    %v2007 = vld [vmem:[%s12 + $0x2c0] sm:$0xff]
    %v2008 = vld [vmem:[%s12 + $0x2c8] sm:$0xff]
    %v2009 = vld [vmem:[%s12 + $0x2d0] sm:$0xff]
    %v2010 = vld [vmem:[%s12 + $0x2d8] sm:$0xff]
    %v2011 = vld [vmem:[%s12 + $0x2e0] sm:$0xff]
    %v2012 = vld [vmem:[%s12 + $0x2e8] sm:$0xff]
    %v2013 = vld [vmem:[%s12 + $0x2f0] sm:$0xff]
    %v2014 = vld [vmem:[%s12 + $0x2f8] sm:$0xff]
    %v2015 = vld [vmem:[%s12 + $0x300] sm:$0xff]
    %v2016 = vld [vmem:[%s12 + $0x308] sm:$0xff]
    %v2017 = vld [vmem:[%s12 + $0x310] sm:$0xff]
    %v2018 = vld [vmem:[%s12 + $0x318] sm:$0xff]
    %v2019 = vld [vmem:[%s12 + $0x320] sm:$0xff]
    %v2020 = vld [vmem:[%s12 + $0x328] sm:$0xff]
    %v2021 = vld [vmem:[%s12 + $0x330] sm:$0xff]
    %v2022 = vld [vmem:[%s12 + $0x338] sm:$0xff]
    %v2023 = vld [vmem:[%s12 + $0x340] sm:$0xff]
    %v2024 = vld [vmem:[%s12 + $0x348] sm:$0xff]
    %v2025 = vld [vmem:[%s12 + $0x350] sm:$0xff]
    %v2026 = vld [vmem:[%s12 + $0x358] sm:$0xff]
    %v2027 = vld [vmem:[%s12 + $0x360] sm:$0xff]
    %v2028 = vld [vmem:[%s12 + $0x368] sm:$0xff]
    %v2029 = vld [vmem:[%s12 + $0x370] sm:$0xff]
    %v2030 = vld [vmem:[%s12 + $0x378] sm:$0xff]
    %v2031 = vld [vmem:[%s12 + $0x380] sm:$0xff]
    %v2032 = vld [vmem:[%s12 + $0x388] sm:$0xff]
    %v2033 = vld [vmem:[%s12 + $0x390] sm:$0xff]
    %v2034 = vld [vmem:[%s12 + $0x398] sm:$0xff]
    %v2035 = vld [vmem:[%s12 + $0x3a0] sm:$0xff]
    %v2036 = vld [vmem:[%s12 + $0x3a8] sm:$0xff]
    %v2037 = vld [vmem:[%s12 + $0x3b0] sm:$0xff]
    %v2038 = vld [vmem:[%s12 + $0x3b8] sm:$0xff]
    %v2039 = vld [vmem:[%s12 + $0x3c0] sm:$0xff]
    %v2040 = vld [vmem:[%s12 + $0x3c8] sm:$0xff]
    %v2041 = vld [vmem:[%s12 + $0x3d0] sm:$0xff]
    %v2042 = vld [vmem:[%s12 + $0x3d8] sm:$0xff]
    %v2043 = vld [vmem:[%s12 + $0x3e0] sm:$0xff]
    %v2044 = vld [vmem:[%s12 + $0x3e8] sm:$0xff]
    %v2045 = vld [vmem:[%s12 + $0x3f0] sm:$0xff]
    %v2046 = vld [vmem:[%s12 + $0x3f8] sm:$0xff]
    %v2047 = vld [vmem:[%s12 + $0x400] sm:$0xff]
    %v2048 = vld [vmem:[%s12 + $0x408] sm:$0xff]
    %v2049 = vld [vmem:[%s12 + $0x410] sm:$0xff]
    %v2050 = vld [vmem:[%s12 + $0x418] sm:$0xff]
    %v2051 = vld [vmem:[%s12 + $0x420] sm:$0xff]
    %v2052 = vld [vmem:[%s12 + $0x428] sm:$0xff]
    %v2053 = vld [vmem:[%s12 + $0x430] sm:$0xff]
    %v2054 = vld [vmem:[%s12 + $0x438] sm:$0xff]
    %v2055 = vld [vmem:[%s12 + $0x440] sm:$0xff]
    %v2056 = vld [vmem:[%s12 + $0x448] sm:$0xff]
    %v2057 = vld [vmem:[%s12 + $0x450] sm:$0xff]
    %v2058 = vld [vmem:[%s12 + $0x458] sm:$0xff]
    %v2059 = vld [vmem:[%s12 + $0x460] sm:$0xff]
    %v2060 = vld [vmem:[%s12 + $0x468] sm:$0xff]
    %v2061 = vld [vmem:[%s12 + $0x470] sm:$0xff]
    %v2062 = vld [vmem:[%s12 + $0x478] sm:$0xff]
    %v2063 = vld [vmem:[%s12 + $0x480] sm:$0xff]
    %v2064 = vld [vmem:[%s12 + $0x488] sm:$0xff]
    %v2065 = vld [vmem:[%s12 + $0x490] sm:$0xff]
    %v2066 = vld [vmem:[%s12 + $0x498] sm:$0xff]
    %v2067 = vld [vmem:[%s12 + $0x4a0] sm:$0xff]
    %v2068 = vld [vmem:[%s12 + $0x4a8] sm:$0xff]
    %v2069 = vld [vmem:[%s12 + $0x4b0] sm:$0xff]
    %v2070 = vld [vmem:[%s12 + $0x4b8] sm:$0xff]
    %v2071 = vld [vmem:[%s12 + $0x4c0] sm:$0xff]
    %v2072 = vld [vmem:[%s12 + $0x4c8] sm:$0xff]
    %v2073 = vld [vmem:[%s12 + $0x4d0] sm:$0xff]
    %v2074 = vld [vmem:[%s12 + $0x4d8] sm:$0xff]
    %v2075 = vld [vmem:[%s12 + $0x4e0] sm:$0xff]
    %v2076 = vld [vmem:[%s12 + $0x4e8] sm:$0xff]
    %v2077 = vld [vmem:[%s12 + $0x4f0] sm:$0xff]
    %v2078 = vld [vmem:[%s12 + $0x4f8] sm:$0xff]
    %v2079 = vld [vmem:[%s12 + $0x500] sm:$0xff]
    %v2080 = vld [vmem:[%s12 + $0x508] sm:$0xff]
    %v2081 = vld [vmem:[%s12 + $0x510] sm:$0xff]
    %v2082 = vld [vmem:[%s12 + $0x518] sm:$0xff]
    %v2083 = vld [vmem:[%s12 + $0x520] sm:$0xff]
    %v2084 = vld [vmem:[%s12 + $0x528] sm:$0xff]
    %v2085 = vld [vmem:[%s12 + $0x530] sm:$0xff]
    %v2086 = vld [vmem:[%s12 + $0x538] sm:$0xff]
    %v2087 = vld [vmem:[%s12 + $0x540] sm:$0xff]
    %v2088 = vld [vmem:[%s12 + $0x548] sm:$0xff]
    %v2089 = vld [vmem:[%s12 + $0x550] sm:$0xff]
    %v2090 = vld [vmem:[%s12 + $0x558] sm:$0xff]
    %v2091 = vld [vmem:[%s12 + $0x560] sm:$0xff]
    %v2092 = vld [vmem:[%s12 + $0x568] sm:$0xff]
    %v2093 = vld [vmem:[%s12 + $0x570] sm:$0xff]
    %v2094 = vld [vmem:[%s12 + $0x578] sm:$0xff]
    %v2095 = vld [vmem:[%s12 + $0x580] sm:$0xff]
    %v2096 = vld [vmem:[%s12 + $0x588] sm:$0xff]
    %v2097 = vld [vmem:[%s12 + $0x590] sm:$0xff]
    %v2098 = vld [vmem:[%s12 + $0x598] sm:$0xff]
    %v2099 = vld [vmem:[%s12 + $0x5a0] sm:$0xff]
    %v2100 = vld [vmem:[%s12 + $0x5a8] sm:$0xff]
    %v2101 = vld [vmem:[%s12 + $0x5b0] sm:$0xff]
    %v2102 = vld [vmem:[%s12 + $0x5b8] sm:$0xff]
    %v2103 = vld [vmem:[%s12 + $0x5c0] sm:$0xff]
    %v2104 = vld [vmem:[%s12 + $0x5c8] sm:$0xff]
    %v2105 = vld [vmem:[%s12 + $0x5d0] sm:$0xff]
    %v2106 = vld [vmem:[%s12 + $0x5d8] sm:$0xff]
    %v2107 = vld [vmem:[%s12 + $0x5e0] sm:$0xff]
    %v2108 = vld [vmem:[%s12 + $0x5e8] sm:$0xff]
    %v2109 = vld [vmem:[%s12 + $0x5f0] sm:$0xff]
    %v2110 = vld [vmem:[%s12 + $0x5f8] sm:$0xff]
    %v2111 = vld [vmem:[%s12 + $0x600] sm:$0xff]
    %v2112 = vld [vmem:[%s12 + $0x608] sm:$0xff]
    %v2113 = vld [vmem:[%s12 + $0x610] sm:$0xff]
    %v2114 = vld [vmem:[%s12 + $0x618] sm:$0xff]
    %v2115 = vld [vmem:[%s12 + $0x620] sm:$0xff]
    %v2116 = vld [vmem:[%s12 + $0x628] sm:$0xff]
    %v2117 = vld [vmem:[%s12 + $0x630] sm:$0xff]
    %v2118 = vld [vmem:[%s12 + $0x638] sm:$0xff]
    %v2119 = vld [vmem:[%s12 + $0x640] sm:$0xff]
    %v2120 = vld [vmem:[%s12 + $0x648] sm:$0xff]
    %v2121 = vld [vmem:[%s12 + $0x650] sm:$0xff]
    %v2122 = vld [vmem:[%s12 + $0x658] sm:$0xff]
    %v2123 = vld [vmem:[%s12 + $0x660] sm:$0xff]
    %v2124 = vld [vmem:[%s12 + $0x668] sm:$0xff]
    %v2125 = vld [vmem:[%s12 + $0x670] sm:$0xff]
    %v2126 = vld [vmem:[%s12 + $0x678] sm:$0xff]
    %v2127 = vld [vmem:[%s12 + $0x680] sm:$0xff]
    %v2128 = vld [vmem:[%s12 + $0x688] sm:$0xff]
    %v2129 = vld [vmem:[%s12 + $0x690] sm:$0xff]
    %v2130 = vld [vmem:[%s12 + $0x698] sm:$0xff]
    %v2131 = vld [vmem:[%s12 + $0x6a0] sm:$0xff]
    %v2132 = vld [vmem:[%s12 + $0x6a8] sm:$0xff]
    %v2133 = vld [vmem:[%s12 + $0x6b0] sm:$0xff]
    %v2134 = vld [vmem:[%s12 + $0x6b8] sm:$0xff]
    %v2135 = vld [vmem:[%s12 + $0x6c0] sm:$0xff]
    %v2136 = vld [vmem:[%s12 + $0x6c8] sm:$0xff]
    %v2137 = vld [vmem:[%s12 + $0x6d0] sm:$0xff]
    %v2138 = vld [vmem:[%s12 + $0x6d8] sm:$0xff]
    %v2139 = vld [vmem:[%s12 + $0x6e0] sm:$0xff]
    %v2140 = vld [vmem:[%s12 + $0x6e8] sm:$0xff]
    %v2141 = vld [vmem:[%s12 + $0x6f0] sm:$0xff]
    %v2142 = vld [vmem:[%s12 + $0x6f8] sm:$0xff]
    %v2143 = vunpack.c.l.s8.bf16 %v1919
    %v2144 = vunpack.c.l.s8.bf16 %v1920
    %v2145 = vunpack.c.l.s8.bf16 %v1921
    %v2146 = vunpack.c.l.s8.bf16 %v1922
    %v2147 = vunpack.c.l.s8.bf16 %v1923
    %v2148 = vunpack.c.l.s8.bf16 %v1924
    %v2149 = vunpack.c.l.s8.bf16 %v1925
    %v2150 = vunpack.c.h.s8.bf16 %v1919
    %v2151 = vunpack.c.h.s8.bf16 %v1920
    %v2152 = vunpack.c.h.s8.bf16 %v1921
    %v2153 = vunpack.c.h.s8.bf16 %v1922
    %v2154 = vunpack.c.h.s8.bf16 %v1923
    %v2155 = vunpack.c.h.s8.bf16 %v1924
    %v2156 = vunpack.c.h.s8.bf16 %v1925
    %v2157 = vunpack.c.l.s8.bf16 %v1926
    %v2158 = vunpack.c.l.s8.bf16 %v1927
    %v2159 = vunpack.c.l.s8.bf16 %v1928
    %v2160 = vunpack.c.l.s8.bf16 %v1929
    %v2161 = vunpack.c.l.s8.bf16 %v1930
    %v2162 = vunpack.c.l.s8.bf16 %v1931
    %v2163 = vunpack.c.l.s8.bf16 %v1932
    %v2164 = vunpack.c.h.s8.bf16 %v1926
    %v2165 = vunpack.c.h.s8.bf16 %v1927
    %v2166 = vunpack.c.h.s8.bf16 %v1928
    %v2167 = vunpack.c.h.s8.bf16 %v1929
    %v2168 = vunpack.c.h.s8.bf16 %v1930
    %v2169 = vunpack.c.h.s8.bf16 %v1931
    %v2170 = vunpack.c.h.s8.bf16 %v1932
    %v2171 = vunpack.c.l.s8.bf16 %v1933
    %v2172 = vunpack.c.l.s8.bf16 %v1934
    %v2173 = vunpack.c.l.s8.bf16 %v1935
    %v2174 = vunpack.c.l.s8.bf16 %v1936
    %v2175 = vunpack.c.l.s8.bf16 %v1937
    %v2176 = vunpack.c.l.s8.bf16 %v1938
    %v2177 = vunpack.c.l.s8.bf16 %v1939
    %v2178 = vunpack.c.h.s8.bf16 %v1933
    %v2179 = vunpack.c.h.s8.bf16 %v1934
    %v2180 = vunpack.c.h.s8.bf16 %v1935
    %v2181 = vunpack.c.h.s8.bf16 %v1936
    %v2182 = vunpack.c.h.s8.bf16 %v1937
    %v2183 = vunpack.c.h.s8.bf16 %v1938
    %v2184 = vunpack.c.h.s8.bf16 %v1939
    %v2185 = vunpack.c.l.s8.bf16 %v1940
    %v2186 = vunpack.c.l.s8.bf16 %v1941
    %v2187 = vunpack.c.l.s8.bf16 %v1942
    %v2188 = vunpack.c.l.s8.bf16 %v1943
    %v2189 = vunpack.c.l.s8.bf16 %v1944
    %v2190 = vunpack.c.l.s8.bf16 %v1945
    %v2191 = vunpack.c.l.s8.bf16 %v1946
    %v2192 = vunpack.c.h.s8.bf16 %v1940
    %v2193 = vunpack.c.h.s8.bf16 %v1941
    %v2194 = vunpack.c.h.s8.bf16 %v1942
    %v2195 = vunpack.c.h.s8.bf16 %v1943
    %v2196 = vunpack.c.h.s8.bf16 %v1944
    %v2197 = vunpack.c.h.s8.bf16 %v1945
    %v2198 = vunpack.c.h.s8.bf16 %v1946
    %v2199 = vunpack.c.l.s8.bf16 %v1947
    %v2200 = vunpack.c.l.s8.bf16 %v1948
    %v2201 = vunpack.c.l.s8.bf16 %v1949
    %v2202 = vunpack.c.l.s8.bf16 %v1950
    %v2203 = vunpack.c.l.s8.bf16 %v1951
    %v2204 = vunpack.c.l.s8.bf16 %v1952
    %v2205 = vunpack.c.l.s8.bf16 %v1953
    %v2206 = vunpack.c.h.s8.bf16 %v1947
    %v2207 = vunpack.c.h.s8.bf16 %v1948
    %v2208 = vunpack.c.h.s8.bf16 %v1949
    %v2209 = vunpack.c.h.s8.bf16 %v1950
    %v2210 = vunpack.c.h.s8.bf16 %v1951
    %v2211 = vunpack.c.h.s8.bf16 %v1952
    %v2212 = vunpack.c.h.s8.bf16 %v1953
    %v2213 = vunpack.c.l.s8.bf16 %v1954
    %v2214 = vunpack.c.l.s8.bf16 %v1955
    %v2215 = vunpack.c.l.s8.bf16 %v1956
    %v2216 = vunpack.c.l.s8.bf16 %v1957
    %v2217 = vunpack.c.l.s8.bf16 %v1958
    %v2218 = vunpack.c.l.s8.bf16 %v1959
    %v2219 = vunpack.c.l.s8.bf16 %v1960
    %v2220 = vunpack.c.h.s8.bf16 %v1954
    %v2221 = vunpack.c.h.s8.bf16 %v1955
    %v2222 = vunpack.c.h.s8.bf16 %v1956
    %v2223 = vunpack.c.h.s8.bf16 %v1957
    %v2224 = vunpack.c.h.s8.bf16 %v1958
    %v2225 = vunpack.c.h.s8.bf16 %v1959
    %v2226 = vunpack.c.h.s8.bf16 %v1960
    %v2227 = vunpack.c.l.s8.bf16 %v1961
    %v2228 = vunpack.c.l.s8.bf16 %v1962
    %v2229 = vunpack.c.l.s8.bf16 %v1963
    %v2230 = vunpack.c.l.s8.bf16 %v1964
    %v2231 = vunpack.c.l.s8.bf16 %v1965
    %v2232 = vunpack.c.l.s8.bf16 %v1966
    %v2233 = vunpack.c.l.s8.bf16 %v1967
    %v2234 = vunpack.c.h.s8.bf16 %v1961
    %v2235 = vunpack.c.h.s8.bf16 %v1962
    %v2236 = vunpack.c.h.s8.bf16 %v1963
    %v2237 = vunpack.c.h.s8.bf16 %v1964
    %v2238 = vunpack.c.h.s8.bf16 %v1965
    %v2239 = vunpack.c.h.s8.bf16 %v1966
    %v2240 = vunpack.c.h.s8.bf16 %v1967
    %v2241 = vunpack.c.l.s8.bf16 %v1968
    %v2242 = vunpack.c.l.s8.bf16 %v1969
    %v2243 = vunpack.c.l.s8.bf16 %v1970
    %v2244 = vunpack.c.l.s8.bf16 %v1971
    %v2245 = vunpack.c.l.s8.bf16 %v1972
    %v2246 = vunpack.c.l.s8.bf16 %v1973
    %v2247 = vunpack.c.l.s8.bf16 %v1974
    %v2248 = vunpack.c.h.s8.bf16 %v1968
    %v2249 = vunpack.c.h.s8.bf16 %v1969
    %v2250 = vunpack.c.h.s8.bf16 %v1970
    %v2251 = vunpack.c.h.s8.bf16 %v1971
    %v2252 = vunpack.c.h.s8.bf16 %v1972
    %v2253 = vunpack.c.h.s8.bf16 %v1973
    %v2254 = vunpack.c.h.s8.bf16 %v1974
    %v2255 = vunpack.c.l.s8.bf16 %v1975
    %v2256 = vunpack.c.l.s8.bf16 %v1976
    %v2257 = vunpack.c.l.s8.bf16 %v1977
    %v2258 = vunpack.c.l.s8.bf16 %v1978
    %v2259 = vunpack.c.l.s8.bf16 %v1979
    %v2260 = vunpack.c.l.s8.bf16 %v1980
    %v2261 = vunpack.c.l.s8.bf16 %v1981
    %v2262 = vunpack.c.h.s8.bf16 %v1975
    %v2263 = vunpack.c.h.s8.bf16 %v1976
    %v2264 = vunpack.c.h.s8.bf16 %v1977
    %v2265 = vunpack.c.h.s8.bf16 %v1978
    %v2266 = vunpack.c.h.s8.bf16 %v1979
    %v2267 = vunpack.c.h.s8.bf16 %v1980
    %v2268 = vunpack.c.h.s8.bf16 %v1981
    %v2269 = vunpack.c.l.s8.bf16 %v1982
    %v2270 = vunpack.c.l.s8.bf16 %v1983
    %v2271 = vunpack.c.l.s8.bf16 %v1984
    %v2272 = vunpack.c.l.s8.bf16 %v1985
    %v2273 = vunpack.c.l.s8.bf16 %v1986
    %v2274 = vunpack.c.l.s8.bf16 %v1987
    %v2275 = vunpack.c.l.s8.bf16 %v1988
    %v2276 = vunpack.c.h.s8.bf16 %v1982
    %v2277 = vunpack.c.h.s8.bf16 %v1983
    %v2278 = vunpack.c.h.s8.bf16 %v1984
    %v2279 = vunpack.c.h.s8.bf16 %v1985
    %v2280 = vunpack.c.h.s8.bf16 %v1986
    %v2281 = vunpack.c.h.s8.bf16 %v1987
    %v2282 = vunpack.c.h.s8.bf16 %v1988
    %v2283 = vunpack.c.l.s8.bf16 %v1989
    %v2284 = vunpack.c.l.s8.bf16 %v1990
    %v2285 = vunpack.c.l.s8.bf16 %v1991
    %v2286 = vunpack.c.l.s8.bf16 %v1992
    %v2287 = vunpack.c.l.s8.bf16 %v1993
    %v2288 = vunpack.c.l.s8.bf16 %v1994
    %v2289 = vunpack.c.l.s8.bf16 %v1995
    %v2290 = vunpack.c.h.s8.bf16 %v1989
    %v2291 = vunpack.c.h.s8.bf16 %v1990
    %v2292 = vunpack.c.h.s8.bf16 %v1991
    %v2293 = vunpack.c.h.s8.bf16 %v1992
    %v2294 = vunpack.c.h.s8.bf16 %v1993
    %v2295 = vunpack.c.h.s8.bf16 %v1994
    %v2296 = vunpack.c.h.s8.bf16 %v1995
    %v2297 = vunpack.c.l.s8.bf16 %v1996
    %v2298 = vunpack.c.l.s8.bf16 %v1997
    %v2299 = vunpack.c.l.s8.bf16 %v1998
    %v2300 = vunpack.c.l.s8.bf16 %v1999
    %v2301 = vunpack.c.l.s8.bf16 %v2000
    %v2302 = vunpack.c.l.s8.bf16 %v2001
    %v2303 = vunpack.c.l.s8.bf16 %v2002
    %v2304 = vunpack.c.h.s8.bf16 %v1996
    %v2305 = vunpack.c.h.s8.bf16 %v1997
    %v2306 = vunpack.c.h.s8.bf16 %v1998
    %v2307 = vunpack.c.h.s8.bf16 %v1999
    %v2308 = vunpack.c.h.s8.bf16 %v2000
    %v2309 = vunpack.c.h.s8.bf16 %v2001
    %v2310 = vunpack.c.h.s8.bf16 %v2002
    %v2311 = vunpack.c.l.s8.bf16 %v2003
    %v2312 = vunpack.c.l.s8.bf16 %v2004
    %v2313 = vunpack.c.l.s8.bf16 %v2005
    %v2314 = vunpack.c.l.s8.bf16 %v2006
    %v2315 = vunpack.c.l.s8.bf16 %v2007
    %v2316 = vunpack.c.l.s8.bf16 %v2008
    %v2317 = vunpack.c.l.s8.bf16 %v2009
    %v2318 = vunpack.c.h.s8.bf16 %v2003
    %v2319 = vunpack.c.h.s8.bf16 %v2004
    %v2320 = vunpack.c.h.s8.bf16 %v2005
    %v2321 = vunpack.c.h.s8.bf16 %v2006
    %v2322 = vunpack.c.h.s8.bf16 %v2007
    %v2323 = vunpack.c.h.s8.bf16 %v2008
    %v2324 = vunpack.c.h.s8.bf16 %v2009
    %v2325 = vunpack.c.l.s8.bf16 %v2010
    %v2326 = vunpack.c.l.s8.bf16 %v2011
    %v2327 = vunpack.c.l.s8.bf16 %v2012
    %v2328 = vunpack.c.l.s8.bf16 %v2013
    %v2329 = vunpack.c.l.s8.bf16 %v2014
    %v2330 = vunpack.c.l.s8.bf16 %v2015
    %v2331 = vunpack.c.l.s8.bf16 %v2016
    %v2332 = vunpack.c.h.s8.bf16 %v2010
    %v2333 = vunpack.c.h.s8.bf16 %v2011
    %v2334 = vunpack.c.h.s8.bf16 %v2012
    %v2335 = vunpack.c.h.s8.bf16 %v2013
    %v2336 = vunpack.c.h.s8.bf16 %v2014
    %v2337 = vunpack.c.h.s8.bf16 %v2015
    %v2338 = vunpack.c.h.s8.bf16 %v2016
    %v2339 = vunpack.c.l.s8.bf16 %v2017
    %v2340 = vunpack.c.l.s8.bf16 %v2018
    %v2341 = vunpack.c.l.s8.bf16 %v2019
    %v2342 = vunpack.c.l.s8.bf16 %v2020
    %v2343 = vunpack.c.l.s8.bf16 %v2021
    %v2344 = vunpack.c.l.s8.bf16 %v2022
    %v2345 = vunpack.c.l.s8.bf16 %v2023
    %v2346 = vunpack.c.h.s8.bf16 %v2017
    %v2347 = vunpack.c.h.s8.bf16 %v2018
    %v2348 = vunpack.c.h.s8.bf16 %v2019
    %v2349 = vunpack.c.h.s8.bf16 %v2020
    %v2350 = vunpack.c.h.s8.bf16 %v2021
    %v2351 = vunpack.c.h.s8.bf16 %v2022
    %v2352 = vunpack.c.h.s8.bf16 %v2023
    %v2353 = vunpack.c.l.s8.bf16 %v2024
    %v2354 = vunpack.c.l.s8.bf16 %v2025
    %v2355 = vunpack.c.l.s8.bf16 %v2026
    %v2356 = vunpack.c.l.s8.bf16 %v2027
    %v2357 = vunpack.c.l.s8.bf16 %v2028
    %v2358 = vunpack.c.l.s8.bf16 %v2029
    %v2359 = vunpack.c.l.s8.bf16 %v2030
    %v2360 = vunpack.c.h.s8.bf16 %v2024
    %v2361 = vunpack.c.h.s8.bf16 %v2025
    %v2362 = vunpack.c.h.s8.bf16 %v2026
    %v2363 = vunpack.c.h.s8.bf16 %v2027
    %v2364 = vunpack.c.h.s8.bf16 %v2028
    %v2365 = vunpack.c.h.s8.bf16 %v2029
    %v2366 = vunpack.c.h.s8.bf16 %v2030
    %v2367 = vunpack.c.l.s8.bf16 %v2031
    %v2368 = vunpack.c.l.s8.bf16 %v2032
    %v2369 = vunpack.c.l.s8.bf16 %v2033
    %v2370 = vunpack.c.l.s8.bf16 %v2034
    %v2371 = vunpack.c.l.s8.bf16 %v2035
    %v2372 = vunpack.c.l.s8.bf16 %v2036
    %v2373 = vunpack.c.l.s8.bf16 %v2037
    %v2374 = vunpack.c.h.s8.bf16 %v2031
    %v2375 = vunpack.c.h.s8.bf16 %v2032
    %v2376 = vunpack.c.h.s8.bf16 %v2033
    %v2377 = vunpack.c.h.s8.bf16 %v2034
    %v2378 = vunpack.c.h.s8.bf16 %v2035
    %v2379 = vunpack.c.h.s8.bf16 %v2036
    %v2380 = vunpack.c.h.s8.bf16 %v2037
    %v2381 = vunpack.c.l.s8.bf16 %v2038
    %v2382 = vunpack.c.l.s8.bf16 %v2039
    %v2383 = vunpack.c.l.s8.bf16 %v2040
    %v2384 = vunpack.c.l.s8.bf16 %v2041
    %v2385 = vunpack.c.l.s8.bf16 %v2042
    %v2386 = vunpack.c.l.s8.bf16 %v2043
    %v2387 = vunpack.c.l.s8.bf16 %v2044
    %v2388 = vunpack.c.h.s8.bf16 %v2038
    %v2389 = vunpack.c.h.s8.bf16 %v2039
    %v2390 = vunpack.c.h.s8.bf16 %v2040
    %v2391 = vunpack.c.h.s8.bf16 %v2041
    %v2392 = vunpack.c.h.s8.bf16 %v2042
    %v2393 = vunpack.c.h.s8.bf16 %v2043
    %v2394 = vunpack.c.h.s8.bf16 %v2044
    %v2395 = vunpack.c.l.s8.bf16 %v2045
    %v2396 = vunpack.c.l.s8.bf16 %v2046
    %v2397 = vunpack.c.l.s8.bf16 %v2047
    %v2398 = vunpack.c.l.s8.bf16 %v2048
    %v2399 = vunpack.c.l.s8.bf16 %v2049
    %v2400 = vunpack.c.l.s8.bf16 %v2050
    %v2401 = vunpack.c.l.s8.bf16 %v2051
    %v2402 = vunpack.c.h.s8.bf16 %v2045
    %v2403 = vunpack.c.h.s8.bf16 %v2046
    %v2404 = vunpack.c.h.s8.bf16 %v2047
    %v2405 = vunpack.c.h.s8.bf16 %v2048
    %v2406 = vunpack.c.h.s8.bf16 %v2049
    %v2407 = vunpack.c.h.s8.bf16 %v2050
    %v2408 = vunpack.c.h.s8.bf16 %v2051
    %v2409 = vunpack.c.l.s8.bf16 %v2052
    %v2410 = vunpack.c.l.s8.bf16 %v2053
    %v2411 = vunpack.c.l.s8.bf16 %v2054
    %v2412 = vunpack.c.l.s8.bf16 %v2055
    %v2413 = vunpack.c.l.s8.bf16 %v2056
    %v2414 = vunpack.c.l.s8.bf16 %v2057
    %v2415 = vunpack.c.l.s8.bf16 %v2058
    %v2416 = vunpack.c.h.s8.bf16 %v2052
    %v2417 = vunpack.c.h.s8.bf16 %v2053
    %v2418 = vunpack.c.h.s8.bf16 %v2054
    %v2419 = vunpack.c.h.s8.bf16 %v2055
    %v2420 = vunpack.c.h.s8.bf16 %v2056
    %v2421 = vunpack.c.h.s8.bf16 %v2057
    %v2422 = vunpack.c.h.s8.bf16 %v2058
    %v2423 = vunpack.c.l.s8.bf16 %v2059
    %v2424 = vunpack.c.l.s8.bf16 %v2060
    %v2425 = vunpack.c.l.s8.bf16 %v2061
    %v2426 = vunpack.c.l.s8.bf16 %v2062
    %v2427 = vunpack.c.l.s8.bf16 %v2063
    %v2428 = vunpack.c.l.s8.bf16 %v2064
    %v2429 = vunpack.c.l.s8.bf16 %v2065
    %v2430 = vunpack.c.h.s8.bf16 %v2059
    %v2431 = vunpack.c.h.s8.bf16 %v2060
    %v2432 = vunpack.c.h.s8.bf16 %v2061
    %v2433 = vunpack.c.h.s8.bf16 %v2062
    %v2434 = vunpack.c.h.s8.bf16 %v2063
    %v2435 = vunpack.c.h.s8.bf16 %v2064
    %v2436 = vunpack.c.h.s8.bf16 %v2065
    %v2437 = vunpack.c.l.s8.bf16 %v2066
    %v2438 = vunpack.c.l.s8.bf16 %v2067
    %v2439 = vunpack.c.l.s8.bf16 %v2068
    %v2440 = vunpack.c.l.s8.bf16 %v2069
    %v2441 = vunpack.c.l.s8.bf16 %v2070
    %v2442 = vunpack.c.l.s8.bf16 %v2071
    %v2443 = vunpack.c.l.s8.bf16 %v2072
    %v2444 = vunpack.c.h.s8.bf16 %v2066
    %v2445 = vunpack.c.h.s8.bf16 %v2067
    %v2446 = vunpack.c.h.s8.bf16 %v2068
    %v2447 = vunpack.c.h.s8.bf16 %v2069
    %v2448 = vunpack.c.h.s8.bf16 %v2070
    %v2449 = vunpack.c.h.s8.bf16 %v2071
    %v2450 = vunpack.c.h.s8.bf16 %v2072
    %v2451 = vunpack.c.l.s8.bf16 %v2073
    %v2452 = vunpack.c.l.s8.bf16 %v2074
    %v2453 = vunpack.c.l.s8.bf16 %v2075
    %v2454 = vunpack.c.l.s8.bf16 %v2076
    %v2455 = vunpack.c.l.s8.bf16 %v2077
    %v2456 = vunpack.c.l.s8.bf16 %v2078
    %v2457 = vunpack.c.l.s8.bf16 %v2079
    %v2458 = vunpack.c.h.s8.bf16 %v2073
    %v2459 = vunpack.c.h.s8.bf16 %v2074
    %v2460 = vunpack.c.h.s8.bf16 %v2075
    %v2461 = vunpack.c.h.s8.bf16 %v2076
    %v2462 = vunpack.c.h.s8.bf16 %v2077
    %v2463 = vunpack.c.h.s8.bf16 %v2078
    %v2464 = vunpack.c.h.s8.bf16 %v2079
    %v2465 = vunpack.c.l.s8.bf16 %v2080
    %v2466 = vunpack.c.l.s8.bf16 %v2081
    %v2467 = vunpack.c.l.s8.bf16 %v2082
    %v2468 = vunpack.c.l.s8.bf16 %v2083
    %v2469 = vunpack.c.l.s8.bf16 %v2084
    %v2470 = vunpack.c.l.s8.bf16 %v2085
    %v2471 = vunpack.c.l.s8.bf16 %v2086
    %v2472 = vunpack.c.h.s8.bf16 %v2080
    %v2473 = vunpack.c.h.s8.bf16 %v2081
    %v2474 = vunpack.c.h.s8.bf16 %v2082
    %v2475 = vunpack.c.h.s8.bf16 %v2083
    %v2476 = vunpack.c.h.s8.bf16 %v2084
    %v2477 = vunpack.c.h.s8.bf16 %v2085
    %v2478 = vunpack.c.h.s8.bf16 %v2086
    %v2479 = vunpack.c.l.s8.bf16 %v2087
    %v2480 = vunpack.c.l.s8.bf16 %v2088
    %v2481 = vunpack.c.l.s8.bf16 %v2089
    %v2482 = vunpack.c.l.s8.bf16 %v2090
    %v2483 = vunpack.c.l.s8.bf16 %v2091
    %v2484 = vunpack.c.l.s8.bf16 %v2092
    %v2485 = vunpack.c.l.s8.bf16 %v2093
    %v2486 = vunpack.c.h.s8.bf16 %v2087
    %v2487 = vunpack.c.h.s8.bf16 %v2088
    %v2488 = vunpack.c.h.s8.bf16 %v2089
    %v2489 = vunpack.c.h.s8.bf16 %v2090
    %v2490 = vunpack.c.h.s8.bf16 %v2091
    %v2491 = vunpack.c.h.s8.bf16 %v2092
    %v2492 = vunpack.c.h.s8.bf16 %v2093
    %v2493 = vunpack.c.l.s8.bf16 %v2094
    %v2494 = vunpack.c.l.s8.bf16 %v2095
    %v2495 = vunpack.c.l.s8.bf16 %v2096
    %v2496 = vunpack.c.l.s8.bf16 %v2097
    %v2497 = vunpack.c.l.s8.bf16 %v2098
    %v2498 = vunpack.c.l.s8.bf16 %v2099
    %v2499 = vunpack.c.l.s8.bf16 %v2100
    %v2500 = vunpack.c.h.s8.bf16 %v2094
    %v2501 = vunpack.c.h.s8.bf16 %v2095
    %v2502 = vunpack.c.h.s8.bf16 %v2096
    %v2503 = vunpack.c.h.s8.bf16 %v2097
    %v2504 = vunpack.c.h.s8.bf16 %v2098
    %v2505 = vunpack.c.h.s8.bf16 %v2099
    %v2506 = vunpack.c.h.s8.bf16 %v2100
    %v2507 = vunpack.c.l.s8.bf16 %v2101
    %v2508 = vunpack.c.l.s8.bf16 %v2102
    %v2509 = vunpack.c.l.s8.bf16 %v2103
    %v2510 = vunpack.c.l.s8.bf16 %v2104
    %v2511 = vunpack.c.l.s8.bf16 %v2105
    %v2512 = vunpack.c.l.s8.bf16 %v2106
    %v2513 = vunpack.c.l.s8.bf16 %v2107
    %v2514 = vunpack.c.h.s8.bf16 %v2101
    %v2515 = vunpack.c.h.s8.bf16 %v2102
    %v2516 = vunpack.c.h.s8.bf16 %v2103
    %v2517 = vunpack.c.h.s8.bf16 %v2104
    %v2518 = vunpack.c.h.s8.bf16 %v2105
    %v2519 = vunpack.c.h.s8.bf16 %v2106
    %v2520 = vunpack.c.h.s8.bf16 %v2107
    %v2521 = vunpack.c.l.s8.bf16 %v2108
    %v2522 = vunpack.c.l.s8.bf16 %v2109
    %v2523 = vunpack.c.l.s8.bf16 %v2110
    %v2524 = vunpack.c.l.s8.bf16 %v2111
    %v2525 = vunpack.c.l.s8.bf16 %v2112
    %v2526 = vunpack.c.l.s8.bf16 %v2113
    %v2527 = vunpack.c.l.s8.bf16 %v2114
    %v2528 = vunpack.c.h.s8.bf16 %v2108
    %v2529 = vunpack.c.h.s8.bf16 %v2109
    %v2530 = vunpack.c.h.s8.bf16 %v2110
    %v2531 = vunpack.c.h.s8.bf16 %v2111
    %v2532 = vunpack.c.h.s8.bf16 %v2112
    %v2533 = vunpack.c.h.s8.bf16 %v2113
    %v2534 = vunpack.c.h.s8.bf16 %v2114
    %v2535 = vunpack.c.l.s8.bf16 %v2115
    %v2536 = vunpack.c.l.s8.bf16 %v2116
    %v2537 = vunpack.c.l.s8.bf16 %v2117
    %v2538 = vunpack.c.l.s8.bf16 %v2118
    %v2539 = vunpack.c.l.s8.bf16 %v2119
    %v2540 = vunpack.c.l.s8.bf16 %v2120
    %v2541 = vunpack.c.l.s8.bf16 %v2121
    %v2542 = vunpack.c.h.s8.bf16 %v2115
    %v2543 = vunpack.c.h.s8.bf16 %v2116
    %v2544 = vunpack.c.h.s8.bf16 %v2117
    %v2545 = vunpack.c.h.s8.bf16 %v2118
    %v2546 = vunpack.c.h.s8.bf16 %v2119
    %v2547 = vunpack.c.h.s8.bf16 %v2120
    %v2548 = vunpack.c.h.s8.bf16 %v2121
    %v2549 = vunpack.c.l.s8.bf16 %v2122
    %v2550 = vunpack.c.l.s8.bf16 %v2123
    %v2551 = vunpack.c.l.s8.bf16 %v2124
    %v2552 = vunpack.c.l.s8.bf16 %v2125
    %v2553 = vunpack.c.l.s8.bf16 %v2126
    %v2554 = vunpack.c.l.s8.bf16 %v2127
    %v2555 = vunpack.c.l.s8.bf16 %v2128
    %v2556 = vunpack.c.h.s8.bf16 %v2122
    %v2557 = vunpack.c.h.s8.bf16 %v2123
    %v2558 = vunpack.c.h.s8.bf16 %v2124
    %v2559 = vunpack.c.h.s8.bf16 %v2125
    %v2560 = vunpack.c.h.s8.bf16 %v2126
    %v2561 = vunpack.c.h.s8.bf16 %v2127
    %v2562 = vunpack.c.h.s8.bf16 %v2128
    %v2563 = vunpack.c.l.s8.bf16 %v2129
    %v2564 = vunpack.c.l.s8.bf16 %v2130
    %v2565 = vunpack.c.l.s8.bf16 %v2131
    %v2566 = vunpack.c.l.s8.bf16 %v2132
    %v2567 = vunpack.c.l.s8.bf16 %v2133
    %v2568 = vunpack.c.l.s8.bf16 %v2134
    %v2569 = vunpack.c.l.s8.bf16 %v2135
    %v2570 = vunpack.c.h.s8.bf16 %v2129
    %v2571 = vunpack.c.h.s8.bf16 %v2130
    %v2572 = vunpack.c.h.s8.bf16 %v2131
    %v2573 = vunpack.c.h.s8.bf16 %v2132
    %v2574 = vunpack.c.h.s8.bf16 %v2133
    %v2575 = vunpack.c.h.s8.bf16 %v2134
    %v2576 = vunpack.c.h.s8.bf16 %v2135
    %v2577 = vunpack.c.l.s8.bf16 %v2136
    %v2578 = vunpack.c.l.s8.bf16 %v2137
    %v2579 = vunpack.c.l.s8.bf16 %v2138
    %v2580 = vunpack.c.l.s8.bf16 %v2139
    %v2581 = vunpack.c.l.s8.bf16 %v2140
    %v2582 = vunpack.c.l.s8.bf16 %v2141
    %v2583 = vunpack.c.l.s8.bf16 %v2142
    %v2584 = vunpack.c.h.s8.bf16 %v2136
    %v2585 = vunpack.c.h.s8.bf16 %v2137
    %v2586 = vunpack.c.h.s8.bf16 %v2138
    %v2587 = vunpack.c.h.s8.bf16 %v2139
    %v2588 = vunpack.c.h.s8.bf16 %v2140
    %v2589 = vunpack.c.h.s8.bf16 %v2141
    %v2590 = vunpack.c.h.s8.bf16 %v2142
    %2591 = vmatprep.subr.bf16.mxu0 %v2144
    %2592 = vmatpush1.bf16.msra.mxu0 %v2143
    %2593 = vmatprep.subr.bf16.mxu0 %v2151
    %2594 = vmatpush1.bf16.msra.mxu0 %v2150
    %2595 = vmatprep.subr.bf16.mxu0 %v2158
    %2596 = vmatpush1.bf16.msra.mxu0 %v2157
    %2597 = vmatprep.subr.bf16.mxu0 %v2165
    %2598 = vmatpush1.bf16.msra.mxu0 %v2164
    %2599 = vmatprep.subr.bf16.mxu0 %v2172
    %2600 = vmatpush1.bf16.msra.mxu0 %v2171
    %2601 = vmatprep.subr.bf16.mxu0 %v2179
    %2602 = vmatpush1.bf16.msra.mxu0 %v2178
    %2603 = vmatprep.subr.bf16.mxu0 %v2186
    %2604 = vmatpush1.bf16.msra.mxu0 %v2185
    %2605 = vmatprep.subr.bf16.mxu0 %v2193
    %2606 = vmatpush1.bf16.msra.mxu0 %v2192
    %2607 = vmatprep.subr.bf16.mxu0 %v2200
    %2608 = vmatpush1.bf16.msra.mxu0 %v2199
    %2609 = vmatprep.subr.bf16.mxu0 %v2207
    %2610 = vmatpush1.bf16.msra.mxu0 %v2206
    %2611 = vmatprep.subr.bf16.mxu0 %v2214
    %2612 = vmatpush1.bf16.msra.mxu0 %v2213
    %2613 = vmatprep.subr.bf16.mxu0 %v2221
    %2614 = vmatpush1.bf16.msra.mxu0 %v2220
    %2615 = vmatprep.subr.bf16.mxu0 %v2228
    %2616 = vmatpush1.bf16.msra.mxu0 %v2227
    %2617 = vmatprep.subr.bf16.mxu0 %v2235
    %2618 = vmatpush1.bf16.msra.mxu0 %v2234
    %2619 = vmatprep.subr.bf16.mxu0 %v2242
    %2620 = vmatpush1.bf16.msra.mxu0 %v2241
    %2621 = vmatprep.subr.bf16.mxu0 %v2249
    %2622 = vmatpush1.bf16.msra.mxu0 %v2248
    %2623 = vmatprep.mubr.bf16.mxu0 %v1912
    %2624 = vmatmul.mubr.bf16.gmra.mrb[0].mxu0 %v1911
    %v2625 = vpop.f32.mrb[0].mxu0
    %v2626 = vadd.f32 0.0, %v2625
    %v2627 = vpop.f32.mrb[0].mxu0
    %v2628 = vadd.f32 0.0, %v2627
    %v2629 = vpop.f32.mrb[0].mxu0
    %v2630 = vpop.f32.mrb[0].mxu0
    %2631 = vdwg.mxu0
    %2632 = vmatprep.subr.bf16.mxu0 %v2256
    %2633 = vmatpush1.bf16.msra.mxu0 %v2255
    %2634 = vmatprep.subr.bf16.mxu0 %v2263
    %2635 = vmatpush1.bf16.msra.mxu0 %v2262
    %2636 = vmatprep.subr.bf16.mxu0 %v2270
    %2637 = vmatpush1.bf16.msra.mxu0 %v2269
    %2638 = vmatprep.subr.bf16.mxu0 %v2277
    %2639 = vmatpush1.bf16.msra.mxu0 %v2276
    %2640 = vmatprep.subr.bf16.mxu0 %v2284
    %2641 = vmatpush1.bf16.msra.mxu0 %v2283
    %2642 = vmatprep.subr.bf16.mxu0 %v2291
    %2643 = vmatpush1.bf16.msra.mxu0 %v2290
    %2644 = vmatprep.subr.bf16.mxu0 %v2298
    %2645 = vmatpush1.bf16.msra.mxu0 %v2297
    %2646 = vmatprep.subr.bf16.mxu0 %v2305
    %2647 = vmatpush1.bf16.msra.mxu0 %v2304
    %2648 = vmatprep.subr.bf16.mxu0 %v2312
    %2649 = vmatpush1.bf16.msra.mxu0 %v2311
    %2650 = vmatprep.subr.bf16.mxu0 %v2319
    %2651 = vmatpush1.bf16.msra.mxu0 %v2318
    %2652 = vmatprep.subr.bf16.mxu0 %v2326
    %2653 = vmatpush1.bf16.msra.mxu0 %v2325
    %2654 = vmatprep.subr.bf16.mxu0 %v2333
    %2655 = vmatpush1.bf16.msra.mxu0 %v2332
    %2656 = vmatprep.subr.bf16.mxu0 %v2340
    %2657 = vmatpush1.bf16.msra.mxu0 %v2339
    %2658 = vmatprep.subr.bf16.mxu0 %v2347
    %2659 = vmatpush1.bf16.msra.mxu0 %v2346
    %2660 = vmatprep.subr.bf16.mxu0 %v2354
    %2661 = vmatpush1.bf16.msra.mxu0 %v2353
    %2662 = vmatprep.subr.bf16.mxu0 %v2361
    %2663 = vmatpush1.bf16.msra.mxu0 %v2360
    %2664 = vmatprep.mubr.bf16.mxu0 %v1914
    %2665 = vmatmul.mubr.bf16.gmra.mrb[0].mxu0 %v1913
    %v2666 = vpop.f32.mrb[0].mxu0
    %v2667 = vadd.f32 %v2626, %v2666
    %v2668 = vpop.f32.mrb[0].mxu0
    %v2669 = vadd.f32 %v2628, %v2668
    %v2670 = vpop.f32.mrb[0].mxu0
    %v2671 = vpop.f32.mrb[0].mxu0
    %2672 = vdwg.mxu0
    %2673 = vmatprep.subr.bf16.mxu0 %v2368
    %2674 = vmatpush1.bf16.msra.mxu0 %v2367
    %2675 = vmatprep.subr.bf16.mxu0 %v2375
    %2676 = vmatpush1.bf16.msra.mxu0 %v2374
    %2677 = vmatprep.subr.bf16.mxu0 %v2382
    %2678 = vmatpush1.bf16.msra.mxu0 %v2381
    %2679 = vmatprep.subr.bf16.mxu0 %v2389
    %2680 = vmatpush1.bf16.msra.mxu0 %v2388
    %2681 = vmatprep.subr.bf16.mxu0 %v2396
    %2682 = vmatpush1.bf16.msra.mxu0 %v2395
    %2683 = vmatprep.subr.bf16.mxu0 %v2403
    %2684 = vmatpush1.bf16.msra.mxu0 %v2402
    %2685 = vmatprep.subr.bf16.mxu0 %v2410
    %2686 = vmatpush1.bf16.msra.mxu0 %v2409
    %2687 = vmatprep.subr.bf16.mxu0 %v2417
    %2688 = vmatpush1.bf16.msra.mxu0 %v2416
    %2689 = vmatprep.subr.bf16.mxu0 %v2424
    %2690 = vmatpush1.bf16.msra.mxu0 %v2423
    %2691 = vmatprep.subr.bf16.mxu0 %v2431
    %2692 = vmatpush1.bf16.msra.mxu0 %v2430
    %2693 = vmatprep.subr.bf16.mxu0 %v2438
    %2694 = vmatpush1.bf16.msra.mxu0 %v2437
    %2695 = vmatprep.subr.bf16.mxu0 %v2445
    %2696 = vmatpush1.bf16.msra.mxu0 %v2444
    %2697 = vmatprep.subr.bf16.mxu0 %v2452
    %2698 = vmatpush1.bf16.msra.mxu0 %v2451
    %2699 = vmatprep.subr.bf16.mxu0 %v2459
    %2700 = vmatpush1.bf16.msra.mxu0 %v2458
    %2701 = vmatprep.subr.bf16.mxu0 %v2466
    %2702 = vmatpush1.bf16.msra.mxu0 %v2465
    %2703 = vmatprep.subr.bf16.mxu0 %v2473
    %2704 = vmatpush1.bf16.msra.mxu0 %v2472
    %2705 = vmatprep.mubr.bf16.mxu0 %v1916
    %2706 = vmatmul.mubr.bf16.gmra.mrb[0].mxu0 %v1915
    %v2707 = vpop.f32.mrb[0].mxu0
    %v2708 = vadd.f32 %v2667, %v2707
    %v2709 = vpop.f32.mrb[0].mxu0
    %v2710 = vadd.f32 %v2669, %v2709
    %v2711 = vpop.f32.mrb[0].mxu0
    %v2712 = vpop.f32.mrb[0].mxu0
    %2713 = vdwg.mxu0
    %2714 = vmatprep.subr.bf16.mxu0 %v2480
    %2715 = vmatpush1.bf16.msra.mxu0 %v2479
    %2716 = vmatprep.subr.bf16.mxu0 %v2487
    %2717 = vmatpush1.bf16.msra.mxu0 %v2486
    %2718 = vmatprep.subr.bf16.mxu0 %v2494
    %2719 = vmatpush1.bf16.msra.mxu0 %v2493
    %2720 = vmatprep.subr.bf16.mxu0 %v2501
    %2721 = vmatpush1.bf16.msra.mxu0 %v2500
    %2722 = vmatprep.subr.bf16.mxu0 %v2508
    %2723 = vmatpush1.bf16.msra.mxu0 %v2507
    %2724 = vmatprep.subr.bf16.mxu0 %v2515
    %2725 = vmatpush1.bf16.msra.mxu0 %v2514
    %2726 = vmatprep.subr.bf16.mxu0 %v2522
    %2727 = vmatpush1.bf16.msra.mxu0 %v2521
    %2728 = vmatprep.subr.bf16.mxu0 %v2529
    %2729 = vmatpush1.bf16.msra.mxu0 %v2528
    %2730 = vmatprep.subr.bf16.mxu0 %v2536
    %2731 = vmatpush1.bf16.msra.mxu0 %v2535
    %2732 = vmatprep.subr.bf16.mxu0 %v2543
    %2733 = vmatpush1.bf16.msra.mxu0 %v2542
    %2734 = vmatprep.subr.bf16.mxu0 %v2550
    %2735 = vmatpush1.bf16.msra.mxu0 %v2549
    %2736 = vmatprep.subr.bf16.mxu0 %v2557
    %2737 = vmatpush1.bf16.msra.mxu0 %v2556
    %2738 = vmatprep.subr.bf16.mxu0 %v2564
    %2739 = vmatpush1.bf16.msra.mxu0 %v2563
    %2740 = vmatprep.subr.bf16.mxu0 %v2571
    %2741 = vmatpush1.bf16.msra.mxu0 %v2570
    %2742 = vmatprep.subr.bf16.mxu0 %v2578
    %2743 = vmatpush1.bf16.msra.mxu0 %v2577
    %2744 = vmatprep.subr.bf16.mxu0 %v2585
    %2745 = vmatpush1.bf16.msra.mxu0 %v2584
    %2746 = vmatprep.mubr.bf16.mxu0 %v1918
    %2747 = vmatmul.mubr.bf16.gmra.mrb[0].mxu0 %v1917
    %v2748 = vpop.f32.mrb[0].mxu0
    %v2749 = vadd.f32 %v2708, %v2748
    %v2750 = vpop.f32.mrb[0].mxu0
    %v2751 = vadd.f32 %v2710, %v2750
    %v2752 = vpop.f32.mrb[0].mxu0
    %v2753 = vpop.f32.mrb[0].mxu0
    %2754 = vdwg.mxu0
    %2755 = vmatprep.subr.bf16.mxu0 %v2146
    %2756 = vmatpush1.bf16.msra.mxu0 %v2145
    %2757 = vmatprep.subr.bf16.mxu0 %v2153
    %2758 = vmatpush1.bf16.msra.mxu0 %v2152
    %2759 = vmatprep.subr.bf16.mxu0 %v2160
    %2760 = vmatpush1.bf16.msra.mxu0 %v2159
    %2761 = vmatprep.subr.bf16.mxu0 %v2167
    %2762 = vmatpush1.bf16.msra.mxu0 %v2166
    %2763 = vmatprep.subr.bf16.mxu0 %v2174
    %2764 = vmatpush1.bf16.msra.mxu0 %v2173
    %2765 = vmatprep.subr.bf16.mxu0 %v2181
    %2766 = vmatpush1.bf16.msra.mxu0 %v2180
    %2767 = vmatprep.subr.bf16.mxu0 %v2188
    %2768 = vmatpush1.bf16.msra.mxu0 %v2187
    %2769 = vmatprep.subr.bf16.mxu0 %v2195
    %2770 = vmatpush1.bf16.msra.mxu0 %v2194
    %2771 = vmatprep.subr.bf16.mxu0 %v2202
    %2772 = vmatpush1.bf16.msra.mxu0 %v2201
    %2773 = vmatprep.subr.bf16.mxu0 %v2209
    %2774 = vmatpush1.bf16.msra.mxu0 %v2208
    %2775 = vmatprep.subr.bf16.mxu0 %v2216
    %2776 = vmatpush1.bf16.msra.mxu0 %v2215
    %2777 = vmatprep.subr.bf16.mxu0 %v2223
    %2778 = vmatpush1.bf16.msra.mxu0 %v2222
    %2779 = vmatprep.subr.bf16.mxu0 %v2230
    %2780 = vmatpush1.bf16.msra.mxu0 %v2229
    %2781 = vmatprep.subr.bf16.mxu0 %v2237
    %2782 = vmatpush1.bf16.msra.mxu0 %v2236
    %2783 = vmatprep.subr.bf16.mxu0 %v2244
    %2784 = vmatpush1.bf16.msra.mxu0 %v2243
    %2785 = vmatprep.subr.bf16.mxu0 %v2251
    %2786 = vmatpush1.bf16.msra.mxu0 %v2250
    %2787 = vmatprep.mubr.bf16.mxu0 %v1912
    %2788 = vmatmul.mubr.bf16.gmra.mrb[0].mxu0 %v1911
    %v2789 = vpop.f32.mrb[0].mxu0
    %v2790 = vadd.f32 0.0, %v2789
    %v2791 = vpop.f32.mrb[0].mxu0
    %v2792 = vadd.f32 0.0, %v2791
    %v2793 = vpop.f32.mrb[0].mxu0
    %v2794 = vpop.f32.mrb[0].mxu0
    %2795 = vdwg.mxu0
    %2796 = vmatprep.subr.bf16.mxu0 %v2258
    %2797 = vmatpush1.bf16.msra.mxu0 %v2257
    %2798 = vmatprep.subr.bf16.mxu0 %v2265
    %2799 = vmatpush1.bf16.msra.mxu0 %v2264
    %2800 = vmatprep.subr.bf16.mxu0 %v2272
    %2801 = vmatpush1.bf16.msra.mxu0 %v2271
    %2802 = vmatprep.subr.bf16.mxu0 %v2279
    %2803 = vmatpush1.bf16.msra.mxu0 %v2278
    %2804 = vmatprep.subr.bf16.mxu0 %v2286
    %2805 = vmatpush1.bf16.msra.mxu0 %v2285
    %2806 = vmatprep.subr.bf16.mxu0 %v2293
    %2807 = vmatpush1.bf16.msra.mxu0 %v2292
    %2808 = vmatprep.subr.bf16.mxu0 %v2300
    %2809 = vmatpush1.bf16.msra.mxu0 %v2299
    %2810 = vmatprep.subr.bf16.mxu0 %v2307
    %2811 = vmatpush1.bf16.msra.mxu0 %v2306
    %2812 = vmatprep.subr.bf16.mxu0 %v2314
    %2813 = vmatpush1.bf16.msra.mxu0 %v2313
    %2814 = vmatprep.subr.bf16.mxu0 %v2321
    %2815 = vmatpush1.bf16.msra.mxu0 %v2320
    %2816 = vmatprep.subr.bf16.mxu0 %v2328
    %2817 = vmatpush1.bf16.msra.mxu0 %v2327
    %2818 = vmatprep.subr.bf16.mxu0 %v2335
    %2819 = vmatpush1.bf16.msra.mxu0 %v2334
    %2820 = vmatprep.subr.bf16.mxu0 %v2342
    %2821 = vmatpush1.bf16.msra.mxu0 %v2341
    %2822 = vmatprep.subr.bf16.mxu0 %v2349
    %2823 = vmatpush1.bf16.msra.mxu0 %v2348
    %2824 = vmatprep.subr.bf16.mxu0 %v2356
    %2825 = vmatpush1.bf16.msra.mxu0 %v2355
    %2826 = vmatprep.subr.bf16.mxu0 %v2363
    %2827 = vmatpush1.bf16.msra.mxu0 %v2362
    %2828 = vmatprep.mubr.bf16.mxu0 %v1914
    %2829 = vmatmul.mubr.bf16.gmra.mrb[0].mxu0 %v1913
    %v2830 = vpop.f32.mrb[0].mxu0
    %v2831 = vadd.f32 %v2790, %v2830
    %v2832 = vpop.f32.mrb[0].mxu0
    %v2833 = vadd.f32 %v2792, %v2832
    %v2834 = vpop.f32.mrb[0].mxu0
    %v2835 = vpop.f32.mrb[0].mxu0
    %2836 = vdwg.mxu0
    %2837 = vmatprep.subr.bf16.mxu0 %v2370
    %2838 = vmatpush1.bf16.msra.mxu0 %v2369
    %2839 = vmatprep.subr.bf16.mxu0 %v2377
    %2840 = vmatpush1.bf16.msra.mxu0 %v2376
    %2841 = vmatprep.subr.bf16.mxu0 %v2384
    %2842 = vmatpush1.bf16.msra.mxu0 %v2383
    %2843 = vmatprep.subr.bf16.mxu0 %v2391
    %2844 = vmatpush1.bf16.msra.mxu0 %v2390
    %2845 = vmatprep.subr.bf16.mxu0 %v2398
    %2846 = vmatpush1.bf16.msra.mxu0 %v2397
    %2847 = vmatprep.subr.bf16.mxu0 %v2405
    %2848 = vmatpush1.bf16.msra.mxu0 %v2404
    %2849 = vmatprep.subr.bf16.mxu0 %v2412
    %2850 = vmatpush1.bf16.msra.mxu0 %v2411
    %2851 = vmatprep.subr.bf16.mxu0 %v2419
    %2852 = vmatpush1.bf16.msra.mxu0 %v2418
    %2853 = vmatprep.subr.bf16.mxu0 %v2426
    %2854 = vmatpush1.bf16.msra.mxu0 %v2425
    %2855 = vmatprep.subr.bf16.mxu0 %v2433
    %2856 = vmatpush1.bf16.msra.mxu0 %v2432
    %2857 = vmatprep.subr.bf16.mxu0 %v2440
    %2858 = vmatpush1.bf16.msra.mxu0 %v2439
    %2859 = vmatprep.subr.bf16.mxu0 %v2447
    %2860 = vmatpush1.bf16.msra.mxu0 %v2446
    %2861 = vmatprep.subr.bf16.mxu0 %v2454
    %2862 = vmatpush1.bf16.msra.mxu0 %v2453
    %2863 = vmatprep.subr.bf16.mxu0 %v2461
    %2864 = vmatpush1.bf16.msra.mxu0 %v2460
    %2865 = vmatprep.subr.bf16.mxu0 %v2468
    %2866 = vmatpush1.bf16.msra.mxu0 %v2467
    %2867 = vmatprep.subr.bf16.mxu0 %v2475
    %2868 = vmatpush1.bf16.msra.mxu0 %v2474
    %2869 = vmatprep.mubr.bf16.mxu0 %v1916
    %2870 = vmatmul.mubr.bf16.gmra.mrb[0].mxu0 %v1915
    %v2871 = vpop.f32.mrb[0].mxu0
    %v2872 = vadd.f32 %v2831, %v2871
    %v2873 = vpop.f32.mrb[0].mxu0
    %v2874 = vadd.f32 %v2833, %v2873
    %v2875 = vpop.f32.mrb[0].mxu0
    %v2876 = vpop.f32.mrb[0].mxu0
    %2877 = vdwg.mxu0
    %2878 = vmatprep.subr.bf16.mxu0 %v2482
    %2879 = vmatpush1.bf16.msra.mxu0 %v2481
    %2880 = vmatprep.subr.bf16.mxu0 %v2489
    %2881 = vmatpush1.bf16.msra.mxu0 %v2488
    %2882 = vmatprep.subr.bf16.mxu0 %v2496
    %2883 = vmatpush1.bf16.msra.mxu0 %v2495
    %2884 = vmatprep.subr.bf16.mxu0 %v2503
    %2885 = vmatpush1.bf16.msra.mxu0 %v2502
    %2886 = vmatprep.subr.bf16.mxu0 %v2510
    %2887 = vmatpush1.bf16.msra.mxu0 %v2509
    %2888 = vmatprep.subr.bf16.mxu0 %v2517
    %2889 = vmatpush1.bf16.msra.mxu0 %v2516
    %2890 = vmatprep.subr.bf16.mxu0 %v2524
    %2891 = vmatpush1.bf16.msra.mxu0 %v2523
    %2892 = vmatprep.subr.bf16.mxu0 %v2531
    %2893 = vmatpush1.bf16.msra.mxu0 %v2530
    %2894 = vmatprep.subr.bf16.mxu0 %v2538
    %2895 = vmatpush1.bf16.msra.mxu0 %v2537
    %2896 = vmatprep.subr.bf16.mxu0 %v2545
    %2897 = vmatpush1.bf16.msra.mxu0 %v2544
    %2898 = vmatprep.subr.bf16.mxu0 %v2552
    %2899 = vmatpush1.bf16.msra.mxu0 %v2551
    %2900 = vmatprep.subr.bf16.mxu0 %v2559
    %2901 = vmatpush1.bf16.msra.mxu0 %v2558
    %2902 = vmatprep.subr.bf16.mxu0 %v2566
    %2903 = vmatpush1.bf16.msra.mxu0 %v2565
    %2904 = vmatprep.subr.bf16.mxu0 %v2573
    %2905 = vmatpush1.bf16.msra.mxu0 %v2572
    %2906 = vmatprep.subr.bf16.mxu0 %v2580
    %2907 = vmatpush1.bf16.msra.mxu0 %v2579
    %2908 = vmatprep.subr.bf16.mxu0 %v2587
    %2909 = vmatpush1.bf16.msra.mxu0 %v2586
    %2910 = vmatprep.mubr.bf16.mxu0 %v1918
    %2911 = vmatmul.mubr.bf16.gmra.mrb[0].mxu0 %v1917
    %v2912 = vpop.f32.mrb[0].mxu0
    %v2913 = vadd.f32 %v2872, %v2912
    %v2914 = vpop.f32.mrb[0].mxu0
    %v2915 = vadd.f32 %v2874, %v2914
    %v2916 = vpop.f32.mrb[0].mxu0
    %v2917 = vpop.f32.mrb[0].mxu0
    %2918 = vdwg.mxu0
    %2919 = vmatprep.subr.bf16.mxu0 %v2148
    %2920 = vmatpush1.bf16.msra.mxu0 %v2147
    %2921 = vmatprep.subr.bf16.mxu0 %v2155
    %2922 = vmatpush1.bf16.msra.mxu0 %v2154
    %2923 = vmatprep.subr.bf16.mxu0 %v2162
    %2924 = vmatpush1.bf16.msra.mxu0 %v2161
    %2925 = vmatprep.subr.bf16.mxu0 %v2169
    %2926 = vmatpush1.bf16.msra.mxu0 %v2168
    %2927 = vmatprep.subr.bf16.mxu0 %v2176
    %2928 = vmatpush1.bf16.msra.mxu0 %v2175
    %2929 = vmatprep.subr.bf16.mxu0 %v2183
    %2930 = vmatpush1.bf16.msra.mxu0 %v2182
    %2931 = vmatprep.subr.bf16.mxu0 %v2190
    %2932 = vmatpush1.bf16.msra.mxu0 %v2189
    %2933 = vmatprep.subr.bf16.mxu0 %v2197
    %2934 = vmatpush1.bf16.msra.mxu0 %v2196
    %2935 = vmatprep.subr.bf16.mxu0 %v2204
    %2936 = vmatpush1.bf16.msra.mxu0 %v2203
    %2937 = vmatprep.subr.bf16.mxu0 %v2211
    %2938 = vmatpush1.bf16.msra.mxu0 %v2210
    %2939 = vmatprep.subr.bf16.mxu0 %v2218
    %2940 = vmatpush1.bf16.msra.mxu0 %v2217
    %2941 = vmatprep.subr.bf16.mxu0 %v2225
    %2942 = vmatpush1.bf16.msra.mxu0 %v2224
    %2943 = vmatprep.subr.bf16.mxu0 %v2232
    %2944 = vmatpush1.bf16.msra.mxu0 %v2231
    %2945 = vmatprep.subr.bf16.mxu0 %v2239
    %2946 = vmatpush1.bf16.msra.mxu0 %v2238
    %2947 = vmatprep.subr.bf16.mxu0 %v2246
    %2948 = vmatpush1.bf16.msra.mxu0 %v2245
    %2949 = vmatprep.subr.bf16.mxu0 %v2253
    %2950 = vmatpush1.bf16.msra.mxu0 %v2252
    %2951 = vmatprep.mubr.bf16.mxu0 %v1912
    %2952 = vmatmul.mubr.bf16.gmra.mrb[0].mxu0 %v1911
    %v2953 = vpop.f32.mrb[0].mxu0
    %v2954 = vadd.f32 0.0, %v2953
    %v2955 = vpop.f32.mrb[0].mxu0
    %v2956 = vadd.f32 0.0, %v2955
    %v2957 = vpop.f32.mrb[0].mxu0
    %v2958 = vpop.f32.mrb[0].mxu0
    %2959 = vdwg.mxu0
    %2960 = vmatprep.subr.bf16.mxu0 %v2260
    %2961 = vmatpush1.bf16.msra.mxu0 %v2259
    %2962 = vmatprep.subr.bf16.mxu0 %v2267
    %2963 = vmatpush1.bf16.msra.mxu0 %v2266
    %2964 = vmatprep.subr.bf16.mxu0 %v2274
    %2965 = vmatpush1.bf16.msra.mxu0 %v2273
    %2966 = vmatprep.subr.bf16.mxu0 %v2281
    %2967 = vmatpush1.bf16.msra.mxu0 %v2280
    %2968 = vmatprep.subr.bf16.mxu0 %v2288
    %2969 = vmatpush1.bf16.msra.mxu0 %v2287
    %2970 = vmatprep.subr.bf16.mxu0 %v2295
    %2971 = vmatpush1.bf16.msra.mxu0 %v2294
    %2972 = vmatprep.subr.bf16.mxu0 %v2302
    %2973 = vmatpush1.bf16.msra.mxu0 %v2301
    %2974 = vmatprep.subr.bf16.mxu0 %v2309
    %2975 = vmatpush1.bf16.msra.mxu0 %v2308
    %2976 = vmatprep.subr.bf16.mxu0 %v2316
    %2977 = vmatpush1.bf16.msra.mxu0 %v2315
    %2978 = vmatprep.subr.bf16.mxu0 %v2323
    %2979 = vmatpush1.bf16.msra.mxu0 %v2322
    %2980 = vmatprep.subr.bf16.mxu0 %v2330
    %2981 = vmatpush1.bf16.msra.mxu0 %v2329
    %2982 = vmatprep.subr.bf16.mxu0 %v2337
    %2983 = vmatpush1.bf16.msra.mxu0 %v2336
    %2984 = vmatprep.subr.bf16.mxu0 %v2344
    %2985 = vmatpush1.bf16.msra.mxu0 %v2343
    %2986 = vmatprep.subr.bf16.mxu0 %v2351
    %2987 = vmatpush1.bf16.msra.mxu0 %v2350
    %2988 = vmatprep.subr.bf16.mxu0 %v2358
    %2989 = vmatpush1.bf16.msra.mxu0 %v2357
    %2990 = vmatprep.subr.bf16.mxu0 %v2365
    %2991 = vmatpush1.bf16.msra.mxu0 %v2364
    %2992 = vmatprep.mubr.bf16.mxu0 %v1914
    %2993 = vmatmul.mubr.bf16.gmra.mrb[0].mxu0 %v1913
    %v2994 = vpop.f32.mrb[0].mxu0
    %v2995 = vadd.f32 %v2954, %v2994
    %v2996 = vpop.f32.mrb[0].mxu0
    %v2997 = vadd.f32 %v2956, %v2996
    %v2998 = vpop.f32.mrb[0].mxu0
    %v2999 = vpop.f32.mrb[0].mxu0
    %3000 = vdwg.mxu0
    %3001 = vmatprep.subr.bf16.mxu0 %v2372
    %3002 = vmatpush1.bf16.msra.mxu0 %v2371
    %3003 = vmatprep.subr.bf16.mxu0 %v2379
    %3004 = vmatpush1.bf16.msra.mxu0 %v2378
    %3005 = vmatprep.subr.bf16.mxu0 %v2386
    %3006 = vmatpush1.bf16.msra.mxu0 %v2385
    %3007 = vmatprep.subr.bf16.mxu0 %v2393
    %3008 = vmatpush1.bf16.msra.mxu0 %v2392
    %3009 = vmatprep.subr.bf16.mxu0 %v2400
    %3010 = vmatpush1.bf16.msra.mxu0 %v2399
    %3011 = vmatprep.subr.bf16.mxu0 %v2407
    %3012 = vmatpush1.bf16.msra.mxu0 %v2406
    %3013 = vmatprep.subr.bf16.mxu0 %v2414
    %3014 = vmatpush1.bf16.msra.mxu0 %v2413
    %3015 = vmatprep.subr.bf16.mxu0 %v2421
    %3016 = vmatpush1.bf16.msra.mxu0 %v2420
    %3017 = vmatprep.subr.bf16.mxu0 %v2428
    %3018 = vmatpush1.bf16.msra.mxu0 %v2427
    %3019 = vmatprep.subr.bf16.mxu0 %v2435
    %3020 = vmatpush1.bf16.msra.mxu0 %v2434
    %3021 = vmatprep.subr.bf16.mxu0 %v2442
    %3022 = vmatpush1.bf16.msra.mxu0 %v2441
    %3023 = vmatprep.subr.bf16.mxu0 %v2449
    %3024 = vmatpush1.bf16.msra.mxu0 %v2448
    %3025 = vmatprep.subr.bf16.mxu0 %v2456
    %3026 = vmatpush1.bf16.msra.mxu0 %v2455
    %3027 = vmatprep.subr.bf16.mxu0 %v2463
    %3028 = vmatpush1.bf16.msra.mxu0 %v2462
    %3029 = vmatprep.subr.bf16.mxu0 %v2470
    %3030 = vmatpush1.bf16.msra.mxu0 %v2469
    %3031 = vmatprep.subr.bf16.mxu0 %v2477
    %3032 = vmatpush1.bf16.msra.mxu0 %v2476
    %3033 = vmatprep.mubr.bf16.mxu0 %v1916
    %3034 = vmatmul.mubr.bf16.gmra.mrb[0].mxu0 %v1915
    %v3035 = vpop.f32.mrb[0].mxu0
    %v3036 = vadd.f32 %v2995, %v3035
    %v3037 = vpop.f32.mrb[0].mxu0
    %v3038 = vadd.f32 %v2997, %v3037
    %v3039 = vpop.f32.mrb[0].mxu0
    %v3040 = vpop.f32.mrb[0].mxu0
    %3041 = vdwg.mxu0
    %3042 = vmatprep.subr.bf16.mxu0 %v2484
    %3043 = vmatpush1.bf16.msra.mxu0 %v2483
    %3044 = vmatprep.subr.bf16.mxu0 %v2491
    %3045 = vmatpush1.bf16.msra.mxu0 %v2490
    %3046 = vmatprep.subr.bf16.mxu0 %v2498
    %3047 = vmatpush1.bf16.msra.mxu0 %v2497
    %3048 = vmatprep.subr.bf16.mxu0 %v2505
    %3049 = vmatpush1.bf16.msra.mxu0 %v2504
    %3050 = vmatprep.subr.bf16.mxu0 %v2512
    %3051 = vmatpush1.bf16.msra.mxu0 %v2511
    %3052 = vmatprep.subr.bf16.mxu0 %v2519
    %3053 = vmatpush1.bf16.msra.mxu0 %v2518
    %3054 = vmatprep.subr.bf16.mxu0 %v2526
    %3055 = vmatpush1.bf16.msra.mxu0 %v2525
    %3056 = vmatprep.subr.bf16.mxu0 %v2533
    %3057 = vmatpush1.bf16.msra.mxu0 %v2532
    %3058 = vmatprep.subr.bf16.mxu0 %v2540
    %3059 = vmatpush1.bf16.msra.mxu0 %v2539
    %3060 = vmatprep.subr.bf16.mxu0 %v2547
    %3061 = vmatpush1.bf16.msra.mxu0 %v2546
    %3062 = vmatprep.subr.bf16.mxu0 %v2554
    %3063 = vmatpush1.bf16.msra.mxu0 %v2553
    %3064 = vmatprep.subr.bf16.mxu0 %v2561
    %3065 = vmatpush1.bf16.msra.mxu0 %v2560
    %3066 = vmatprep.subr.bf16.mxu0 %v2568
    %3067 = vmatpush1.bf16.msra.mxu0 %v2567
    %3068 = vmatprep.subr.bf16.mxu0 %v2575
    %3069 = vmatpush1.bf16.msra.mxu0 %v2574
    %3070 = vmatprep.subr.bf16.mxu0 %v2582
    %3071 = vmatpush1.bf16.msra.mxu0 %v2581
    %3072 = vmatprep.subr.bf16.mxu0 %v2589
    %3073 = vmatpush1.bf16.msra.mxu0 %v2588
    %3074 = vmatprep.mubr.bf16.mxu0 %v1918
    %3075 = vmatmul.mubr.bf16.gmra.mrb[0].mxu0 %v1917
    %v3076 = vpop.f32.mrb[0].mxu0
    %v3077 = vadd.f32 %v3036, %v3076
    %v3078 = vpop.f32.mrb[0].mxu0
    %v3079 = vadd.f32 %v3038, %v3078
    %v3080 = vpop.f32.mrb[0].mxu0
    %v3081 = vpop.f32.mrb[0].mxu0
    %3082 = vdwg.mxu0
    %3083 = vmatprep.subr.bf16.mxu0 0
    %3084 = vmatpush1.bf16.msra.mxu0 %v2149
    %3085 = vmatprep.subr.bf16.mxu0 0
    %3086 = vmatpush1.bf16.msra.mxu0 %v2156
    %3087 = vmatprep.subr.bf16.mxu0 0
    %3088 = vmatpush1.bf16.msra.mxu0 %v2163
    %3089 = vmatprep.subr.bf16.mxu0 0
    %3090 = vmatpush1.bf16.msra.mxu0 %v2170
    %3091 = vmatprep.subr.bf16.mxu0 0
    %3092 = vmatpush1.bf16.msra.mxu0 %v2177
    %3093 = vmatprep.subr.bf16.mxu0 0
    %3094 = vmatpush1.bf16.msra.mxu0 %v2184
    %3095 = vmatprep.subr.bf16.mxu0 0
    %3096 = vmatpush1.bf16.msra.mxu0 %v2191
    %3097 = vmatprep.subr.bf16.mxu0 0
    %3098 = vmatpush1.bf16.msra.mxu0 %v2198
    %3099 = vmatprep.subr.bf16.mxu0 0
    %3100 = vmatpush1.bf16.msra.mxu0 %v2205
    %3101 = vmatprep.subr.bf16.mxu0 0
    %3102 = vmatpush1.bf16.msra.mxu0 %v2212
    %3103 = vmatprep.subr.bf16.mxu0 0
    %3104 = vmatpush1.bf16.msra.mxu0 %v2219
    %3105 = vmatprep.subr.bf16.mxu0 0
    %3106 = vmatpush1.bf16.msra.mxu0 %v2226
    %3107 = vmatprep.subr.bf16.mxu0 0
    %3108 = vmatpush1.bf16.msra.mxu0 %v2233
    %3109 = vmatprep.subr.bf16.mxu0 0
    %3110 = vmatpush1.bf16.msra.mxu0 %v2240
    %3111 = vmatprep.subr.bf16.mxu0 0
    %3112 = vmatpush1.bf16.msra.mxu0 %v2247
    %3113 = vmatprep.subr.bf16.mxu0 0
    %3114 = vmatpush1.bf16.msra.mxu0 %v2254
    %3115 = vmatprep.mubr.bf16.mxu0 %v1912
    %3116 = vmatmul.mubr.bf16.gmra.mrb[0].mxu0 %v1911
    %v3117 = vpop.f32.mrb[0].mxu0
    %v3118 = vadd.f32 0.0, %v3117
    %v3119 = vpop.f32.mrb[0].mxu0
    %v3120 = vpop.f32.mrb[0].mxu0
    %v3121 = vpop.f32.mrb[0].mxu0
    %3122 = vdwg.mxu0
    %3123 = vmatprep.subr.bf16.mxu0 0
    %3124 = vmatpush1.bf16.msra.mxu0 %v2261
    %3125 = vmatprep.subr.bf16.mxu0 0
    %3126 = vmatpush1.bf16.msra.mxu0 %v2268
    %3127 = vmatprep.subr.bf16.mxu0 0
    %3128 = vmatpush1.bf16.msra.mxu0 %v2275
    %3129 = vmatprep.subr.bf16.mxu0 0
    %3130 = vmatpush1.bf16.msra.mxu0 %v2282
    %3131 = vmatprep.subr.bf16.mxu0 0
    %3132 = vmatpush1.bf16.msra.mxu0 %v2289
    %3133 = vmatprep.subr.bf16.mxu0 0
    %3134 = vmatpush1.bf16.msra.mxu0 %v2296
    %3135 = vmatprep.subr.bf16.mxu0 0
    %3136 = vmatpush1.bf16.msra.mxu0 %v2303
    %3137 = vmatprep.subr.bf16.mxu0 0
    %3138 = vmatpush1.bf16.msra.mxu0 %v2310
    %3139 = vmatprep.subr.bf16.mxu0 0
    %3140 = vmatpush1.bf16.msra.mxu0 %v2317
    %3141 = vmatprep.subr.bf16.mxu0 0
    %3142 = vmatpush1.bf16.msra.mxu0 %v2324
    %3143 = vmatprep.subr.bf16.mxu0 0
    %3144 = vmatpush1.bf16.msra.mxu0 %v2331
    %3145 = vmatprep.subr.bf16.mxu0 0
    %3146 = vmatpush1.bf16.msra.mxu0 %v2338
    %3147 = vmatprep.subr.bf16.mxu0 0
    %3148 = vmatpush1.bf16.msra.mxu0 %v2345
    %3149 = vmatprep.subr.bf16.mxu0 0
    %3150 = vmatpush1.bf16.msra.mxu0 %v2352
    %3151 = vmatprep.subr.bf16.mxu0 0
    %3152 = vmatpush1.bf16.msra.mxu0 %v2359
    %3153 = vmatprep.subr.bf16.mxu0 0
    %3154 = vmatpush1.bf16.msra.mxu0 %v2366
    %3155 = vmatprep.mubr.bf16.mxu0 %v1914
    %3156 = vmatmul.mubr.bf16.gmra.mrb[0].mxu0 %v1913
    %v3157 = vpop.f32.mrb[0].mxu0
    %v3158 = vadd.f32 %v3118, %v3157
    %v3159 = vpop.f32.mrb[0].mxu0
    %v3160 = vpop.f32.mrb[0].mxu0
    %v3161 = vpop.f32.mrb[0].mxu0
    %3162 = vdwg.mxu0
    %3163 = vmatprep.subr.bf16.mxu0 0
    %3164 = vmatpush1.bf16.msra.mxu0 %v2373
    %3165 = vmatprep.subr.bf16.mxu0 0
    %3166 = vmatpush1.bf16.msra.mxu0 %v2380
    %3167 = vmatprep.subr.bf16.mxu0 0
    %3168 = vmatpush1.bf16.msra.mxu0 %v2387
    %3169 = vmatprep.subr.bf16.mxu0 0
    %3170 = vmatpush1.bf16.msra.mxu0 %v2394
    %3171 = vmatprep.subr.bf16.mxu0 0
    %3172 = vmatpush1.bf16.msra.mxu0 %v2401
    %3173 = vmatprep.subr.bf16.mxu0 0
    %3174 = vmatpush1.bf16.msra.mxu0 %v2408
    %3175 = vmatprep.subr.bf16.mxu0 0
    %3176 = vmatpush1.bf16.msra.mxu0 %v2415
    %3177 = vmatprep.subr.bf16.mxu0 0
    %3178 = vmatpush1.bf16.msra.mxu0 %v2422
    %3179 = vmatprep.subr.bf16.mxu0 0
    %3180 = vmatpush1.bf16.msra.mxu0 %v2429
    %3181 = vmatprep.subr.bf16.mxu0 0
    %3182 = vmatpush1.bf16.msra.mxu0 %v2436
    %3183 = vmatprep.subr.bf16.mxu0 0
    %3184 = vmatpush1.bf16.msra.mxu0 %v2443
    %3185 = vmatprep.subr.bf16.mxu0 0
    %3186 = vmatpush1.bf16.msra.mxu0 %v2450
    %3187 = vmatprep.subr.bf16.mxu0 0
    %3188 = vmatpush1.bf16.msra.mxu0 %v2457
    %3189 = vmatprep.subr.bf16.mxu0 0
    %3190 = vmatpush1.bf16.msra.mxu0 %v2464
    %3191 = vmatprep.subr.bf16.mxu0 0
    %3192 = vmatpush1.bf16.msra.mxu0 %v2471
    %3193 = vmatprep.subr.bf16.mxu0 0
    %3194 = vmatpush1.bf16.msra.mxu0 %v2478
    %3195 = vmatprep.mubr.bf16.mxu0 %v1916
    %3196 = vmatmul.mubr.bf16.gmra.mrb[0].mxu0 %v1915
    %v3197 = vpop.f32.mrb[0].mxu0
    %v3198 = vadd.f32 %v3158, %v3197
    %v3199 = vpop.f32.mrb[0].mxu0
    %v3200 = vpop.f32.mrb[0].mxu0
    %v3201 = vpop.f32.mrb[0].mxu0
    %3202 = vdwg.mxu0
    %3203 = vmatprep.subr.bf16.mxu0 0
    %3204 = vmatpush1.bf16.msra.mxu0 %v2485
    %3205 = vmatprep.subr.bf16.mxu0 0
    %3206 = vmatpush1.bf16.msra.mxu0 %v2492
    %3207 = vmatprep.subr.bf16.mxu0 0
    %3208 = vmatpush1.bf16.msra.mxu0 %v2499
    %3209 = vmatprep.subr.bf16.mxu0 0
    %3210 = vmatpush1.bf16.msra.mxu0 %v2506
    %3211 = vmatprep.subr.bf16.mxu0 0
    %3212 = vmatpush1.bf16.msra.mxu0 %v2513
    %3213 = vmatprep.subr.bf16.mxu0 0
    %3214 = vmatpush1.bf16.msra.mxu0 %v2520
    %3215 = vmatprep.subr.bf16.mxu0 0
    %3216 = vmatpush1.bf16.msra.mxu0 %v2527
    %3217 = vmatprep.subr.bf16.mxu0 0
    %3218 = vmatpush1.bf16.msra.mxu0 %v2534
    %3219 = vmatprep.subr.bf16.mxu0 0
    %3220 = vmatpush1.bf16.msra.mxu0 %v2541
    %3221 = vmatprep.subr.bf16.mxu0 0
    %3222 = vmatpush1.bf16.msra.mxu0 %v2548
    %3223 = vmatprep.subr.bf16.mxu0 0
    %3224 = vmatpush1.bf16.msra.mxu0 %v2555
    %3225 = vmatprep.subr.bf16.mxu0 0
    %3226 = vmatpush1.bf16.msra.mxu0 %v2562
    %3227 = vmatprep.subr.bf16.mxu0 0
    %3228 = vmatpush1.bf16.msra.mxu0 %v2569
    %3229 = vmatprep.subr.bf16.mxu0 0
    %3230 = vmatpush1.bf16.msra.mxu0 %v2576
    %3231 = vmatprep.subr.bf16.mxu0 0
    %3232 = vmatpush1.bf16.msra.mxu0 %v2583
    %3233 = vmatprep.subr.bf16.mxu0 0
    %3234 = vmatpush1.bf16.msra.mxu0 %v2590
    %3235 = vmatprep.mubr.bf16.mxu0 %v1918
    %3236 = vmatmul.mubr.bf16.gmra.mrb[0].mxu0 %v1917
    %v3237 = vpop.f32.mrb[0].mxu0
    %v3238 = vadd.f32 %v3198, %v3237
    %v3239 = vpop.f32.mrb[0].mxu0
    %v3240 = vpop.f32.mrb[0].mxu0
    %v3241 = vpop.f32.mrb[0].mxu0
    %3242 = vdwg.mxu0
    %v3243 = vld [vmem:[%s13] sm:$0x7f]
    %v3245 = vlaneseq
    %v3246 = vshrl.u32 %v3245, 7
    %v3247 = vsub.s32 0, %v3246
    %v3248 = vrot.slane %v3243, %v3247
    %v3249 = vlaneseq
    %v3250 = vshrl.u32 %v3249, 7
    %v3251 = vsub.s32 1, %v3250
    %v3252 = vrot.slane %v3243, %v3251
    %v3253 = vlaneseq
    %v3254 = vshrl.u32 %v3253, 7
    %v3255 = vsub.s32 2, %v3254
    %v3256 = vrot.slane %v3243, %v3255
    %v3257 = vlaneseq
    %v3258 = vshrl.u32 %v3257, 7
    %v3259 = vsub.s32 3, %v3258
    %v3260 = vrot.slane %v3243, %v3259
    %v3261 = vlaneseq
    %v3262 = vshrl.u32 %v3261, 7
    %v3263 = vsub.s32 4, %v3262
    %v3264 = vrot.slane %v3243, %v3263
    %v3265 = vlaneseq
    %v3266 = vshrl.u32 %v3265, 7
    %v3267 = vsub.s32 5, %v3266
    %v3268 = vrot.slane %v3243, %v3267
    %v3269 = vlaneseq
    %v3270 = vshrl.u32 %v3269, 7
    %v3271 = vsub.s32 6, %v3270
    %v3272 = vrot.slane %v3243, %v3271
    %v3280 = vmul.f32 %v2749, %v3248
    %v3281 = vmul.f32 %v2751, %v3252
    %v3282 = vmul.f32 %v2913, %v3256
    %v3283 = vmul.f32 %v2915, %v3260
    %v3284 = vmul.f32 %v3077, %v3264
    %v3285 = vmul.f32 %v3079, %v3268
    %v3286 = vmul.f32 %v3238, %v3272
    %v3287 = vld [vmem:[%s14] sm:$0x7f]
    %v3289 = vlaneseq
    %v3290 = vshrl.u32 %v3289, 7
    %v3291 = vsub.s32 0, %v3290
    %v3292 = vrot.slane %v3287, %v3291
    %v3293 = vlaneseq
    %v3294 = vshrl.u32 %v3293, 7
    %v3295 = vsub.s32 1, %v3294
    %v3296 = vrot.slane %v3287, %v3295
    %v3297 = vlaneseq
    %v3298 = vshrl.u32 %v3297, 7
    %v3299 = vsub.s32 2, %v3298
    %v3300 = vrot.slane %v3287, %v3299
    %v3301 = vlaneseq
    %v3302 = vshrl.u32 %v3301, 7
    %v3303 = vsub.s32 3, %v3302
    %v3304 = vrot.slane %v3287, %v3303
    %v3305 = vlaneseq
    %v3306 = vshrl.u32 %v3305, 7
    %v3307 = vsub.s32 4, %v3306
    %v3308 = vrot.slane %v3287, %v3307
    %v3309 = vlaneseq
    %v3310 = vshrl.u32 %v3309, 7
    %v3311 = vsub.s32 5, %v3310
    %v3312 = vrot.slane %v3287, %v3311
    %v3313 = vlaneseq
    %v3314 = vshrl.u32 %v3313, 7
    %v3315 = vsub.s32 6, %v3314
    %v3316 = vrot.slane %v3287, %v3315
    %v3324 = vadd.f32 %v3280, %v3292
    %v3325 = vadd.f32 %v3281, %v3296
    %v3326 = vadd.f32 %v3282, %v3300
    %v3327 = vadd.f32 %v3283, %v3304
    %v3328 = vadd.f32 %v3284, %v3308
    %v3329 = vadd.f32 %v3285, %v3312
    %v3330 = vadd.f32 %v3286, %v3316
    %v3331 = vtanh.pop %v3324
    %v3332 = vtanh.pop %v3325
    %v3333 = vtanh.pop %v3326
    %v3334 = vtanh.pop %v3327
    %v3335 = vtanh.pop %v3328
    %v3336 = vtanh.pop %v3329
    %v3337 = vtanh.pop %v3330
    %3338 = vst [vmem:[#allocation3] sm:$0xff] %v3331
    %3339 = vst [vmem:[#allocation3 + $0x8] sm:$0xff] %v3332
    %3340 = vst [vmem:[#allocation3 + $0x10] sm:$0xff] %v3333
    %3341 = vst [vmem:[#allocation3 + $0x18] sm:$0xff] %v3334
    %3342 = vst [vmem:[#allocation3 + $0x20] sm:$0xff] %v3335
    %3343 = vst [vmem:[#allocation3 + $0x28] sm:$0xff] %v3336
    %3344 = vst.msk [vmem:[#allocation3 + $0x30] sm:$0xff] %vm71, %v3337
    // Predicated region
    $region62: #{tpu_custom_call.1} parent=1 // pred_check
      _
    $region63: #{tpu_custom_call.1} parent=1 // pred_check_branch
      %3346 = sbr.rel (0) target = $region65
    $region64: #{tpu_custom_call.1} parent=1 // pred_region
      %s3348 = ssub.s32 896, 896
      %3349 = vsyncadd [#allocation4], %s3348
      %s3351 = sshll.u32 [#allocation3], 4
      %s3352 = int_to_ptr.vmem [resolvable:$true] %s3351
      %3354 = dma.vmem_to_hbm [thread:$0]  %s3352, 896, %s15, [#allocation4]
    $region65: #{tpu_custom_call.1} parent=1 // pred_fallthru
      _
    // Predicated region
    $region66: #{tpu_custom_call.1} parent=1 // pred_check
      _
    $region67: #{tpu_custom_call.1} parent=1 // pred_check_branch
      %3356 = sbr.rel (0) target = $region69
    $region68: #{tpu_custom_call.1} parent=1 // pred_region
      %3357 = dma.done [#allocation4], 896
    $region69: #{tpu_custom_call.1} parent=1 // pred_fallthru
      _
    %3358 = vsyncpa [#allocation4], 1

</llo_original>
